<compile_context>
chip_gen: v5e
topology: v5e:2x2
jax: 0.10.0
libtpu: 0.0.40
codegen_flags: <defaults>
</compile_context>

<pallas_src>
import functools

import jax
import jax.numpy as jnp
from jax import lax
from jax.experimental import pallas as pl
from jax.experimental.pallas import tpu as pltpu


_LANE = 128


# ----------------------------------------------------------------------------
# VMEM budgeting / tiling helpers
# ----------------------------------------------------------------------------
def _round_up(x, m):
    return (x + m - 1) // m * m


def _vmem_budgets():
    """Generation-aware (vmem_limit_bytes, per-step working-set budget)."""
    phys = 64 * 1024 * 1024                      # conservative default (v7x)
    try:
        phys = int(getattr(pltpu.get_tpu_info(), "vmem_capacity_bytes", phys))
    except Exception:
        pass
    limit = min(phys * 3 // 4, 96 * 1024 * 1024)  # ~96 MiB v5e/v6e, ~48 MiB v7x
    return limit, limit * 3 // 4


def _tile_working_set(th, W, cin, c1p, c2p, c2, pool_bytes):
    """Per-grid-step VMEM estimate for the fused kernel (incl. double buffers)."""
    in_slab = (th + 4) * (W + 2) * cin * 2                # bf16 haloed input
    weights = (9 * cin * c1p + 9 * c1p * c2p) * 2 + (2 * c1p + 2 * c2) * 4
    y1_acc = (th + 2) * W * c1p * 4                       # conv1 f32 accumulator
    y1_pad = (th + 2) * (W + 2) * c1p * 2                 # conv1 out, bf16, padded cols
    lhs1 = (th + 2) * W * 3 * cin * 2                     # one conv1 im2col group
    lhs2 = th * W * 3 * c1p * 2                           # one conv2 im2col group
    y2_acc = th * W * c2p * 4                             # conv2 f32 accumulator
    outs = (th // 2) * (W // 2) * c2 * (pool_bytes + 4)   # pooled + int32 indices
    live = 2 * in_slab + 2 * outs + weights + y1_acc + y1_pad + lhs1 + lhs2 + y2_acc
    return int(live * 1.5)                                # safety factor (temporaries)


def _pick_tile_h(N, H, W, cin, c1p, c2p, c2, pool_bytes, budget, min_steps=4):
    """Largest even divisor of H whose working set fits the budget, keeping at
    least `min_steps` grid steps so v7x's two TensorCores both stay busy."""
    cands = [th for th in range(2, H + 1, 2) if H % th == 0]
    fits = [th for th in cands
            if _tile_working_set(th, W, cin, c1p, c2p, c2, pool_bytes) <= budget]
    if not fits:
        fits = [cands[0]]                                 # smallest tile; compiler decides
    for steps in (min_steps, 2, 1):
        ok = [th for th in fits if N * (H // th) >= steps]
        if ok:
            return max(ok)
    return max(fits)


def _haloed_h_tiles(x_nhwc, tile_h, dtype=jnp.bfloat16):
    """(N, H, W, C) -> (N, H//tile_h, tile_h+4, W+2, C) bf16 slabs carrying the
    2-row / 1-col zero halo the fused conv1->conv2 stencil needs.  XLA fuses
    the pad + gather into a single pass over the (small-Cin) raw input."""
    N, H, W, C = x_nhwc.shape
    assert H % tile_h == 0
    x_pad = jnp.pad(x_nhwc.astype(dtype), ((0, 0), (2, 2), (1, 1), (0, 0)))
    n_t = H // tile_h
    rows = jnp.arange(n_t)[:, None] * tile_h + jnp.arange(tile_h + 4)[None, :]
    return x_pad[:, rows]


# ----------------------------------------------------------------------------
# Fused kernel
# ----------------------------------------------------------------------------
def _conv3x3_rows(x, w, rows_out, cols_out):
    """3x3 'valid' conv as 3 accumulating MXU matmuls (one per kernel row).

    x: (rows_out+2, cols_out+2, cin) bf16, halo included
    w: (3, 3*cin, cout)              bf16  (kh, [kw, cin], cout)
    returns (rows_out, cols_out, cout) f32
    """
    cin = x.shape[-1]
    cout = w.shape[-1]
    acc = jnp.zeros((rows_out * cols_out, cout), jnp.float32)
    for kh in range(3):
        taps = [x[kh:kh + rows_out, kw:kw + cols_out, :] for kw in range(3)]
        lhs = jnp.concatenate(taps, axis=-1).reshape(rows_out * cols_out, 3 * cin)
        acc = acc + jnp.dot(lhs, w[kh], preferred_element_type=jnp.float32)
    return acc.reshape(rows_out, cols_out, cout)


def _fused_down2_kernel(x_ref, w1_ref, s1_ref, b1_ref, w2_ref, s2_ref, b2_ref,
                        o_ref, idx_ref):
    th = o_ref.shape[0] * 2            # conv2 output rows in this tile
    w = o_ref.shape[1] * 2             # conv2 output cols (== W)
    c2 = o_ref.shape[2]
    c1p = w1_ref.shape[-1]

    t = pl.program_id(1)
    n_t = pl.num_programs(1)

    # ---- conv1 + folded-BN + ReLU over TH+2 rows (conv2 halo is recomputed) --
    x = x_ref[...]                                         # (th+4, w+2, cin) bf16
    y1 = _conv3x3_rows(x, w1_ref[...], th + 2, w)          # (th+2, w, c1p) f32
    y1 = jnp.maximum(y1 * s1_ref[...][None, :, :] + b1_ref[...][None, :, :], 0.0)

    # Halo rows outside the image are conv2's zero padding, not conv1 outputs
    # (conv1 of zero input would be relu(bias) != 0): mask them out.
    row = lax.broadcasted_iota(jnp.int32, (th + 2, 1, 1), 0)
    keep = jnp.logical_and(jnp.logical_or(row > 0, t > 0),
                           jnp.logical_or(row < th + 1, t < n_t - 1))
    y1 = jnp.where(keep, y1, 0.0).astype(jnp.bfloat16)

    # conv2's horizontal zero padding.
    zcol = jnp.zeros((th + 2, 1, c1p), jnp.bfloat16)
    y1p = jnp.concatenate([zcol, y1, zcol], axis=1)        # (th+2, w+2, c1p)

    # ---- conv2 + folded-BN + ReLU ----
    y2 = _conv3x3_rows(y1p, w2_ref[...], th, w)            # (th, w, c2p) f32
    y2 = y2[:, :, :c2]                                     # drop MXU pad lanes
    y2 = jnp.maximum(y2 * s2_ref[...][None, :, :] + b2_ref[...][None, :, :], 0.0)

    # ---- 2x2 / stride-2 maxpool with PyTorch-style flat argmax indices ----
    hp, wp = th // 2, w // 2
    y5 = y2.reshape(hp, 2, wp, 2, c2)                      # plain non-strided slices
    row0 = t * th                                          # global row of this tile
    ph = lax.broadcasted_iota(jnp.int32, (hp, wp, c2), 0)
    pw = lax.broadcasted_iota(jnp.int32, (hp, wp, c2), 1)
    base = (row0 + 2 * ph) * w + 2 * pw                    # window's (0,0) tap index

    best_v = y5[:, 0, :, 0, :]
    best_i = base
    for i, j, off in ((0, 1, 1), (1, 0, w), (1, 1, w + 1)):
        v = y5[:, i, :, j, :]
        upd = v > best_v                                   # strict '>' -> first max wins
        best_v = jnp.where(upd, v, best_v)
        best_i = jnp.where(upd, base + off, best_i)

    o_ref[...] = best_v.astype(o_ref.dtype)
    idx_ref[...] = best_i


# ----------------------------------------------------------------------------
# Wrapper
# ----------------------------------------------------------------------------
def segnet_down2_nhwc(x_nhwc, w1_hwio, scale1, bias1, w2_hwio, scale2, bias2,
                      *, tile_h=None, pool_dtype=jnp.float32):
    """Fused conv3x3+BN+ReLU -> conv3x3+BN+ReLU -> 2x2 maxpool-with-argmax."""
    N, H, W, Cin = x_nhwc.shape
    C1 = w1_hwio.shape[-1]
    C2 = w2_hwio.shape[-1]
    assert w2_hwio.shape[-2] == C1
    assert H % 2 == 0 and W % 2 == 0

    C1p = _round_up(C1, _LANE)          # lane-aligned conv1-out / conv2-in width
    C2p = _round_up(C2, _LANE)          # lane-aligned conv2 MXU output width

    vmem_limit, vmem_budget = _vmem_budgets()
    pool_bytes = jnp.dtype(pool_dtype).itemsize
    if tile_h is None:
        tile_h = _pick_tile_h(N, H, W, Cin, C1p, C2p, C2, pool_bytes, vmem_budget)
    assert H % tile_h == 0 and tile_h % 2 == 0
    n_t = H // tile_h
    Hp, Wp = H // 2, W // 2

    # Haloed bf16 input slabs (one per grid step), auto-pipelined by BlockSpec.
    x_win = _haloed_h_tiles(x_nhwc, tile_h)                # (N, nT, th+4, W+2, Cin)

    # Weights (3,3,Cin,Cout) -> (3, 3*Cin, Cout), channel dims MXU-padded with
    # zeros; pad scale=1 / bias=0 so padded channels are exactly zero post-ReLU.
    w1 = jnp.pad(w1_hwio, ((0, 0), (0, 0), (0, 0), (0, C1p - C1)))
    w1 = w1.reshape(3, 3 * Cin, C1p).astype(jnp.bfloat16)
    w2 = jnp.pad(w2_hwio, ((0, 0), (0, 0), (0, C1p - C1), (0, C2p - C2)))
    w2 = w2.reshape(3, 3 * C1p, C2p).astype(jnp.bfloat16)
    s1 = jnp.pad(scale1.astype(jnp.float32), (0, C1p - C1),
                 constant_values=1.0).reshape(1, C1p)
    b1 = jnp.pad(bias1.astype(jnp.float32), (0, C1p - C1)).reshape(1, C1p)
    s2 = scale2.astype(jnp.float32).reshape(1, C2)
    b2 = bias2.astype(jnp.float32).reshape(1, C2)

    cost = pl.CostEstimate(
        flops=2 * N * H * W * 9 * (Cin * C1p + C1p * C2p),
        transcendentals=0,
        bytes_accessed=int(x_win.size * 2 + w1.size * 2 + w2.size * 2
                           + N * Hp * Wp * C2 * (pool_bytes + 4)))

    pooled, indices = pl.pallas_call(
        _fused_down2_kernel,
        out_shape=(jax.ShapeDtypeStruct((N, Hp, Wp, C2), pool_dtype),
                   jax.ShapeDtypeStruct((N, Hp, Wp, C2), jnp.int32)),
        grid=(N, n_t),
        in_specs=[
            pl.BlockSpec((None, None, tile_h + 4, W + 2, Cin),
                         lambda n, t: (n, t, 0, 0, 0)),
            pl.BlockSpec((3, 3 * Cin, C1p), lambda n, t: (0, 0, 0)),
            pl.BlockSpec((1, C1p), lambda n, t: (0, 0)),
            pl.BlockSpec((1, C1p), lambda n, t: (0, 0)),
            pl.BlockSpec((3, 3 * C1p, C2p), lambda n, t: (0, 0, 0)),
            pl.BlockSpec((1, C2), lambda n, t: (0, 0)),
            pl.BlockSpec((1, C2), lambda n, t: (0, 0)),
        ],
        out_specs=(
            pl.BlockSpec((None, tile_h // 2, Wp, C2), lambda n, t: (n, t, 0, 0)),
            pl.BlockSpec((None, tile_h // 2, Wp, C2), lambda n, t: (n, t, 0, 0)),
        ),
        compiler_params=pltpu.CompilerParams(
            dimension_semantics=("parallel", "parallel"),
            vmem_limit_bytes=vmem_limit),
        cost_estimate=cost,
    )(x_win, w1, s1, b1, w2, s2, b2)
    return pooled, indices


def segnet_down2(x_nchw, params, *, tile_h=None, pool_dtype=jnp.float32):
    """segnetDown2 forward: returns (pooled, indices, unpooled_shape) in
    PyTorch NCHW conventions."""
    x = jnp.transpose(x_nchw, (0, 2, 3, 1))                 # NCHW -> NHWC
    pooled, indices = segnet_down2_nhwc(
        x, params['w1'], params['scale1'], params['bias1'],
        params['w2'], params['scale2'], params['bias2'],
        tile_h=tile_h, pool_dtype=pool_dtype)
    N, H, W, _ = x.shape
    C2 = params['w2'].shape[-1]
    unpooled_shape = (N, C2, H, W)                          # conv2 output, NCHW
    pooled = jnp.transpose(pooled, (0, 3, 1, 2))            # NHWC -> NCHW
    indices = jnp.transpose(indices, (0, 3, 1, 2))
    return pooled, indices, unpooled_shape


# ----------------------------------------------------------------------------
# Deterministic parameter construction (conv weight/bias + folded eval-mode BN)
# ----------------------------------------------------------------------------
def make_cbr_params(key, cin, cout, eps=1e-5):
    k_w, k_b = jax.random.split(key)
    w_oihw = jax.random.normal(k_w, (cout, cin, 3, 3), jnp.float32) * 0.1
    b = jax.random.normal(k_b, (cout,), jnp.float32) * 0.1
    gamma = jnp.ones((cout,), jnp.float32)
    beta = jnp.zeros((cout,), jnp.float32)
    running_mean = jnp.zeros((cout,), jnp.float32)
    running_var = jnp.ones((cout,), jnp.float32)
    scale = gamma / jnp.sqrt(running_var + eps)
    bias = (b - running_mean) * scale + beta
    w_hwio = jnp.transpose(w_oihw, (2, 3, 1, 0))            # (3, 3, Cin, Cout)
    return w_hwio, scale, bias


def _ref_cbr(x_nhwc, w_hwio, scale, bias):
    """Pure-JAX reference with the same bf16-in / f32-accumulate numerics."""
    y = lax.conv_general_dilated(
        x_nhwc.astype(jnp.bfloat16), w_hwio.astype(jnp.bfloat16),
        window_strides=(1, 1), padding='SAME',
        dimension_numbers=('NHWC', 'HWIO', 'NHWC'),
        preferred_element_type=jnp.float32)
    y = y * scale.reshape(1, 1, 1, -1) + bias.reshape(1, 1, 1, -1)
    return jnp.maximum(y, 0.0)


if __name__ == "__main__":
    key = jax.random.PRNGKey(0)
    kx, k1, k2 = jax.random.split(key, 3)

    N, Cin, H, W = 2, 4, 16, 16
    Cout = 8

    x = jax.random.normal(kx, (N, Cin, H, W), jnp.float32)
    w1, s1, b1 = make_cbr_params(k1, Cin, Cout)
    w2, s2, b2 = make_cbr_params(k2, Cout, Cout)
    params = dict(w1=w1, scale1=s1, bias1=b1, w2=w2, scale2=s2, bias2=b2)

    # Pure-JAX reference (matching bf16-between-convs / f32-accumulate math).
    x_nhwc = jnp.transpose(x, (0, 2, 3, 1))
    y1_ref = _ref_cbr(x_nhwc, w1, s1, b1).astype(jnp.bfloat16)
    y2_ref = _ref_cbr(y1_ref, w2, s2, b2)                   # (N, H, W, Cout) f32
    pool_ref = jnp.max(y2_ref.reshape(N, H // 2, 2, W // 2, 2, Cout), axis=(2, 4))
    pool_ref = jnp.transpose(pool_ref, (0, 3, 1, 2))        # NCHW
    y2_flat = jnp.transpose(y2_ref, (0, 3, 1, 2)).reshape(N, Cout, H * W)

    # tile_h=8 -> grid (2 images x 2 H-tiles) = 4 steps: exercises the halo
    # recompute, boundary-row masking, and per-tile argmax row offsets.
    fwd = jax.jit(functools.partial(segnet_down2, tile_h=8))
    pooled, indices, unpooled_shape = fwd(x, params)
    jax.block_until_ready((pooled, indices))
    unpooled_shape = tuple(int(s) for s in unpooled_shape)

    # --- shape / dtype contract (matches the PyTorch module, int32 indices) ---
    assert pooled.shape == (N, Cout, H // 2, W // 2)
    assert indices.shape == (N, Cout, H // 2, W // 2)
    assert unpooled_shape == (N, Cout, H, W)
    assert indices.dtype == jnp.int32

    # --- numerics vs. the pure-JAX reference ---
    assert jnp.allclose(pooled, pool_ref, rtol=1e-2, atol=1e-2)

    # --- indices are valid flat h*W+w positions and point at the pooled maxima ---
    assert bool(jnp.all((indices >= 0) & (indices < H * W)))
    gathered = jnp.take_along_axis(
        y2_flat, indices.reshape(N, Cout, -1), axis=2).reshape(indices.shape)
    assert jnp.allclose(gathered, pooled, rtol=1e-2, atol=1e-2)

    # Second configuration: a single full-height tile per image (both boundary
    # row masks active within one tile).
    fwd_full = jax.jit(functools.partial(segnet_down2, tile_h=16))
    pooled2, indices2, _ = fwd_full(x, params)
    jax.block_until_ready((pooled2, indices2))
    assert jnp.allclose(pooled2, pool_ref, rtol=1e-2, atol=1e-2)
    gathered2 = jnp.take_along_axis(
        y2_flat, indices2.reshape(N, Cout, -1), axis=2).reshape(indices2.shape)
    assert jnp.allclose(gathered2, pooled2, rtol=1e-2, atol=1e-2)

    print("KERNEL_OK")
</pallas_src>

<mosaic_0001>
module attributes {stable_mosaic.version = 11 : i64} {
  func.func @_fused_down2_kernel(%arg0: i32, %arg1: i32, %arg2: memref<1x1x12x18x4xbf16, #tpu.memory_space<vmem>>, %arg3: memref<3x12x128xbf16, #tpu.memory_space<vmem>>, %arg4: memref<1x128xf32, #tpu.memory_space<vmem>>, %arg5: memref<1x128xf32, #tpu.memory_space<vmem>>, %arg6: memref<3x384x128xbf16, #tpu.memory_space<vmem>>, %arg7: memref<1x8xf32, #tpu.memory_space<vmem>>, %arg8: memref<1x8xf32, #tpu.memory_space<vmem>>, %arg9: memref<1x4x8x8xf32, #tpu.memory_space<vmem>>, %arg10: memref<1x4x8x8xi32, #tpu.memory_space<vmem>>) attributes {dimension_semantics = [#tpu.dimension_semantics<parallel>, #tpu.dimension_semantics<parallel>], iteration_bounds = array<i64: 2, 2>, scalar_prefetch = 0 : i64, scratch_operands = 0 : i64, tpu.core_type = #tpu.core_type<tc>, window_params = [{transform_indices = @transform_0, window_bounds = array<i64: 1, 1, 12, 18, 4>}, {pipeline_mode = #tpu.pipeline_mode<synchronous>, transform_indices = @transform_1, window_bounds = array<i64: 3, 12, 128>}, {pipeline_mode = #tpu.pipeline_mode<synchronous>, transform_indices = @transform_2, window_bounds = array<i64: 1, 128>}, {pipeline_mode = #tpu.pipeline_mode<synchronous>, transform_indices = @transform_3, window_bounds = array<i64: 1, 128>}, {pipeline_mode = #tpu.pipeline_mode<synchronous>, transform_indices = @transform_4, window_bounds = array<i64: 3, 384, 128>}, {pipeline_mode = #tpu.pipeline_mode<synchronous>, transform_indices = @transform_5, window_bounds = array<i64: 1, 8>}, {pipeline_mode = #tpu.pipeline_mode<synchronous>, transform_indices = @transform_6, window_bounds = array<i64: 1, 8>}, {transform_indices = @transform_7, window_bounds = array<i64: 1, 4, 8, 8>}, {transform_indices = @transform_8, window_bounds = array<i64: 1, 4, 8, 8>}]} {
    %c0 = arith.constant 0 : index
    %c0_0 = arith.constant 0 : index
    %c0_1 = arith.constant 0 : index
    %c0_2 = arith.constant 0 : index
    %c0_3 = arith.constant 0 : index
    %0 = vector.load %arg2[%c0, %c0_0, %c0_1, %c0_2, %c0_3] : memref<1x1x12x18x4xbf16, #tpu.memory_space<vmem>>, vector<1x1x12x18x4xbf16>
    %1 = vector.shape_cast %0 : vector<1x1x12x18x4xbf16> to vector<12x18x4xbf16>
    %c0_4 = arith.constant 0 : index
    %c0_5 = arith.constant 0 : index
    %c0_6 = arith.constant 0 : index
    %2 = vector.load %arg3[%c0_4, %c0_5, %c0_6] : memref<3x12x128xbf16, #tpu.memory_space<vmem>>, vector<3x12x128xbf16>
    %cst = arith.constant 0.000000e+00 : f32
    %3 = vector.broadcast %cst : f32 to vector<160x128xf32>
    %4 = vector.extract_strided_slice %1 {offsets = [0, 0, 0], sizes = [10, 16, 4], strides = [1, 1, 1]} : vector<12x18x4xbf16> to vector<10x16x4xbf16>
    %5 = vector.extract_strided_slice %1 {offsets = [0, 1, 0], sizes = [10, 16, 4], strides = [1, 1, 1]} : vector<12x18x4xbf16> to vector<10x16x4xbf16>
    %6 = vector.extract_strided_slice %1 {offsets = [0, 2, 0], sizes = [10, 16, 4], strides = [1, 1, 1]} : vector<12x18x4xbf16> to vector<10x16x4xbf16>
    %7 = tpu.concatenate %4, %5, %6 in 2 : vector<10x16x4xbf16>, vector<10x16x4xbf16>, vector<10x16x4xbf16> -> vector<10x16x12xbf16>
    %8 = vector.shape_cast %7 : vector<10x16x12xbf16> to vector<160x12xbf16>
    %9 = vector.extract_strided_slice %2 {offsets = [0, 0, 0], sizes = [1, 12, 128], strides = [1, 1, 1]} : vector<3x12x128xbf16> to vector<1x12x128xbf16>
    %10 = vector.shape_cast %9 : vector<1x12x128xbf16> to vector<12x128xbf16>
    %cst_7 = arith.constant dense<0.000000e+00> : vector<160x128xf32>
    %11 = tpu.matmul %8, %10, %cst_7 {dimension_numbers = #tpu.dot_dimension_numbers<[1], [0], [0], [1], [0, 0, 1, 1], [], []>} : vector<160x12xbf16>, vector<12x128xbf16>, vector<160x128xf32> -> vector<160x128xf32>
    %12 = arith.addf %3, %11 : vector<160x128xf32>
    %13 = vector.extract_strided_slice %1 {offsets = [1, 0, 0], sizes = [10, 16, 4], strides = [1, 1, 1]} : vector<12x18x4xbf16> to vector<10x16x4xbf16>
    %14 = vector.extract_strided_slice %1 {offsets = [1, 1, 0], sizes = [10, 16, 4], strides = [1, 1, 1]} : vector<12x18x4xbf16> to vector<10x16x4xbf16>
    %15 = vector.extract_strided_slice %1 {offsets = [1, 2, 0], sizes = [10, 16, 4], strides = [1, 1, 1]} : vector<12x18x4xbf16> to vector<10x16x4xbf16>
    %16 = tpu.concatenate %13, %14, %15 in 2 : vector<10x16x4xbf16>, vector<10x16x4xbf16>, vector<10x16x4xbf16> -> vector<10x16x12xbf16>
    %17 = vector.shape_cast %16 : vector<10x16x12xbf16> to vector<160x12xbf16>
    %18 = vector.extract_strided_slice %2 {offsets = [1, 0, 0], sizes = [1, 12, 128], strides = [1, 1, 1]} : vector<3x12x128xbf16> to vector<1x12x128xbf16>
    %19 = vector.shape_cast %18 : vector<1x12x128xbf16> to vector<12x128xbf16>
    %cst_8 = arith.constant dense<0.000000e+00> : vector<160x128xf32>
    %20 = tpu.matmul %17, %19, %cst_8 {dimension_numbers = #tpu.dot_dimension_numbers<[1], [0], [0], [1], [0, 0, 1, 1], [], []>} : vector<160x12xbf16>, vector<12x128xbf16>, vector<160x128xf32> -> vector<160x128xf32>
    %21 = arith.addf %12, %20 : vector<160x128xf32>
    %22 = vector.extract_strided_slice %1 {offsets = [2, 0, 0], sizes = [10, 16, 4], strides = [1, 1, 1]} : vector<12x18x4xbf16> to vector<10x16x4xbf16>
    %23 = vector.extract_strided_slice %1 {offsets = [2, 1, 0], sizes = [10, 16, 4], strides = [1, 1, 1]} : vector<12x18x4xbf16> to vector<10x16x4xbf16>
    %24 = vector.extract_strided_slice %1 {offsets = [2, 2, 0], sizes = [10, 16, 4], strides = [1, 1, 1]} : vector<12x18x4xbf16> to vector<10x16x4xbf16>
    %25 = tpu.concatenate %22, %23, %24 in 2 : vector<10x16x4xbf16>, vector<10x16x4xbf16>, vector<10x16x4xbf16> -> vector<10x16x12xbf16>
    %26 = vector.shape_cast %25 : vector<10x16x12xbf16> to vector<160x12xbf16>
    %27 = vector.extract_strided_slice %2 {offsets = [2, 0, 0], sizes = [1, 12, 128], strides = [1, 1, 1]} : vector<3x12x128xbf16> to vector<1x12x128xbf16>
    %28 = vector.shape_cast %27 : vector<1x12x128xbf16> to vector<12x128xbf16>
    %cst_9 = arith.constant dense<0.000000e+00> : vector<160x128xf32>
    %29 = tpu.matmul %26, %28, %cst_9 {dimension_numbers = #tpu.dot_dimension_numbers<[1], [0], [0], [1], [0, 0, 1, 1], [], []>} : vector<160x12xbf16>, vector<12x128xbf16>, vector<160x128xf32> -> vector<160x128xf32>
    %30 = arith.addf %21, %29 : vector<160x128xf32>
    %31 = vector.shape_cast %30 : vector<160x128xf32> to vector<10x16x128xf32>
    %c0_10 = arith.constant 0 : index
    %c0_11 = arith.constant 0 : index
    %32 = vector.load %arg4[%c0_10, %c0_11] : memref<1x128xf32, #tpu.memory_space<vmem>>, vector<1x128xf32>
    %33 = vector.shape_cast %32 : vector<1x128xf32> to vector<1x1x128xf32>
    %34 = vector.broadcast %33 : vector<1x1x128xf32> to vector<10x16x128xf32>
    %35 = arith.mulf %31, %34 : vector<10x16x128xf32>
    %c0_12 = arith.constant 0 : index
    %c0_13 = arith.constant 0 : index
    %36 = vector.load %arg5[%c0_12, %c0_13] : memref<1x128xf32, #tpu.memory_space<vmem>>, vector<1x128xf32>
    %37 = vector.shape_cast %36 : vector<1x128xf32> to vector<1x1x128xf32>
    %38 = vector.broadcast %37 : vector<1x1x128xf32> to vector<10x16x128xf32>
    %39 = arith.addf %35, %38 : vector<10x16x128xf32>
    %cst_14 = arith.constant 0.000000e+00 : f32
    %40 = vector.broadcast %cst_14 : f32 to vector<10x16x128xf32>
    %41 = arith.maximumf %39, %40 : vector<10x16x128xf32>
    %42 = tpu.iota {dimensions = array<i32: 0>} : vector<10x1x1xi32>
    %c0_i32 = arith.constant 0 : i32
    %43 = vector.broadcast %c0_i32 : i32 to vector<10x1x1xi32>
    %44 = arith.cmpi sgt, %42, %43 : vector<10x1x1xi32>
    %c0_i32_15 = arith.constant 0 : i32
    %45 = arith.cmpi sgt, %arg1, %c0_i32_15 : i32
    %46 = vector.broadcast %45 : i1 to vector<10x1x1xi1>
    %47 = arith.ori %44, %46 : vector<10x1x1xi1>
    %c9_i32 = arith.constant 9 : i32
    %48 = vector.broadcast %c9_i32 : i32 to vector<10x1x1xi32>
    %49 = arith.cmpi slt, %42, %48 : vector<10x1x1xi32>
    %c1_i32 = arith.constant 1 : i32
    %50 = arith.cmpi slt, %arg1, %c1_i32 : i32
    %51 = vector.broadcast %50 : i1 to vector<10x1x1xi1>
    %52 = arith.ori %49, %51 : vector<10x1x1xi1>
    %53 = arith.andi %47, %52 : vector<10x1x1xi1>
    %cst_16 = arith.constant 0.000000e+00 : f32
    %54 = vector.shape_cast %53 : vector<10x1x1xi1> to vector<10x1x1xi1>
    %55 = vector.broadcast %54 : vector<10x1x1xi1> to vector<10x16x128xi1>
    %56 = vector.broadcast %cst_16 : f32 to vector<10x16x128xf32>
    %57 = arith.select %55, %41, %56 : vector<10x16x128xi1>, vector<10x16x128xf32>
    %58 = arith.truncf %57 : vector<10x16x128xf32> to vector<10x16x128xbf16>
    %cst_17 = arith.constant 0.000000e+00 : bf16
    %59 = vector.broadcast %cst_17 : bf16 to vector<10x1x128xbf16>
    %60 = tpu.concatenate %59, %58, %59 in 1 : vector<10x1x128xbf16>, vector<10x16x128xbf16>, vector<10x1x128xbf16> -> vector<10x18x128xbf16>
    %c0_18 = arith.constant 0 : index
    %c0_19 = arith.constant 0 : index
    %c0_20 = arith.constant 0 : index
    %61 = vector.load %arg6[%c0_18, %c0_19, %c0_20] : memref<3x384x128xbf16, #tpu.memory_space<vmem>>, vector<3x384x128xbf16>
    %cst_21 = arith.constant 0.000000e+00 : f32
    %62 = vector.broadcast %cst_21 : f32 to vector<128x128xf32>
    %63 = vector.extract_strided_slice %60 {offsets = [0, 0, 0], sizes = [8, 16, 128], strides = [1, 1, 1]} : vector<10x18x128xbf16> to vector<8x16x128xbf16>
    %64 = vector.extract_strided_slice %60 {offsets = [0, 1, 0], sizes = [8, 16, 128], strides = [1, 1, 1]} : vector<10x18x128xbf16> to vector<8x16x128xbf16>
    %65 = vector.extract_strided_slice %60 {offsets = [0, 2, 0], sizes = [8, 16, 128], strides = [1, 1, 1]} : vector<10x18x128xbf16> to vector<8x16x128xbf16>
    %66 = tpu.concatenate %63, %64, %65 in 2 : vector<8x16x128xbf16>, vector<8x16x128xbf16>, vector<8x16x128xbf16> -> vector<8x16x384xbf16>
    %67 = vector.shape_cast %66 : vector<8x16x384xbf16> to vector<128x384xbf16>
    %68 = vector.extract_strided_slice %61 {offsets = [0, 0, 0], sizes = [1, 384, 128], strides = [1, 1, 1]} : vector<3x384x128xbf16> to vector<1x384x128xbf16>
    %69 = vector.shape_cast %68 : vector<1x384x128xbf16> to vector<384x128xbf16>
    %cst_22 = arith.constant dense<0.000000e+00> : vector<128x128xf32>
    %70 = tpu.matmul %67, %69, %cst_22 {dimension_numbers = #tpu.dot_dimension_numbers<[1], [0], [0], [1], [0, 0, 1, 1], [], []>} : vector<128x384xbf16>, vector<384x128xbf16>, vector<128x128xf32> -> vector<128x128xf32>
    %71 = arith.addf %62, %70 : vector<128x128xf32>
    %72 = vector.extract_strided_slice %60 {offsets = [1, 0, 0], sizes = [8, 16, 128], strides = [1, 1, 1]} : vector<10x18x128xbf16> to vector<8x16x128xbf16>
    %73 = vector.extract_strided_slice %60 {offsets = [1, 1, 0], sizes = [8, 16, 128], strides = [1, 1, 1]} : vector<10x18x128xbf16> to vector<8x16x128xbf16>
    %74 = vector.extract_strided_slice %60 {offsets = [1, 2, 0], sizes = [8, 16, 128], strides = [1, 1, 1]} : vector<10x18x128xbf16> to vector<8x16x128xbf16>
    %75 = tpu.concatenate %72, %73, %74 in 2 : vector<8x16x128xbf16>, vector<8x16x128xbf16>, vector<8x16x128xbf16> -> vector<8x16x384xbf16>
    %76 = vector.shape_cast %75 : vector<8x16x384xbf16> to vector<128x384xbf16>
    %77 = vector.extract_strided_slice %61 {offsets = [1, 0, 0], sizes = [1, 384, 128], strides = [1, 1, 1]} : vector<3x384x128xbf16> to vector<1x384x128xbf16>
    %78 = vector.shape_cast %77 : vector<1x384x128xbf16> to vector<384x128xbf16>
    %cst_23 = arith.constant dense<0.000000e+00> : vector<128x128xf32>
    %79 = tpu.matmul %76, %78, %cst_23 {dimension_numbers = #tpu.dot_dimension_numbers<[1], [0], [0], [1], [0, 0, 1, 1], [], []>} : vector<128x384xbf16>, vector<384x128xbf16>, vector<128x128xf32> -> vector<128x128xf32>
    %80 = arith.addf %71, %79 : vector<128x128xf32>
    %81 = vector.extract_strided_slice %60 {offsets = [2, 0, 0], sizes = [8, 16, 128], strides = [1, 1, 1]} : vector<10x18x128xbf16> to vector<8x16x128xbf16>
    %82 = vector.extract_strided_slice %60 {offsets = [2, 1, 0], sizes = [8, 16, 128], strides = [1, 1, 1]} : vector<10x18x128xbf16> to vector<8x16x128xbf16>
    %83 = vector.extract_strided_slice %60 {offsets = [2, 2, 0], sizes = [8, 16, 128], strides = [1, 1, 1]} : vector<10x18x128xbf16> to vector<8x16x128xbf16>
    %84 = tpu.concatenate %81, %82, %83 in 2 : vector<8x16x128xbf16>, vector<8x16x128xbf16>, vector<8x16x128xbf16> -> vector<8x16x384xbf16>
    %85 = vector.shape_cast %84 : vector<8x16x384xbf16> to vector<128x384xbf16>
    %86 = vector.extract_strided_slice %61 {offsets = [2, 0, 0], sizes = [1, 384, 128], strides = [1, 1, 1]} : vector<3x384x128xbf16> to vector<1x384x128xbf16>
    %87 = vector.shape_cast %86 : vector<1x384x128xbf16> to vector<384x128xbf16>
    %cst_24 = arith.constant dense<0.000000e+00> : vector<128x128xf32>
    %88 = tpu.matmul %85, %87, %cst_24 {dimension_numbers = #tpu.dot_dimension_numbers<[1], [0], [0], [1], [0, 0, 1, 1], [], []>} : vector<128x384xbf16>, vector<384x128xbf16>, vector<128x128xf32> -> vector<128x128xf32>
    %89 = arith.addf %80, %88 : vector<128x128xf32>
    %90 = vector.shape_cast %89 : vector<128x128xf32> to vector<8x16x128xf32>
    %91 = vector.extract_strided_slice %90 {offsets = [0, 0, 0], sizes = [8, 16, 8], strides = [1, 1, 1]} : vector<8x16x128xf32> to vector<8x16x8xf32>
    %c0_25 = arith.constant 0 : index
    %c0_26 = arith.constant 0 : index
    %92 = vector.load %arg7[%c0_25, %c0_26] : memref<1x8xf32, #tpu.memory_space<vmem>>, vector<1x8xf32>
    %93 = vector.shape_cast %92 : vector<1x8xf32> to vector<1x1x8xf32>
    %94 = vector.broadcast %93 : vector<1x1x8xf32> to vector<8x16x8xf32>
    %95 = arith.mulf %91, %94 : vector<8x16x8xf32>
    %c0_27 = arith.constant 0 : index
    %c0_28 = arith.constant 0 : index
    %96 = vector.load %arg8[%c0_27, %c0_28] : memref<1x8xf32, #tpu.memory_space<vmem>>, vector<1x8xf32>
    %97 = vector.shape_cast %96 : vector<1x8xf32> to vector<1x1x8xf32>
    %98 = vector.broadcast %97 : vector<1x1x8xf32> to vector<8x16x8xf32>
    %99 = arith.addf %95, %98 : vector<8x16x8xf32>
    %cst_29 = arith.constant 0.000000e+00 : f32
    %100 = vector.broadcast %cst_29 : f32 to vector<8x16x8xf32>
    %101 = arith.maximumf %99, %100 : vector<8x16x8xf32>
    %102 = vector.shape_cast %101 : vector<8x16x8xf32> to vector<4x2x8x2x8xf32>
    %c8_i32 = arith.constant 8 : i32
    %103 = arith.muli %arg1, %c8_i32 : i32
    %104 = tpu.iota {dimensions = array<i32: 0>} : vector<4x8x8xi32>
    %105 = tpu.iota {dimensions = array<i32: 1>} : vector<4x8x8xi32>
    %c2_i32 = arith.constant 2 : i32
    %106 = vector.broadcast %c2_i32 : i32 to vector<4x8x8xi32>
    %107 = arith.muli %106, %104 : vector<4x8x8xi32>
    %108 = vector.broadcast %103 : i32 to vector<4x8x8xi32>
    %109 = arith.addi %108, %107 : vector<4x8x8xi32>
    %c16_i32 = arith.constant 16 : i32
    %110 = vector.broadcast %c16_i32 : i32 to vector<4x8x8xi32>
    %111 = arith.muli %109, %110 : vector<4x8x8xi32>
    %c2_i32_30 = arith.constant 2 : i32
    %112 = vector.broadcast %c2_i32_30 : i32 to vector<4x8x8xi32>
    %113 = arith.muli %112, %105 : vector<4x8x8xi32>
    %114 = arith.addi %111, %113 : vector<4x8x8xi32>
    %115 = vector.extract_strided_slice %102 {offsets = [0, 0, 0, 0, 0], sizes = [4, 1, 8, 1, 8], strides = [1, 1, 1, 1, 1]} : vector<4x2x8x2x8xf32> to vector<4x1x8x1x8xf32>
    %116 = vector.shape_cast %115 : vector<4x1x8x1x8xf32> to vector<4x8x8xf32>
    %117 = vector.extract_strided_slice %102 {offsets = [0, 0, 0, 1, 0], sizes = [4, 1, 8, 1, 8], strides = [1, 1, 1, 1, 1]} : vector<4x2x8x2x8xf32> to vector<4x1x8x1x8xf32>
    %118 = vector.shape_cast %117 : vector<4x1x8x1x8xf32> to vector<4x8x8xf32>
    %119 = arith.cmpf ogt, %118, %116 : vector<4x8x8xf32>
    %120 = arith.select %119, %118, %116 : vector<4x8x8xi1>, vector<4x8x8xf32>
    %c1_i32_31 = arith.constant 1 : i32
    %121 = vector.broadcast %c1_i32_31 : i32 to vector<4x8x8xi32>
    %122 = arith.addi %114, %121 : vector<4x8x8xi32>
    %123 = arith.select %119, %122, %114 : vector<4x8x8xi1>, vector<4x8x8xi32>
    %124 = vector.extract_strided_slice %102 {offsets = [0, 1, 0, 0, 0], sizes = [4, 1, 8, 1, 8], strides = [1, 1, 1, 1, 1]} : vector<4x2x8x2x8xf32> to vector<4x1x8x1x8xf32>
    %125 = vector.shape_cast %124 : vector<4x1x8x1x8xf32> to vector<4x8x8xf32>
    %126 = arith.cmpf ogt, %125, %120 : vector<4x8x8xf32>
    %127 = arith.select %126, %125, %120 : vector<4x8x8xi1>, vector<4x8x8xf32>
    %c16_i32_32 = arith.constant 16 : i32
    %128 = vector.broadcast %c16_i32_32 : i32 to vector<4x8x8xi32>
    %129 = arith.addi %114, %128 : vector<4x8x8xi32>
    %130 = arith.select %126, %129, %123 : vector<4x8x8xi1>, vector<4x8x8xi32>
    %131 = vector.extract_strided_slice %102 {offsets = [0, 1, 0, 1, 0], sizes = [4, 1, 8, 1, 8], strides = [1, 1, 1, 1, 1]} : vector<4x2x8x2x8xf32> to vector<4x1x8x1x8xf32>
    %132 = vector.shape_cast %131 : vector<4x1x8x1x8xf32> to vector<4x8x8xf32>
    %133 = arith.cmpf ogt, %132, %127 : vector<4x8x8xf32>
    %134 = arith.select %133, %132, %127 : vector<4x8x8xi1>, vector<4x8x8xf32>
    %c17_i32 = arith.constant 17 : i32
    %135 = vector.broadcast %c17_i32 : i32 to vector<4x8x8xi32>
    %136 = arith.addi %114, %135 : vector<4x8x8xi32>
    %137 = arith.select %133, %136, %130 : vector<4x8x8xi1>, vector<4x8x8xi32>
    %c0_33 = arith.constant 0 : index
    %c0_34 = arith.constant 0 : index
    %c0_35 = arith.constant 0 : index
    %c0_36 = arith.constant 0 : index
    %138 = vector.load %arg9[%c0_33, %c0_34, %c0_35, %c0_36] : memref<1x4x8x8xf32, #tpu.memory_space<vmem>>, vector<1x4x8x8xf32>
    %139 = vector.shape_cast %138 : vector<1x4x8x8xf32> to vector<4x8x8xf32>
    %140 = vector.shape_cast %134 : vector<4x8x8xf32> to vector<1x4x8x8xf32>
    tpu.vector_store %arg9[%c0_33, %c0_34, %c0_35, %c0_36], %140 {strides = array<i32>} : memref<1x4x8x8xf32, #tpu.memory_space<vmem>>, vector<1x4x8x8xf32>,
    %c0_37 = arith.constant 0 : index
    %c0_38 = arith.constant 0 : index
    %c0_39 = arith.constant 0 : index
    %c0_40 = arith.constant 0 : index
    %141 = vector.load %arg10[%c0_37, %c0_38, %c0_39, %c0_40] : memref<1x4x8x8xi32, #tpu.memory_space<vmem>>, vector<1x4x8x8xi32>
    %142 = vector.shape_cast %141 : vector<1x4x8x8xi32> to vector<4x8x8xi32>
    %143 = vector.shape_cast %137 : vector<4x8x8xi32> to vector<1x4x8x8xi32>
    tpu.vector_store %arg10[%c0_37, %c0_38, %c0_39, %c0_40], %143 {strides = array<i32>} : memref<1x4x8x8xi32, #tpu.memory_space<vmem>>, vector<1x4x8x8xi32>,
    return
  }
  func.func @transform_0(%arg0: i32, %arg1: i32) -> (i32, i32, i32, i32, i32) {
    %c0_i32 = arith.constant 0 : i32
    %c0_i32_0 = arith.constant 0 : i32
    %c0_i32_1 = arith.constant 0 : i32
    %c0_i32_2 = arith.constant 0 : i32
    return %arg0, %arg1, %c0_i32, %c0_i32_0, %c0_i32_1 : i32, i32, i32, i32, i32
  }
  func.func @transform_1(%arg0: i32, %arg1: i32) -> (i32, i32, i32) {
    %c0_i32 = arith.constant 0 : i32
    %c0_i32_0 = arith.constant 0 : i32
    %c0_i32_1 = arith.constant 0 : i32
    %c0_i32_2 = arith.constant 0 : i32
    return %c0_i32, %c0_i32_0, %c0_i32_1 : i32, i32, i32
  }
  func.func @transform_2(%arg0: i32, %arg1: i32) -> (i32, i32) {
    %c0_i32 = arith.constant 0 : i32
    %c0_i32_0 = arith.constant 0 : i32
    %c0_i32_1 = arith.constant 0 : i32
    return %c0_i32, %c0_i32_0 : i32, i32
  }
  func.func @transform_3(%arg0: i32, %arg1: i32) -> (i32, i32) {
    %c0_i32 = arith.constant 0 : i32
    %c0_i32_0 = arith.constant 0 : i32
    %c0_i32_1 = arith.constant 0 : i32
    return %c0_i32, %c0_i32_0 : i32, i32
  }
  func.func @transform_4(%arg0: i32, %arg1: i32) -> (i32, i32, i32) {
    %c0_i32 = arith.constant 0 : i32
    %c0_i32_0 = arith.constant 0 : i32
    %c0_i32_1 = arith.constant 0 : i32
    %c0_i32_2 = arith.constant 0 : i32
    return %c0_i32, %c0_i32_0, %c0_i32_1 : i32, i32, i32
  }
  func.func @transform_5(%arg0: i32, %arg1: i32) -> (i32, i32) {
    %c0_i32 = arith.constant 0 : i32
    %c0_i32_0 = arith.constant 0 : i32
    %c0_i32_1 = arith.constant 0 : i32
    return %c0_i32, %c0_i32_0 : i32, i32
  }
  func.func @transform_6(%arg0: i32, %arg1: i32) -> (i32, i32) {
    %c0_i32 = arith.constant 0 : i32
    %c0_i32_0 = arith.constant 0 : i32
    %c0_i32_1 = arith.constant 0 : i32
    return %c0_i32, %c0_i32_0 : i32, i32
  }
  func.func @transform_7(%arg0: i32, %arg1: i32) -> (i32, i32, i32, i32) {
    %c0_i32 = arith.constant 0 : i32
    %c0_i32_0 = arith.constant 0 : i32
    %c0_i32_1 = arith.constant 0 : i32
    return %arg0, %arg1, %c0_i32, %c0_i32_0 : i32, i32, i32, i32
  }
  func.func @transform_8(%arg0: i32, %arg1: i32) -> (i32, i32, i32, i32) {
    %c0_i32 = arith.constant 0 : i32
    %c0_i32_0 = arith.constant 0 : i32
    %c0_i32_1 = arith.constant 0 : i32
    return %arg0, %arg1, %c0_i32, %c0_i32_0 : i32, i32, i32, i32
  }
}

</mosaic_0001>

<llo_original>
// kernel: segnet_down2.1
$region0: #{segnet_down2.1}
  #allocation0 [shape = 'u32[]', space=smem, size = 0x4, offset = 0x4, fixed_abs, tag = 'smem constant byte address 0x4 - core index']
  #allocation1 [shape = 'u32[72,128]{1,0:T(1,128)}', space=vmem, size = 0x9000, scoped, tag = 'internal scratch']
  %s0 = inlined_call_operand.vmem [shape: bf16[2,2,12,18,4], index: 0, kind: input, shape index: {}]
  %s1 = inlined_call_operand.vmem [shape: bf16[3,12,128], index: 1, kind: input, shape index: {}]
  %s2 = inlined_call_operand.vmem [shape: f32[1,128], index: 2, kind: input, shape index: {}]
  %s3 = inlined_call_operand.vmem [shape: f32[1,128], index: 3, kind: input, shape index: {}]
  %s4 = inlined_call_operand.vmem [shape: bf16[3,384,128], index: 4, kind: input, shape index: {}]
  %s5 = inlined_call_operand.vmem [shape: f32[1,8], index: 5, kind: input, shape index: {}]
  %s6 = inlined_call_operand.vmem [shape: f32[1,8], index: 6, kind: input, shape index: {}]
  %s7 = inlined_call_operand.vmem [shape: f32[2,8,8,8], index: 7, kind: output, shape index: {0}]
  %s8 = inlined_call_operand.vmem [shape: s32[2,8,8,8], index: 8, kind: output, shape index: {1}]
  %9 = xla_tuple %s7, %s8
  %s10 = sld [smem:[#allocation0]]
  $region69: #{segnet_down2.1} parent=0
    _
  %s12 = ssub.s32 1, %s10
  %s13 = scalar_select 0, %s12, %s10
  loop: start=0, step=1, limit=6
  $region2: #{segnet_down2.1} parent=0 // loop_pre_header
    _
  $region3: #{segnet_down2.1} parent=0 // loop_header
    %s15 = sphi 0, %s19
    %p16 = scmp.ge.s32.totalorder %s15, 6
    %s22 = sphi 0, %s34
    %s23 = sphi 0, %s30
    %s24 = sphi 0, %s22
    %s25 = sphi 0, %s23
    %s26 = sphi 0, %s24
    %s27 = sphi 0, %s25
    %s39 = sphi 0, %s41
    %s42 = sphi 0, %s39
    %s43 = sphi 0, %s42
    %s59 = sphi 0, %s43
    %s63 = sphi 0, %s63
    %s65 = sphi 0, %s63
    %s66 = sphi 0, %s65
    %s80 = sphi 0, %s66
    %s84 = sphi 0, %s84
    %s86 = sphi 0, %s84
    %s87 = sphi 0, %s86
    %s101 = sphi 0, %s87
    %s105 = sphi 0, %s105
    %s107 = sphi 0, %s105
    %s108 = sphi 0, %s107
    %s122 = sphi 0, %s108
    %s126 = sphi 0, %s126
    %s128 = sphi 0, %s126
    %s129 = sphi 0, %s128
    %s143 = sphi 0, %s129
    %s147 = sphi 0, %s147
    %s149 = sphi 0, %s147
    %s150 = sphi 0, %s149
    %s164 = sphi 0, %s150
    %s168 = sphi 0, %s168
    %s170 = sphi 0, %s168
    %s171 = sphi 0, %s170
    %s185 = sphi 0, %s171
    %s193 = sphi 0, %s195
    %s196 = sphi 0, %s193
    %s197 = sphi 0, %s196
    %s213 = sphi 0, %s197
    %s221 = sphi 0, %s223
    %s224 = sphi 0, %s221
    %s225 = sphi 0, %s224
    %s241 = sphi 0, %s225
  $region4: #{segnet_down2.1} parent=0 // loop_header_branch
    %18 = sbr.rel (%p16) target = $region8
  $region5: #{segnet_down2.1} parent=0 // loop_body
    %s20 = ssub.s32 %s15, 1
    %s21 = ssub.s32 %s15, 2
    %s28 = sadd.s32 1, %s23
    %p29 = scmp.ge.s32.totalorder %s28, 2
    %s30 = scalar_select %p29, 0, %s28
    %s31 = sadd.s32 1, %s22
    %s32 = scalar_select %p29, %s31, %s22
    %p33 = scmp.ge.s32.totalorder %s32, 2
    %s34 = scalar_select %p33, 0, %s32
    %s35 = ssub.s32 %s22, %s34
    %s36 = ssub.s32 %s23, %s30
    %s37 = sor.u32 %s35, %s36
    %p38 = scmp.eq.s32.totalorder %s37, 0
    %s40 = sadd.s32 %s39, 1
    %s41 = scalar_select %p38, %s39, %s40
    %p44 = pneg %p38
    %p45 = scmp.eq.s32.totalorder %s15, 3
    %p46 = por %p44, %p45
    %p47 = scmp.ne.s32.totalorder %s39, %s42
    %p48 = scmp.eq.s32.totalorder %s15, 0
    %p49 = por %p47, %p48
    %p50 = scmp.ne.s32.totalorder %s39, %s42
    %p51 = scmp.eq.s32.totalorder %s20, 3
    %p52 = por %p50, %p51
    %p53 = scmp.ne.s32.totalorder %s42, %s43
    %p54 = scmp.eq.s32.totalorder %s20, 0
    %p55 = por %p53, %p54
    %p56 = scmp.ne.s32.totalorder %s42, %s43
    %p57 = scmp.eq.s32.totalorder %s21, 3
    %p58 = por %p56, %p57
    %p60 = scmp.ne.s32.totalorder %s43, %s59
    %p61 = scmp.eq.s32.totalorder %s21, 0
    %p62 = por %p60, %p61
    %s64 = sadd.s32 %s63, 1
    %p67 = scmp.eq.s32.totalorder %s15, 3
    %p68 = scmp.ne.s32.totalorder %s63, %s65
    %p69 = scmp.eq.s32.totalorder %s15, 0
    %p70 = por %p68, %p69
    %p71 = scmp.ne.s32.totalorder %s63, %s65
    %p72 = scmp.eq.s32.totalorder %s20, 3
    %p73 = por %p71, %p72
    %p74 = scmp.ne.s32.totalorder %s65, %s66
    %p75 = scmp.eq.s32.totalorder %s20, 0
    %p76 = por %p74, %p75
    %p77 = scmp.ne.s32.totalorder %s65, %s66
    %p78 = scmp.eq.s32.totalorder %s21, 3
    %p79 = por %p77, %p78
    %p81 = scmp.ne.s32.totalorder %s66, %s80
    %p82 = scmp.eq.s32.totalorder %s21, 0
    %p83 = por %p81, %p82
    %s85 = sadd.s32 %s84, 1
    %p88 = scmp.eq.s32.totalorder %s15, 3
    %p89 = scmp.ne.s32.totalorder %s84, %s86
    %p90 = scmp.eq.s32.totalorder %s15, 0
    %p91 = por %p89, %p90
    %p92 = scmp.ne.s32.totalorder %s84, %s86
    %p93 = scmp.eq.s32.totalorder %s20, 3
    %p94 = por %p92, %p93
    %p95 = scmp.ne.s32.totalorder %s86, %s87
    %p96 = scmp.eq.s32.totalorder %s20, 0
    %p97 = por %p95, %p96
    %p98 = scmp.ne.s32.totalorder %s86, %s87
    %p99 = scmp.eq.s32.totalorder %s21, 3
    %p100 = por %p98, %p99
    %p102 = scmp.ne.s32.totalorder %s87, %s101
    %p103 = scmp.eq.s32.totalorder %s21, 0
    %p104 = por %p102, %p103
    %s106 = sadd.s32 %s105, 1
    %p109 = scmp.eq.s32.totalorder %s15, 3
    %p110 = scmp.ne.s32.totalorder %s105, %s107
    %p111 = scmp.eq.s32.totalorder %s15, 0
    %p112 = por %p110, %p111
    %p113 = scmp.ne.s32.totalorder %s105, %s107
    %p114 = scmp.eq.s32.totalorder %s20, 3
    %p115 = por %p113, %p114
    %p116 = scmp.ne.s32.totalorder %s107, %s108
    %p117 = scmp.eq.s32.totalorder %s20, 0
    %p118 = por %p116, %p117
    %p119 = scmp.ne.s32.totalorder %s107, %s108
    %p120 = scmp.eq.s32.totalorder %s21, 3
    %p121 = por %p119, %p120
    %p123 = scmp.ne.s32.totalorder %s108, %s122
    %p124 = scmp.eq.s32.totalorder %s21, 0
    %p125 = por %p123, %p124
    %s127 = sadd.s32 %s126, 1
    %p130 = scmp.eq.s32.totalorder %s15, 3
    %p131 = scmp.ne.s32.totalorder %s126, %s128
    %p132 = scmp.eq.s32.totalorder %s15, 0
    %p133 = por %p131, %p132
    %p134 = scmp.ne.s32.totalorder %s126, %s128
    %p135 = scmp.eq.s32.totalorder %s20, 3
    %p136 = por %p134, %p135
    %p137 = scmp.ne.s32.totalorder %s128, %s129
    %p138 = scmp.eq.s32.totalorder %s20, 0
    %p139 = por %p137, %p138
    %p140 = scmp.ne.s32.totalorder %s128, %s129
    %p141 = scmp.eq.s32.totalorder %s21, 3
    %p142 = por %p140, %p141
    %p144 = scmp.ne.s32.totalorder %s129, %s143
    %p145 = scmp.eq.s32.totalorder %s21, 0
    %p146 = por %p144, %p145
    %s148 = sadd.s32 %s147, 1
    %p151 = scmp.eq.s32.totalorder %s15, 3
    %p152 = scmp.ne.s32.totalorder %s147, %s149
    %p153 = scmp.eq.s32.totalorder %s15, 0
    %p154 = por %p152, %p153
    %p155 = scmp.ne.s32.totalorder %s147, %s149
    %p156 = scmp.eq.s32.totalorder %s20, 3
    %p157 = por %p155, %p156
    %p158 = scmp.ne.s32.totalorder %s149, %s150
    %p159 = scmp.eq.s32.totalorder %s20, 0
    %p160 = por %p158, %p159
    %p161 = scmp.ne.s32.totalorder %s149, %s150
    %p162 = scmp.eq.s32.totalorder %s21, 3
    %p163 = por %p161, %p162
    %p165 = scmp.ne.s32.totalorder %s150, %s164
    %p166 = scmp.eq.s32.totalorder %s21, 0
    %p167 = por %p165, %p166
    %s169 = sadd.s32 %s168, 1
    %p172 = scmp.eq.s32.totalorder %s15, 3
    %p173 = scmp.ne.s32.totalorder %s168, %s170
    %p174 = scmp.eq.s32.totalorder %s15, 0
    %p175 = por %p173, %p174
    %p176 = scmp.ne.s32.totalorder %s168, %s170
    %p177 = scmp.eq.s32.totalorder %s20, 3
    %p178 = por %p176, %p177
    %p179 = scmp.ne.s32.totalorder %s170, %s171
    %p180 = scmp.eq.s32.totalorder %s20, 0
    %p181 = por %p179, %p180
    %p182 = scmp.ne.s32.totalorder %s170, %s171
    %p183 = scmp.eq.s32.totalorder %s21, 3
    %p184 = por %p182, %p183
    %p186 = scmp.ne.s32.totalorder %s171, %s185
    %p187 = scmp.eq.s32.totalorder %s21, 0
    %p188 = por %p186, %p187
    %s189 = ssub.s32 %s22, %s34
    %s190 = ssub.s32 %s23, %s30
    %s191 = sor.u32 %s189, %s190
    %p192 = scmp.eq.s32.totalorder %s191, 0
    %s194 = sadd.s32 %s193, 1
    %s195 = scalar_select %p192, %s193, %s194
    %p198 = pneg %p192
    %p199 = scmp.eq.s32.totalorder %s15, 3
    %p200 = por %p198, %p199
    %p201 = scmp.ne.s32.totalorder %s193, %s196
    %p202 = scmp.eq.s32.totalorder %s15, 0
    %p203 = por %p201, %p202
    %p204 = scmp.ne.s32.totalorder %s193, %s196
    %p205 = scmp.eq.s32.totalorder %s20, 3
    %p206 = por %p204, %p205
    %p207 = scmp.ne.s32.totalorder %s196, %s197
    %p208 = scmp.eq.s32.totalorder %s20, 0
    %p209 = por %p207, %p208
    %p210 = scmp.ne.s32.totalorder %s196, %s197
    %p211 = scmp.eq.s32.totalorder %s21, 3
    %p212 = por %p210, %p211
    %p214 = scmp.ne.s32.totalorder %s197, %s213
    %p215 = scmp.eq.s32.totalorder %s21, 0
    %p216 = por %p214, %p215
    %s217 = ssub.s32 %s22, %s34
    %s218 = ssub.s32 %s23, %s30
    %s219 = sor.u32 %s217, %s218
    %p220 = scmp.eq.s32.totalorder %s219, 0
    %s222 = sadd.s32 %s221, 1
    %s223 = scalar_select %p220, %s221, %s222
    %p226 = pneg %p220
    %p227 = scmp.eq.s32.totalorder %s15, 3
    %p228 = por %p226, %p227
    %p229 = scmp.ne.s32.totalorder %s221, %s224
    %p230 = scmp.eq.s32.totalorder %s15, 0
    %p231 = por %p229, %p230
    %p232 = scmp.ne.s32.totalorder %s221, %s224
    %p233 = scmp.eq.s32.totalorder %s20, 3
    %p234 = por %p232, %p233
    %p235 = scmp.ne.s32.totalorder %s224, %s225
    %p236 = scmp.eq.s32.totalorder %s20, 0
    %p237 = por %p235, %p236
    %p238 = scmp.ne.s32.totalorder %s224, %s225
    %p239 = scmp.eq.s32.totalorder %s21, 3
    %p240 = por %p238, %p239
    %p242 = scmp.ne.s32.totalorder %s225, %s241
    %p243 = scmp.eq.s32.totalorder %s21, 0
    %p244 = por %p242, %p243
    %p245 = scmp.le.s32.totalorder 1, %s15
    %p246 = scmp.lt.s32.totalorder %s15, 5
    %p247 = pnand %p245, %p246
    %p248 = pneg %p247
    // Predicated region
    $region9: #{segnet_down2.1} parent=5 // pred_check
      _
    $region10: #{segnet_down2.1} parent=5 // pred_check_branch
      %250 = sbr.rel (%p247) target = $region12
    $region11: #{segnet_down2.1} parent=5 // pred_region
      %s251 = ssub.s32 %s15, 1
      // Predicated region
      $region13: #{segnet_down2.1} parent=11 // pred_check
        %p252 = pneg %p76
      $region14: #{segnet_down2.1} parent=11 // pred_check_branch
        %254 = sbr.rel (%p252) target = $region16
      $region15: #{segnet_down2.1} parent=11 // pred_region
        _
      $region16: #{segnet_down2.1} parent=11 // pred_fallthru
        _
      // Predicated region
      $region17: #{segnet_down2.1} parent=11 // pred_check
        %p255 = pneg %p97
      $region18: #{segnet_down2.1} parent=11 // pred_check_branch
        %257 = sbr.rel (%p255) target = $region20
      $region19: #{segnet_down2.1} parent=11 // pred_region
        _
      $region20: #{segnet_down2.1} parent=11 // pred_fallthru
        _
      // Predicated region
      $region21: #{segnet_down2.1} parent=11 // pred_check
        %p258 = pneg %p118
      $region22: #{segnet_down2.1} parent=11 // pred_check_branch
        %260 = sbr.rel (%p258) target = $region24
      $region23: #{segnet_down2.1} parent=11 // pred_region
        _
      $region24: #{segnet_down2.1} parent=11 // pred_fallthru
        _
      // Predicated region
      $region25: #{segnet_down2.1} parent=11 // pred_check
        %p261 = pneg %p139
      $region26: #{segnet_down2.1} parent=11 // pred_check_branch
        %263 = sbr.rel (%p261) target = $region28
      $region27: #{segnet_down2.1} parent=11 // pred_region
        _
      $region28: #{segnet_down2.1} parent=11 // pred_fallthru
        _
      // Predicated region
      $region29: #{segnet_down2.1} parent=11 // pred_check
        %p264 = pneg %p160
      $region30: #{segnet_down2.1} parent=11 // pred_check_branch
        %266 = sbr.rel (%p264) target = $region32
      $region31: #{segnet_down2.1} parent=11 // pred_region
        _
      $region32: #{segnet_down2.1} parent=11 // pred_fallthru
        _
      // Predicated region
      $region33: #{segnet_down2.1} parent=11 // pred_check
        %p267 = pneg %p181
      $region34: #{segnet_down2.1} parent=11 // pred_check_branch
        %269 = sbr.rel (%p267) target = $region36
      $region35: #{segnet_down2.1} parent=11 // pred_region
        _
      $region36: #{segnet_down2.1} parent=11 // pred_fallthru
        _
    $region12: #{segnet_down2.1} parent=5 // pred_fallthru
      _
    %p270 = scmp.lt.s32.totalorder %s15, 4
    // Predicated region
    $region37: #{segnet_down2.1} parent=5 // pred_check
      %p271 = pneg %p270
    $region38: #{segnet_down2.1} parent=5 // pred_check_branch
      %273 = sbr.rel (%p271) target = $region40
    $region39: #{segnet_down2.1} parent=5 // pred_region
      // Predicated region
      $region41: #{segnet_down2.1} parent=39 // pred_check
        %p274 = pneg %p49
      $region42: #{segnet_down2.1} parent=39 // pred_check_branch
        %276 = sbr.rel (%p274) target = $region44
      $region43: #{segnet_down2.1} parent=39 // pred_region
        %p277 = scmp.lt.s32.totalorder %s22, 1
        %s278 = scalar_select %p277, %s22, 1
        %p279 = scmp.lt.s32.totalorder %s23, 1
        %s280 = scalar_select %p279, %s23, 1
        %s281 = smul.addr %s280, 36
        %s282 = smul.addr %s278, 72
        %s283 = sadd.s32 %s281, %s282
        %s284 = smul.addr %s283, 4
        %s285 = scalar_lea.vmem %s0, %s284
      $region44: #{segnet_down2.1} parent=39 // pred_fallthru
        _
    $region40: #{segnet_down2.1} parent=5 // pred_fallthru
      _
    %p286 = scmp.le.s32.totalorder 1, %s15
    %p287 = scmp.lt.s32.totalorder %s15, 5
    %p288 = pnand %p286, %p287
    %p289 = pneg %p288
    // Predicated region
    $region45: #{segnet_down2.1} parent=5 // pred_check
      _
    $region46: #{segnet_down2.1} parent=5 // pred_check_branch
      %291 = sbr.rel (%p288) target = $region48
    $region47: #{segnet_down2.1} parent=5 // pred_region
      %s292 = ssub.s32 %s15, 1
      %p293 = scmp.lt.s32.totalorder %s24, 1
      %s294 = scalar_select %p293, %s24, 1
      %p295 = scmp.lt.s32.totalorder %s25, 1
      %s296 = scalar_select %p295, %s25, 1
      %s297 = smul.addr %s296, 36
      %s298 = smul.addr %s294, 72
      %s299 = sadd.s32 %s297, %s298
      %s300 = smul.addr %s299, 4
      %s301 = scalar_lea.vmem %s0, %s300
      %p302 = pneg %p55
      %p303 = pneg %p52
      %p304 = pneg %p76
      %p305 = pneg %p73
      %p306 = pneg %p97
      %p307 = pneg %p94
      %p308 = pneg %p118
      %p309 = pneg %p115
      %p310 = pneg %p139
      %p311 = pneg %p136
      %p312 = pneg %p160
      %p313 = pneg %p157
      %p314 = pneg %p181
      %p315 = pneg %p178
      %p316 = pneg %p209
      %p317 = pneg %p206
      %s318 = smul.u32 4, %s25
      %p319 = scmp.lt.s32.totalorder %s24, 1
      %s320 = scalar_select %p319, %s24, 1
      %p321 = scmp.lt.s32.totalorder %s318, 7
      %s322 = scalar_select %p321, %s318, 7
      %s323 = smul.addr %s320, 8
      %s324 = sadd.s32 %s322, %s323
      %s325 = smul.addr %s324, 8
      %s326 = scalar_lea.vmem %s7, %s325
      %p327 = pneg %p237
      %p328 = pneg %p234
      %s329 = smul.u32 4, %s25
      %p330 = scmp.lt.s32.totalorder %s24, 1
      %s331 = scalar_select %p330, %s24, 1
      %p332 = scmp.lt.s32.totalorder %s329, 7
      %s333 = scalar_select %p332, %s329, 7
      %s334 = smul.addr %s331, 8
      %s335 = sadd.s32 %s333, %s334
      %s336 = smul.addr %s335, 8
      %s337 = scalar_lea.vmem %s8, %s336
      %p338 = scmp.lt.s32.totalorder %s24, 1
      %s339 = scalar_select %p338, %s24, 1
      %p340 = scmp.lt.s32.totalorder %s25, 1
      %s341 = scalar_select %p340, %s25, 1
      %s342 = smul.addr %s341, 36
      %s343 = smul.addr %s339, 72
      %s344 = sadd.s32 %s342, %s343
      %s345 = smul.addr %s344, 4
      %s346 = scalar_lea.vmem %s0, %s345
      %s347 = smul.u32 4, %s25
      %p348 = scmp.lt.s32.totalorder %s24, 1
      %s349 = scalar_select %p348, %s24, 1
      %p350 = scmp.lt.s32.totalorder %s347, 7
      %s351 = scalar_select %p350, %s347, 7
      %s352 = smul.addr %s349, 8
      %s353 = sadd.s32 %s351, %s352
      %s354 = smul.addr %s353, 8
      %s355 = scalar_lea.vmem %s7, %s354
      %s356 = smul.u32 4, %s25
      %s357 = smul.u32 4, %s25
      %p358 = scmp.lt.s32.totalorder %s24, 1
      %s359 = scalar_select %p358, %s24, 1
      %p360 = scmp.lt.s32.totalorder %s357, 7
      %s361 = scalar_select %p360, %s357, 7
      %s362 = smul.addr %s359, 8
      %s363 = sadd.s32 %s361, %s362
      %s364 = smul.addr %s363, 8
      %s365 = scalar_lea.vmem %s8, %s364
      %s366 = smul.u32 4, %s25
      %v368 = vld [vmem:[%s346] sm:$0xf]
      %v369 = vld [vmem:[%s346 + $0x4] sm:$0xf]
      %v370 = vld [vmem:[%s346 + $0x8] sm:$0x1]
      %v371 = vld [vmem:[%s346 + $0xc] sm:$0xf]
      %v372 = vld [vmem:[%s346 + $0x10] sm:$0xf]
      %v373 = vld [vmem:[%s346 + $0x14] sm:$0x1]
      %v374 = vld [vmem:[%s346 + $0x18] sm:$0xf]
      %v375 = vld [vmem:[%s346 + $0x1c] sm:$0xf]
      %v376 = vld [vmem:[%s346 + $0x20] sm:$0x1]
      %v377 = vld [vmem:[%s346 + $0x24] sm:$0xf]
      %v378 = vld [vmem:[%s346 + $0x28] sm:$0xf]
      %v379 = vld [vmem:[%s346 + $0x2c] sm:$0x1]
      %v380 = vld [vmem:[%s346 + $0x30] sm:$0xf]
      %v381 = vld [vmem:[%s346 + $0x34] sm:$0xf]
      %v382 = vld [vmem:[%s346 + $0x38] sm:$0x1]
      %v383 = vld [vmem:[%s346 + $0x3c] sm:$0xf]
      %v384 = vld [vmem:[%s346 + $0x40] sm:$0xf]
      %v385 = vld [vmem:[%s346 + $0x44] sm:$0x1]
      %v386 = vld [vmem:[%s346 + $0x48] sm:$0xf]
      %v387 = vld [vmem:[%s346 + $0x4c] sm:$0xf]
      %v388 = vld [vmem:[%s346 + $0x50] sm:$0x1]
      %v389 = vld [vmem:[%s346 + $0x54] sm:$0xf]
      %v390 = vld [vmem:[%s346 + $0x58] sm:$0xf]
      %v391 = vld [vmem:[%s346 + $0x5c] sm:$0x1]
      %v392 = vld [vmem:[%s346 + $0x60] sm:$0xf]
      %v393 = vld [vmem:[%s346 + $0x64] sm:$0xf]
      %v394 = vld [vmem:[%s346 + $0x68] sm:$0x1]
      %v395 = vld [vmem:[%s346 + $0x6c] sm:$0xf]
      %v396 = vld [vmem:[%s346 + $0x70] sm:$0xf]
      %v397 = vld [vmem:[%s346 + $0x74] sm:$0x1]
      %v398 = vld [vmem:[%s346 + $0x78] sm:$0xf]
      %v399 = vld [vmem:[%s346 + $0x7c] sm:$0xf]
      %v400 = vld [vmem:[%s346 + $0x80] sm:$0x1]
      %v401 = vld [vmem:[%s346 + $0x84] sm:$0xf]
      %v402 = vld [vmem:[%s346 + $0x88] sm:$0xf]
      %v403 = vld [vmem:[%s346 + $0x8c] sm:$0x1]
      %v404 = vld [vmem:[%s1] sm:$0xf]
      %v405 = vld [vmem:[%s1 + $0x4] sm:$0x3]
      %v406 = vld [vmem:[%s1 + $0x8] sm:$0xf]
      %v407 = vld [vmem:[%s1 + $0xc] sm:$0x3]
      %v408 = vld [vmem:[%s1 + $0x10] sm:$0xf]
      %v409 = vld [vmem:[%s1 + $0x14] sm:$0x3]
      %v430 = vunpack.c.l.b16 %v368
      %v431 = vunpack.c.l.b16 %v369
      %v432 = vunpack.c.l.b16 %v371
      %v433 = vunpack.c.l.b16 %v372
      %v434 = vunpack.c.l.b16 %v374
      %v435 = vunpack.c.l.b16 %v375
      %v436 = vunpack.c.l.b16 %v377
      %v437 = vunpack.c.l.b16 %v378
      %v438 = vunpack.c.l.b16 %v380
      %v439 = vunpack.c.l.b16 %v381
      %v440 = vunpack.c.l.b16 %v383
      %v441 = vunpack.c.l.b16 %v384
      %v442 = vunpack.c.l.b16 %v386
      %v443 = vunpack.c.l.b16 %v387
      %v444 = vunpack.c.l.b16 %v389
      %v445 = vunpack.c.l.b16 %v390
      %v446 = vunpack.c.l.b16 %v392
      %v447 = vunpack.c.l.b16 %v393
      %v448 = vunpack.c.l.b16 %v395
      %v449 = vunpack.c.l.b16 %v396
      %v450 = vpack.c.b16 %v431, %v430
      %v451 = vpack.c.b16 %v433, %v432
      %v452 = vpack.c.b16 %v435, %v434
      %v453 = vpack.c.b16 %v437, %v436
      %v454 = vpack.c.b16 %v439, %v438
      %v455 = vpack.c.b16 %v441, %v440
      %v456 = vpack.c.b16 %v443, %v442
      %v457 = vpack.c.b16 %v445, %v444
      %v458 = vpack.c.b16 %v447, %v446
      %v459 = vpack.c.b16 %v449, %v448
      %v470 = vunpack.c.l.b16 %v370
      %v471 = vunpack.c.l.b16 %v373
      %v472 = vunpack.c.l.b16 %v376
      %v473 = vunpack.c.l.b16 %v379
      %v474 = vunpack.c.l.b16 %v382
      %v475 = vunpack.c.l.b16 %v385
      %v476 = vunpack.c.l.b16 %v388
      %v477 = vunpack.c.l.b16 %v391
      %v478 = vunpack.c.l.b16 %v394
      %v479 = vunpack.c.l.b16 %v397
      %v480 = vpack.c.b16 %v470, %v470
      %v481 = vpack.c.b16 %v471, %v471
      %v482 = vpack.c.b16 %v472, %v472
      %v483 = vpack.c.b16 %v473, %v473
      %v484 = vpack.c.b16 %v474, %v474
      %v485 = vpack.c.b16 %v475, %v475
      %v486 = vpack.c.b16 %v476, %v476
      %v487 = vpack.c.b16 %v477, %v477
      %v488 = vpack.c.b16 %v478, %v478
      %v489 = vpack.c.b16 %v479, %v479
      %vm490 = vsmask.f32 7424
      %v492 = vshrl.u32 %v450, 16
      %v494 = vshll.u32 %v450, 16
      %v496 = vrot.slane %v494, 1
      %v497 = vor.u32 %v492, %v496
      %v499 = vshll.u32 %v480, 16
      %v501 = vrot.slane %v499, 1
      %v502 = vsel %vm490, %v497, %v501
      %v504 = vshrl.u32 %v451, 16
      %v506 = vshll.u32 %v451, 16
      %v508 = vrot.slane %v506, 1
      %v509 = vor.u32 %v504, %v508
      %v511 = vshll.u32 %v481, 16
      %v513 = vrot.slane %v511, 1
      %v514 = vsel %vm490, %v509, %v513
      %v516 = vshrl.u32 %v452, 16
      %v518 = vshll.u32 %v452, 16
      %v520 = vrot.slane %v518, 1
      %v521 = vor.u32 %v516, %v520
      %v523 = vshll.u32 %v482, 16
      %v525 = vrot.slane %v523, 1
      %v526 = vsel %vm490, %v521, %v525
      %v528 = vshrl.u32 %v453, 16
      %v530 = vshll.u32 %v453, 16
      %v532 = vrot.slane %v530, 1
      %v533 = vor.u32 %v528, %v532
      %v535 = vshll.u32 %v483, 16
      %v537 = vrot.slane %v535, 1
      %v538 = vsel %vm490, %v533, %v537
      %v540 = vshrl.u32 %v454, 16
      %v542 = vshll.u32 %v454, 16
      %v544 = vrot.slane %v542, 1
      %v545 = vor.u32 %v540, %v544
      %v547 = vshll.u32 %v484, 16
      %v549 = vrot.slane %v547, 1
      %v550 = vsel %vm490, %v545, %v549
      %v552 = vshrl.u32 %v455, 16
      %v554 = vshll.u32 %v455, 16
      %v556 = vrot.slane %v554, 1
      %v557 = vor.u32 %v552, %v556
      %v559 = vshll.u32 %v485, 16
      %v561 = vrot.slane %v559, 1
      %v562 = vsel %vm490, %v557, %v561
      %v564 = vshrl.u32 %v456, 16
      %v566 = vshll.u32 %v456, 16
      %v568 = vrot.slane %v566, 1
      %v569 = vor.u32 %v564, %v568
      %v571 = vshll.u32 %v486, 16
      %v573 = vrot.slane %v571, 1
      %v574 = vsel %vm490, %v569, %v573
      %v576 = vshrl.u32 %v457, 16
      %v578 = vshll.u32 %v457, 16
      %v580 = vrot.slane %v578, 1
      %v581 = vor.u32 %v576, %v580
      %v583 = vshll.u32 %v487, 16
      %v585 = vrot.slane %v583, 1
      %v586 = vsel %vm490, %v581, %v585
      %v588 = vshrl.u32 %v458, 16
      %v590 = vshll.u32 %v458, 16
      %v592 = vrot.slane %v590, 1
      %v593 = vor.u32 %v588, %v592
      %v595 = vshll.u32 %v488, 16
      %v597 = vrot.slane %v595, 1
      %v598 = vsel %vm490, %v593, %v597
      %v600 = vshrl.u32 %v459, 16
      %v602 = vshll.u32 %v459, 16
      %v604 = vrot.slane %v602, 1
      %v605 = vor.u32 %v600, %v604
      %v607 = vshll.u32 %v489, 16
      %v609 = vrot.slane %v607, 1
      %v610 = vsel %vm490, %v605, %v609
      %611 = vrot.lane.b32.xlu0 %v502, 4
      %v612 = vpop.permute.xlu0 %611
      %613 = vrot.lane.b32.xlu0 %v514, 4
      %v614 = vpop.permute.xlu0 %613
      %615 = vrot.lane.b32.xlu0 %v526, 4
      %v616 = vpop.permute.xlu0 %615
      %617 = vrot.lane.b32.xlu0 %v538, 4
      %v618 = vpop.permute.xlu0 %617
      %619 = vrot.lane.b32.xlu0 %v550, 4
      %v620 = vpop.permute.xlu0 %619
      %621 = vrot.lane.b32.xlu0 %v562, 4
      %v622 = vpop.permute.xlu0 %621
      %623 = vrot.lane.b32.xlu0 %v574, 4
      %v624 = vpop.permute.xlu0 %623
      %625 = vrot.lane.b32.xlu0 %v586, 4
      %v626 = vpop.permute.xlu0 %625
      %627 = vrot.lane.b32.xlu0 %v598, 4
      %v628 = vpop.permute.xlu0 %627
      %629 = vrot.lane.b32.xlu0 %v610, 4
      %v630 = vpop.permute.xlu0 %629
      %vm631 = vcmask 1046528
      %v632 = vrot.slane %v450, 1
      %v633 = vrot.slane %v480, 1
      %v634 = vsel %vm631, %v632, %v633
      %v635 = vrot.slane %v451, 1
      %v636 = vrot.slane %v481, 1
      %v637 = vsel %vm631, %v635, %v636
      %v638 = vrot.slane %v452, 1
      %v639 = vrot.slane %v482, 1
      %v640 = vsel %vm631, %v638, %v639
      %v641 = vrot.slane %v453, 1
      %v642 = vrot.slane %v483, 1
      %v643 = vsel %vm631, %v641, %v642
      %v644 = vrot.slane %v454, 1
      %v645 = vrot.slane %v484, 1
      %v646 = vsel %vm631, %v644, %v645
      %v647 = vrot.slane %v455, 1
      %v648 = vrot.slane %v485, 1
      %v649 = vsel %vm631, %v647, %v648
      %v650 = vrot.slane %v456, 1
      %v651 = vrot.slane %v486, 1
      %v652 = vsel %vm631, %v650, %v651
      %v653 = vrot.slane %v457, 1
      %v654 = vrot.slane %v487, 1
      %v655 = vsel %vm631, %v653, %v654
      %v656 = vrot.slane %v458, 1
      %v657 = vrot.slane %v488, 1
      %v658 = vsel %vm631, %v656, %v657
      %v659 = vrot.slane %v459, 1
      %v660 = vrot.slane %v489, 1
      %v661 = vsel %vm631, %v659, %v660
      %662 = vrot.lane.b32.xlu0 %v634, 8
      %v663 = vpop.permute.xlu0 %662
      %664 = vrot.lane.b32.xlu0 %v637, 8
      %v665 = vpop.permute.xlu0 %664
      %666 = vrot.lane.b32.xlu0 %v640, 8
      %v667 = vpop.permute.xlu0 %666
      %668 = vrot.lane.b32.xlu0 %v643, 8
      %v669 = vpop.permute.xlu0 %668
      %670 = vrot.lane.b32.xlu0 %v646, 8
      %v671 = vpop.permute.xlu0 %670
      %672 = vrot.lane.b32.xlu0 %v649, 8
      %v673 = vpop.permute.xlu0 %672
      %674 = vrot.lane.b32.xlu0 %v652, 8
      %v675 = vpop.permute.xlu0 %674
      %676 = vrot.lane.b32.xlu0 %v655, 8
      %v677 = vpop.permute.xlu0 %676
      %678 = vrot.lane.b32.xlu0 %v658, 8
      %v679 = vpop.permute.xlu0 %678
      %680 = vrot.lane.b32.xlu0 %v661, 8
      %v681 = vpop.permute.xlu0 %680
      %vm682 = vcmask 31744
      %v684 = vsel %vm682, %v450, %v612
      %v686 = vsel %vm682, %v451, %v614
      %v688 = vsel %vm682, %v452, %v616
      %v690 = vsel %vm682, %v453, %v618
      %v692 = vsel %vm682, %v454, %v620
      %v694 = vsel %vm682, %v455, %v622
      %v696 = vsel %vm682, %v456, %v624
      %v698 = vsel %vm682, %v457, %v626
      %v700 = vsel %vm682, %v458, %v628
      %v702 = vsel %vm682, %v459, %v630
      %vm703 = vcmask 64512
      %v705 = vsel %vm703, %v684, %v663
      %v707 = vsel %vm703, %v686, %v665
      %v709 = vsel %vm703, %v688, %v667
      %v711 = vsel %vm703, %v690, %v669
      %v713 = vsel %vm703, %v692, %v671
      %v715 = vsel %vm703, %v694, %v673
      %v717 = vsel %vm703, %v696, %v675
      %v719 = vsel %vm703, %v698, %v677
      %v721 = vsel %vm703, %v700, %v679
      %v723 = vsel %vm703, %v702, %v681
      %v726 = vunpack.c.l.b16 %v398
      %v727 = vunpack.c.l.b16 %v399
      %v728 = vpack.c.b16 %v727, %v726
      %v730 = vunpack.c.l.b16 %v400
      %v731 = vpack.c.b16 %v730, %v730
      %v733 = vshrl.u32 %v728, 16
      %v735 = vshll.u32 %v728, 16
      %v737 = vrot.slane %v735, 1
      %v738 = vor.u32 %v733, %v737
      %v740 = vshll.u32 %v731, 16
      %v742 = vrot.slane %v740, 1
      %v743 = vsel %vm490, %v738, %v742
      %744 = vrot.lane.b32.xlu0 %v743, 4
      %v745 = vpop.permute.xlu0 %744
      %v746 = vrot.slane %v728, 1
      %v747 = vrot.slane %v731, 1
      %v748 = vsel %vm631, %v746, %v747
      %749 = vrot.lane.b32.xlu0 %v748, 8
      %v750 = vpop.permute.xlu0 %749
      %v752 = vsel %vm682, %v728, %v745
      %v754 = vsel %vm703, %v752, %v750
      %v757 = vunpack.c.l.b16 %v406
      %v758 = vunpack.c.l.b16 %v407
      %v759 = vpack.c.b16 %v758, %v757
      %vm760 = vcmask 97280
      %v761 = vsel %vm760, %v707, 0
      %v763 = vsel %vm760, %v709, 0
      %v765 = vsel %vm760, %v711, 0
      %v767 = vsel %vm760, %v713, 0
      %v769 = vsel %vm760, %v715, 0
      %v771 = vsel %vm760, %v717, 0
      %v773 = vsel %vm760, %v719, 0
      %v775 = vsel %vm760, %v721, 0
      %v777 = vsel %vm760, %v723, 0
      %v779 = vsel %vm760, %v754, 0
      %vm781 = vcmask 1045504
      %v783 = vsel %vm781, %v759, 0
      %785 = vmatpush.bf16.msra.mxu0 0
      %786 = vmatpush.bf16.msra.mxu0 0
      %787 = vmatpush.bf16.msra.mxu0 0
      %788 = vmatpush.bf16.msra.mxu0 0
      %789 = vmatpush.bf16.msra.mxu0 0
      %790 = vmatpush.bf16.msra.mxu0 0
      %791 = vmatpush.bf16.msra.mxu0 0
      %792 = vmatpush.bf16.msra.mxu0 %v783
      %793 = vmatmul.bf16.gmra.mxu0 %v761
      %v794 = vpop.f32.mrf.mxu0
      %v795 = vadd.f32 0.0, %v794
      %v796 = vpop.f32.mrf.mxu0
      %v797 = vadd.f32 0.0, %v796
      %798 = vmatmul.bf16.gmra.mxu0 %v763
      %v799 = vpop.f32.mrf.mxu0
      %v800 = vadd.f32 0.0, %v799
      %v801 = vpop.f32.mrf.mxu0
      %v802 = vadd.f32 0.0, %v801
      %803 = vmatmul.bf16.gmra.mxu0 %v765
      %v804 = vpop.f32.mrf.mxu0
      %v805 = vadd.f32 0.0, %v804
      %v806 = vpop.f32.mrf.mxu0
      %v807 = vadd.f32 0.0, %v806
      %808 = vmatmul.bf16.gmra.mxu0 %v767
      %v809 = vpop.f32.mrf.mxu0
      %v810 = vadd.f32 0.0, %v809
      %v811 = vpop.f32.mrf.mxu0
      %v812 = vadd.f32 0.0, %v811
      %813 = vmatmul.bf16.gmra.mxu0 %v769
      %v814 = vpop.f32.mrf.mxu0
      %v815 = vadd.f32 0.0, %v814
      %v816 = vpop.f32.mrf.mxu0
      %v817 = vadd.f32 0.0, %v816
      %818 = vmatmul.bf16.gmra.mxu0 %v771
      %v819 = vpop.f32.mrf.mxu0
      %v820 = vadd.f32 0.0, %v819
      %v821 = vpop.f32.mrf.mxu0
      %v822 = vadd.f32 0.0, %v821
      %823 = vmatmul.bf16.gmra.mxu0 %v773
      %v824 = vpop.f32.mrf.mxu0
      %v825 = vadd.f32 0.0, %v824
      %v826 = vpop.f32.mrf.mxu0
      %v827 = vadd.f32 0.0, %v826
      %828 = vmatmul.bf16.gmra.mxu0 %v775
      %v829 = vpop.f32.mrf.mxu0
      %v830 = vadd.f32 0.0, %v829
      %v831 = vpop.f32.mrf.mxu0
      %v832 = vadd.f32 0.0, %v831
      %833 = vmatmul.bf16.gmra.mxu0 %v777
      %v834 = vpop.f32.mrf.mxu0
      %v835 = vadd.f32 0.0, %v834
      %v836 = vpop.f32.mrf.mxu0
      %v837 = vadd.f32 0.0, %v836
      %838 = vmatmul.bf16.gmra.mxu0 %v779
      %v839 = vpop.f32.mrf.mxu0
      %v840 = vadd.f32 0.0, %v839
      %v841 = vpop.f32.mrf.mxu0
      %v842 = vadd.f32 0.0, %v841
      %843 = vdwg.mxu0
      %v846 = vunpack.c.l.b16 %v404
      %v847 = vunpack.c.l.b16 %v405
      %v848 = vpack.c.b16 %v847, %v846
      %v849 = vsel %vm760, %v705, 0
      %v852 = vsel %vm781, %v848, 0
      %854 = vmatpush.bf16.msra.mxu0 0
      %855 = vmatpush.bf16.msra.mxu0 0
      %856 = vmatpush.bf16.msra.mxu0 0
      %857 = vmatpush.bf16.msra.mxu0 0
      %858 = vmatpush.bf16.msra.mxu0 0
      %859 = vmatpush.bf16.msra.mxu0 0
      %860 = vmatpush.bf16.msra.mxu0 0
      %861 = vmatpush.bf16.msra.mxu0 %v852
      %862 = vmatmul.bf16.gmra.mxu0 %v849
      %v863 = vpop.f32.mrf.mxu0
      %v864 = vadd.f32 %v795, %v863
      %v865 = vpop.f32.mrf.mxu0
      %v866 = vadd.f32 %v797, %v865
      %867 = vmatmul.bf16.gmra.mxu0 %v761
      %v868 = vpop.f32.mrf.mxu0
      %v869 = vadd.f32 %v800, %v868
      %v870 = vpop.f32.mrf.mxu0
      %v871 = vadd.f32 %v802, %v870
      %872 = vmatmul.bf16.gmra.mxu0 %v763
      %v873 = vpop.f32.mrf.mxu0
      %v874 = vadd.f32 %v805, %v873
      %v875 = vpop.f32.mrf.mxu0
      %v876 = vadd.f32 %v807, %v875
      %877 = vmatmul.bf16.gmra.mxu0 %v765
      %v878 = vpop.f32.mrf.mxu0
      %v879 = vadd.f32 %v810, %v878
      %v880 = vpop.f32.mrf.mxu0
      %v881 = vadd.f32 %v812, %v880
      %882 = vmatmul.bf16.gmra.mxu0 %v767
      %v883 = vpop.f32.mrf.mxu0
      %v884 = vadd.f32 %v815, %v883
      %v885 = vpop.f32.mrf.mxu0
      %v886 = vadd.f32 %v817, %v885
      %887 = vmatmul.bf16.gmra.mxu0 %v769
      %v888 = vpop.f32.mrf.mxu0
      %v889 = vadd.f32 %v820, %v888
      %v890 = vpop.f32.mrf.mxu0
      %v891 = vadd.f32 %v822, %v890
      %892 = vmatmul.bf16.gmra.mxu0 %v771
      %v893 = vpop.f32.mrf.mxu0
      %v894 = vadd.f32 %v825, %v893
      %v895 = vpop.f32.mrf.mxu0
      %v896 = vadd.f32 %v827, %v895
      %897 = vmatmul.bf16.gmra.mxu0 %v773
      %v898 = vpop.f32.mrf.mxu0
      %v899 = vadd.f32 %v830, %v898
      %v900 = vpop.f32.mrf.mxu0
      %v901 = vadd.f32 %v832, %v900
      %902 = vmatmul.bf16.gmra.mxu0 %v775
      %v903 = vpop.f32.mrf.mxu0
      %v904 = vadd.f32 %v835, %v903
      %v905 = vpop.f32.mrf.mxu0
      %v906 = vadd.f32 %v837, %v905
      %907 = vmatmul.bf16.gmra.mxu0 %v777
      %v908 = vpop.f32.mrf.mxu0
      %v909 = vadd.f32 %v840, %v908
      %v910 = vpop.f32.mrf.mxu0
      %v911 = vadd.f32 %v842, %v910
      %912 = vdwg.mxu0
      %v915 = vunpack.c.l.b16 %v401
      %v916 = vunpack.c.l.b16 %v402
      %v917 = vpack.c.b16 %v916, %v915
      %v919 = vunpack.c.l.b16 %v403
      %v920 = vpack.c.b16 %v919, %v919
      %v922 = vshrl.u32 %v917, 16
      %v924 = vshll.u32 %v917, 16
      %v926 = vrot.slane %v924, 1
      %v927 = vor.u32 %v922, %v926
      %v929 = vshll.u32 %v920, 16
      %v931 = vrot.slane %v929, 1
      %v932 = vsel %vm490, %v927, %v931
      %933 = vrot.lane.b32.xlu0 %v932, 4
      %v934 = vpop.permute.xlu0 %933
      %v935 = vrot.slane %v917, 1
      %v936 = vrot.slane %v920, 1
      %v937 = vsel %vm631, %v935, %v936
      %938 = vrot.lane.b32.xlu0 %v937, 8
      %v939 = vpop.permute.xlu0 %938
      %v941 = vsel %vm682, %v917, %v934
      %v943 = vsel %vm703, %v941, %v939
      %v946 = vunpack.c.l.b16 %v408
      %v947 = vunpack.c.l.b16 %v409
      %v948 = vpack.c.b16 %v947, %v946
      %v949 = vsel %vm760, %v943, 0
      %v952 = vsel %vm781, %v948, 0
      %954 = vmatpush.bf16.msra.mxu0 0
      %955 = vmatpush.bf16.msra.mxu0 0
      %956 = vmatpush.bf16.msra.mxu0 0
      %957 = vmatpush.bf16.msra.mxu0 0
      %958 = vmatpush.bf16.msra.mxu0 0
      %959 = vmatpush.bf16.msra.mxu0 0
      %960 = vmatpush.bf16.msra.mxu0 0
      %961 = vmatpush.bf16.msra.mxu0 %v952
      %962 = vmatmul.bf16.gmra.mxu0 %v763
      %v963 = vpop.f32.mrf.mxu0
      %v964 = vadd.f32 0.0, %v963
      %v965 = vpop.f32.mrf.mxu0
      %v966 = vadd.f32 0.0, %v965
      %967 = vmatmul.bf16.gmra.mxu0 %v765
      %v968 = vpop.f32.mrf.mxu0
      %v969 = vadd.f32 0.0, %v968
      %v970 = vpop.f32.mrf.mxu0
      %v971 = vadd.f32 0.0, %v970
      %972 = vmatmul.bf16.gmra.mxu0 %v767
      %v973 = vpop.f32.mrf.mxu0
      %v974 = vadd.f32 0.0, %v973
      %v975 = vpop.f32.mrf.mxu0
      %v976 = vadd.f32 0.0, %v975
      %977 = vmatmul.bf16.gmra.mxu0 %v769
      %v978 = vpop.f32.mrf.mxu0
      %v979 = vadd.f32 0.0, %v978
      %v980 = vpop.f32.mrf.mxu0
      %v981 = vadd.f32 0.0, %v980
      %982 = vmatmul.bf16.gmra.mxu0 %v771
      %v983 = vpop.f32.mrf.mxu0
      %v984 = vadd.f32 0.0, %v983
      %v985 = vpop.f32.mrf.mxu0
      %v986 = vadd.f32 0.0, %v985
      %987 = vmatmul.bf16.gmra.mxu0 %v773
      %v988 = vpop.f32.mrf.mxu0
      %v989 = vadd.f32 0.0, %v988
      %v990 = vpop.f32.mrf.mxu0
      %v991 = vadd.f32 0.0, %v990
      %992 = vmatmul.bf16.gmra.mxu0 %v775
      %v993 = vpop.f32.mrf.mxu0
      %v994 = vadd.f32 0.0, %v993
      %v995 = vpop.f32.mrf.mxu0
      %v996 = vadd.f32 0.0, %v995
      %997 = vmatmul.bf16.gmra.mxu0 %v777
      %v998 = vpop.f32.mrf.mxu0
      %v999 = vadd.f32 0.0, %v998
      %v1000 = vpop.f32.mrf.mxu0
      %v1001 = vadd.f32 0.0, %v1000
      %1002 = vmatmul.bf16.gmra.mxu0 %v779
      %v1003 = vpop.f32.mrf.mxu0
      %v1004 = vadd.f32 0.0, %v1003
      %v1005 = vpop.f32.mrf.mxu0
      %v1006 = vadd.f32 0.0, %v1005
      %1007 = vmatmul.bf16.gmra.mxu0 %v949
      %v1008 = vpop.f32.mrf.mxu0
      %v1009 = vadd.f32 0.0, %v1008
      %v1010 = vpop.f32.mrf.mxu0
      %v1011 = vadd.f32 0.0, %v1010
      %1012 = vdwg.mxu0
      %v1013 = vadd.f32 %v864, %v964
      %v1014 = vadd.f32 %v866, %v966
      %v1015 = vadd.f32 %v869, %v969
      %v1016 = vadd.f32 %v871, %v971
      %v1017 = vadd.f32 %v874, %v974
      %v1018 = vadd.f32 %v876, %v976
      %v1019 = vadd.f32 %v879, %v979
      %v1020 = vadd.f32 %v881, %v981
      %v1021 = vadd.f32 %v884, %v984
      %v1022 = vadd.f32 %v886, %v986
      %v1023 = vadd.f32 %v889, %v989
      %v1024 = vadd.f32 %v891, %v991
      %v1025 = vadd.f32 %v894, %v994
      %v1026 = vadd.f32 %v896, %v996
      %v1027 = vadd.f32 %v899, %v999
      %v1028 = vadd.f32 %v901, %v1001
      %v1029 = vadd.f32 %v904, %v1004
      %v1030 = vadd.f32 %v906, %v1006
      %v1031 = vadd.f32 %v909, %v1009
      %v1032 = vadd.f32 %v911, %v1011
      %v1033 = vld [vmem:[%s2] sm:$0x1]
      %v1035 = vperm.slane %v1033, 0
      %v1037 = vmul.f32 %v1013, %v1035
      %v1038 = vmul.f32 %v1014, %v1035
      %v1039 = vmul.f32 %v1015, %v1035
      %v1040 = vmul.f32 %v1016, %v1035
      %v1041 = vmul.f32 %v1017, %v1035
      %v1042 = vmul.f32 %v1018, %v1035
      %v1043 = vmul.f32 %v1019, %v1035
      %v1044 = vmul.f32 %v1020, %v1035
      %v1045 = vmul.f32 %v1021, %v1035
      %v1046 = vmul.f32 %v1022, %v1035
      %v1047 = vmul.f32 %v1023, %v1035
      %v1048 = vmul.f32 %v1024, %v1035
      %v1049 = vmul.f32 %v1025, %v1035
      %v1050 = vmul.f32 %v1026, %v1035
      %v1051 = vmul.f32 %v1027, %v1035
      %v1052 = vmul.f32 %v1028, %v1035
      %v1053 = vmul.f32 %v1029, %v1035
      %v1054 = vmul.f32 %v1030, %v1035
      %v1055 = vmul.f32 %v1031, %v1035
      %v1056 = vmul.f32 %v1032, %v1035
      %v1057 = vld [vmem:[%s3] sm:$0x1]
      %v1059 = vperm.slane %v1057, 0
      %v1061 = vadd.f32 %v1037, %v1059
      %v1062 = vadd.f32 %v1038, %v1059
      %v1063 = vadd.f32 %v1039, %v1059
      %v1064 = vadd.f32 %v1040, %v1059
      %v1065 = vadd.f32 %v1041, %v1059
      %v1066 = vadd.f32 %v1042, %v1059
      %v1067 = vadd.f32 %v1043, %v1059
      %v1068 = vadd.f32 %v1044, %v1059
      %v1069 = vadd.f32 %v1045, %v1059
      %v1070 = vadd.f32 %v1046, %v1059
      %v1071 = vadd.f32 %v1047, %v1059
      %v1072 = vadd.f32 %v1048, %v1059
      %v1073 = vadd.f32 %v1049, %v1059
      %v1074 = vadd.f32 %v1050, %v1059
      %v1075 = vadd.f32 %v1051, %v1059
      %v1076 = vadd.f32 %v1052, %v1059
      %v1077 = vadd.f32 %v1053, %v1059
      %v1078 = vadd.f32 %v1054, %v1059
      %v1079 = vadd.f32 %v1055, %v1059
      %v1080 = vadd.f32 %v1056, %v1059
      %v1081 = vmax.f32 %v1061, 0.0
      %v1082 = vmax.f32 %v1062, 0.0
      %v1083 = vmax.f32 %v1063, 0.0
      %v1084 = vmax.f32 %v1064, 0.0
      %v1085 = vmax.f32 %v1065, 0.0
      %v1086 = vmax.f32 %v1066, 0.0
      %v1087 = vmax.f32 %v1067, 0.0
      %v1088 = vmax.f32 %v1068, 0.0
      %v1089 = vmax.f32 %v1069, 0.0
      %v1090 = vmax.f32 %v1070, 0.0
      %v1091 = vmax.f32 %v1071, 0.0
      %v1092 = vmax.f32 %v1072, 0.0
      %v1093 = vmax.f32 %v1073, 0.0
      %v1094 = vmax.f32 %v1074, 0.0
      %v1095 = vmax.f32 %v1075, 0.0
      %v1096 = vmax.f32 %v1076, 0.0
      %v1097 = vmax.f32 %v1077, 0.0
      %v1098 = vmax.f32 %v1078, 0.0
      %v1099 = vmax.f32 %v1079, 0.0
      %v1100 = vmax.f32 %v1080, 0.0
      %p1101 = scmp.gt.s32.totalorder %s25, 0
      %s1102 = scalar_select %p1101, 1, 0
      %v1103 = vstv %s1102
      %vm1104 = vcmp.eq.s32.totalorder %v1103, 1
      %p1105 = scmp.lt.s32.totalorder %s25, 1
      %s1106 = scalar_select %p1105, 1, 0
      %v1107 = vstv %s1106
      %vm1108 = vcmp.eq.s32.totalorder %v1107, 1
      %v1109 = vsel %vm1104, 1, 0
      %v1110 = vsel %vm1108, 1, 0
      %vm1111 = vcmp.eq.s32.totalorder %v1109, 1
      %vm1112 = vcmp.eq.s32.totalorder %v1110, 1
      %v1113 = vsel %vm1111, %v1081, 0.0
      %v1114 = vsel %vm1111, %v1082, 0.0
      %v1115 = vsel 1, %v1083, 0.0
      %v1116 = vsel 1, %v1084, 0.0
      %v1117 = vsel 1, %v1085, 0.0
      %v1118 = vsel 1, %v1086, 0.0
      %v1119 = vsel 1, %v1087, 0.0
      %v1120 = vsel 1, %v1088, 0.0
      %v1121 = vsel 1, %v1089, 0.0
      %v1122 = vsel 1, %v1090, 0.0
      %v1123 = vsel 1, %v1091, 0.0
      %v1124 = vsel 1, %v1092, 0.0
      %v1125 = vsel 1, %v1093, 0.0
      %v1126 = vsel 1, %v1094, 0.0
      %v1127 = vsel 1, %v1095, 0.0
      %v1128 = vsel 1, %v1096, 0.0
      %v1129 = vsel 1, %v1097, 0.0
      %v1130 = vsel 1, %v1098, 0.0
      %v1131 = vsel %vm1112, %v1099, 0.0
      %v1132 = vsel %vm1112, %v1100, 0.0
      %v1133 = vpack.c.bf16 %v1113, %v1113
      %v1134 = vpack.c.bf16 %v1114, %v1114
      %v1135 = vpack.c.bf16 %v1115, %v1115
      %v1136 = vpack.c.bf16 %v1116, %v1116
      %v1137 = vpack.c.bf16 %v1117, %v1117
      %v1138 = vpack.c.bf16 %v1118, %v1118
      %v1139 = vpack.c.bf16 %v1119, %v1119
      %v1140 = vpack.c.bf16 %v1120, %v1120
      %v1141 = vpack.c.bf16 %v1121, %v1121
      %v1142 = vpack.c.bf16 %v1122, %v1122
      %v1143 = vpack.c.bf16 %v1123, %v1123
      %v1144 = vpack.c.bf16 %v1124, %v1124
      %v1145 = vpack.c.bf16 %v1125, %v1125
      %v1146 = vpack.c.bf16 %v1126, %v1126
      %v1147 = vpack.c.bf16 %v1127, %v1127
      %v1148 = vpack.c.bf16 %v1128, %v1128
      %v1149 = vpack.c.bf16 %v1129, %v1129
      %v1150 = vpack.c.bf16 %v1130, %v1130
      %v1151 = vpack.c.bf16 %v1131, %v1131
      %v1152 = vpack.c.bf16 %v1132, %v1132
      %v1173 = vunpack.c.l.b16 %v1133
      %v1174 = vunpack.c.l.b16 %v1134
      %v1175 = vunpack.c.l.b16 %v1135
      %v1176 = vunpack.c.l.b16 %v1136
      %v1177 = vunpack.c.l.b16 %v1137
      %v1178 = vunpack.c.l.b16 %v1138
      %v1179 = vunpack.c.l.b16 %v1139
      %v1180 = vunpack.c.l.b16 %v1140
      %v1181 = vunpack.c.l.b16 %v1141
      %v1182 = vunpack.c.l.b16 %v1142
      %v1183 = vunpack.c.l.b16 %v1143
      %v1184 = vunpack.c.l.b16 %v1144
      %v1185 = vunpack.c.l.b16 %v1145
      %v1186 = vunpack.c.l.b16 %v1146
      %v1187 = vunpack.c.l.b16 %v1147
      %v1188 = vunpack.c.l.b16 %v1148
      %v1189 = vunpack.c.l.b16 %v1149
      %v1190 = vunpack.c.l.b16 %v1150
      %v1191 = vunpack.c.l.b16 %v1151
      %v1192 = vunpack.c.l.b16 %v1152
      %v1193 = vpack.c.b16 %v1174, %v1173
      %v1194 = vpack.c.b16 %v1176, %v1175
      %v1195 = vpack.c.b16 %v1178, %v1177
      %v1196 = vpack.c.b16 %v1180, %v1179
      %v1197 = vpack.c.b16 %v1182, %v1181
      %v1198 = vpack.c.b16 %v1184, %v1183
      %v1199 = vpack.c.b16 %v1186, %v1185
      %v1200 = vpack.c.b16 %v1188, %v1187
      %v1201 = vpack.c.b16 %v1190, %v1189
      %v1202 = vpack.c.b16 %v1192, %v1191
      %v1204 = vshrl.u32 %v1193, 16
      %v1206 = vrot.slane %v1204, 7
      %v1207 = vshll.u32 %v1193, 16
      %v1209 = vor.u32 %v1206, %v1207
      %v1211 = vshrl.u32 %v1194, 16
      %v1213 = vrot.slane %v1211, 7
      %v1214 = vshll.u32 %v1194, 16
      %v1216 = vor.u32 %v1213, %v1214
      %v1218 = vshrl.u32 %v1195, 16
      %v1220 = vrot.slane %v1218, 7
      %v1221 = vshll.u32 %v1195, 16
      %v1223 = vor.u32 %v1220, %v1221
      %v1225 = vshrl.u32 %v1196, 16
      %v1227 = vrot.slane %v1225, 7
      %v1228 = vshll.u32 %v1196, 16
      %v1230 = vor.u32 %v1227, %v1228
      %v1232 = vshrl.u32 %v1197, 16
      %v1234 = vrot.slane %v1232, 7
      %v1235 = vshll.u32 %v1197, 16
      %v1237 = vor.u32 %v1234, %v1235
      %v1239 = vshrl.u32 %v1198, 16
      %v1241 = vrot.slane %v1239, 7
      %v1242 = vshll.u32 %v1198, 16
      %v1244 = vor.u32 %v1241, %v1242
      %v1246 = vshrl.u32 %v1199, 16
      %v1248 = vrot.slane %v1246, 7
      %v1249 = vshll.u32 %v1199, 16
      %v1251 = vor.u32 %v1248, %v1249
      %v1253 = vshrl.u32 %v1200, 16
      %v1255 = vrot.slane %v1253, 7
      %v1256 = vshll.u32 %v1200, 16
      %v1258 = vor.u32 %v1255, %v1256
      %v1260 = vshrl.u32 %v1201, 16
      %v1262 = vrot.slane %v1260, 7
      %v1263 = vshll.u32 %v1201, 16
      %v1265 = vor.u32 %v1262, %v1263
      %v1267 = vshrl.u32 %v1202, 16
      %v1269 = vrot.slane %v1267, 7
      %v1270 = vshll.u32 %v1202, 16
      %v1272 = vor.u32 %v1269, %v1270
      %vm1293 = vcmask 1040384
      %vm1294 = vsmask.f32 256
      %vm1295 = vmand %vm1293, %vm1294
      %v1296 = vsel %vm1295, 0, %v1209
      %v1297 = vsel %vm1295, 0, %v1216
      %v1298 = vsel %vm1295, 0, %v1223
      %v1299 = vsel %vm1295, 0, %v1230
      %v1300 = vsel %vm1295, 0, %v1237
      %v1301 = vsel %vm1295, 0, %v1244
      %v1302 = vsel %vm1295, 0, %v1251
      %v1303 = vsel %vm1295, 0, %v1258
      %v1304 = vsel %vm1295, 0, %v1265
      %v1305 = vsel %vm1295, 0, %v1272
      %v1306 = vsel %vm1295, %v1206, 0
      %v1307 = vsel %vm1295, %v1213, 0
      %v1308 = vsel %vm1295, %v1220, 0
      %v1309 = vsel %vm1295, %v1227, 0
      %v1310 = vsel %vm1295, %v1234, 0
      %v1311 = vsel %vm1295, %v1241, 0
      %v1312 = vsel %vm1295, %v1248, 0
      %v1313 = vsel %vm1295, %v1255, 0
      %v1314 = vsel %vm1295, %v1262, 0
      %v1315 = vsel %vm1295, %v1269, 0
      %v1316 = vld [vmem:[%s4] sm:$0xf]
      %v1317 = vld [vmem:[%s4 + $0x4] sm:$0xf]
      %v1318 = vld [vmem:[%s4 + $0x8] sm:$0xf]
      %v1319 = vld [vmem:[%s4 + $0xc] sm:$0xf]
      %v1320 = vld [vmem:[%s4 + $0x10] sm:$0xf]
      %v1321 = vld [vmem:[%s4 + $0x14] sm:$0xf]
      %v1322 = vld [vmem:[%s4 + $0x18] sm:$0xf]
      %v1323 = vld [vmem:[%s4 + $0x1c] sm:$0xf]
      %v1324 = vld [vmem:[%s4 + $0x20] sm:$0xf]
      %v1325 = vld [vmem:[%s4 + $0x24] sm:$0xf]
      %v1326 = vld [vmem:[%s4 + $0x28] sm:$0xf]
      %v1327 = vld [vmem:[%s4 + $0x2c] sm:$0xf]
      %v1328 = vld [vmem:[%s4 + $0x30] sm:$0xf]
      %v1329 = vld [vmem:[%s4 + $0x34] sm:$0xf]
      %v1330 = vld [vmem:[%s4 + $0x38] sm:$0xf]
      %v1331 = vld [vmem:[%s4 + $0x3c] sm:$0xf]
      %v1332 = vld [vmem:[%s4 + $0x40] sm:$0xf]
      %v1333 = vld [vmem:[%s4 + $0x44] sm:$0xf]
      %v1334 = vld [vmem:[%s4 + $0x48] sm:$0xf]
      %v1335 = vld [vmem:[%s4 + $0x4c] sm:$0xf]
      %v1336 = vld [vmem:[%s4 + $0x50] sm:$0xf]
      %v1337 = vld [vmem:[%s4 + $0x54] sm:$0xf]
      %v1338 = vld [vmem:[%s4 + $0x58] sm:$0xf]
      %v1339 = vld [vmem:[%s4 + $0x5c] sm:$0xf]
      %v1340 = vld [vmem:[%s4 + $0x60] sm:$0xf]
      %v1341 = vld [vmem:[%s4 + $0x64] sm:$0xf]
      %v1342 = vld [vmem:[%s4 + $0x68] sm:$0xf]
      %v1343 = vld [vmem:[%s4 + $0x6c] sm:$0xf]
      %v1344 = vld [vmem:[%s4 + $0x70] sm:$0xf]
      %v1345 = vld [vmem:[%s4 + $0x74] sm:$0xf]
      %v1346 = vld [vmem:[%s4 + $0x78] sm:$0xf]
      %v1347 = vld [vmem:[%s4 + $0x7c] sm:$0xf]
      %v1348 = vld [vmem:[%s4 + $0x80] sm:$0xf]
      %v1349 = vld [vmem:[%s4 + $0x84] sm:$0xf]
      %v1350 = vld [vmem:[%s4 + $0x88] sm:$0xf]
      %v1351 = vld [vmem:[%s4 + $0x8c] sm:$0xf]
      %v1352 = vld [vmem:[%s4 + $0x90] sm:$0xf]
      %v1353 = vld [vmem:[%s4 + $0x94] sm:$0xf]
      %v1354 = vld [vmem:[%s4 + $0x98] sm:$0xf]
      %v1355 = vld [vmem:[%s4 + $0x9c] sm:$0xf]
      %v1356 = vld [vmem:[%s4 + $0xa0] sm:$0xf]
      %v1357 = vld [vmem:[%s4 + $0xa4] sm:$0xf]
      %v1358 = vld [vmem:[%s4 + $0xa8] sm:$0xf]
      %v1359 = vld [vmem:[%s4 + $0xac] sm:$0xf]
      %v1360 = vld [vmem:[%s4 + $0xb0] sm:$0xf]
      %v1361 = vld [vmem:[%s4 + $0xb4] sm:$0xf]
      %v1362 = vld [vmem:[%s4 + $0xb8] sm:$0xf]
      %v1363 = vld [vmem:[%s4 + $0xbc] sm:$0xf]
      %v1364 = vld [vmem:[%s4 + $0xc0] sm:$0xf]
      %v1365 = vld [vmem:[%s4 + $0xc4] sm:$0xf]
      %v1366 = vld [vmem:[%s4 + $0xc8] sm:$0xf]
      %v1367 = vld [vmem:[%s4 + $0xcc] sm:$0xf]
      %v1368 = vld [vmem:[%s4 + $0xd0] sm:$0xf]
      %v1369 = vld [vmem:[%s4 + $0xd4] sm:$0xf]
      %v1370 = vld [vmem:[%s4 + $0xd8] sm:$0xf]
      %v1371 = vld [vmem:[%s4 + $0xdc] sm:$0xf]
      %v1372 = vld [vmem:[%s4 + $0xe0] sm:$0xf]
      %v1373 = vld [vmem:[%s4 + $0xe4] sm:$0xf]
      %v1374 = vld [vmem:[%s4 + $0xe8] sm:$0xf]
      %v1375 = vld [vmem:[%s4 + $0xec] sm:$0xf]
      %v1376 = vld [vmem:[%s4 + $0xf0] sm:$0xf]
      %v1377 = vld [vmem:[%s4 + $0xf4] sm:$0xf]
      %v1378 = vld [vmem:[%s4 + $0xf8] sm:$0xf]
      %v1379 = vld [vmem:[%s4 + $0xfc] sm:$0xf]
      %v1380 = vld [vmem:[%s4 + $0x100] sm:$0xf]
      %v1381 = vld [vmem:[%s4 + $0x104] sm:$0xf]
      %v1382 = vld [vmem:[%s4 + $0x108] sm:$0xf]
      %v1383 = vld [vmem:[%s4 + $0x10c] sm:$0xf]
      %v1384 = vld [vmem:[%s4 + $0x110] sm:$0xf]
      %v1385 = vld [vmem:[%s4 + $0x114] sm:$0xf]
      %v1386 = vld [vmem:[%s4 + $0x118] sm:$0xf]
      %v1387 = vld [vmem:[%s4 + $0x11c] sm:$0xf]
      %v1388 = vld [vmem:[%s4 + $0x120] sm:$0xf]
      %v1389 = vld [vmem:[%s4 + $0x124] sm:$0xf]
      %v1390 = vld [vmem:[%s4 + $0x128] sm:$0xf]
      %v1391 = vld [vmem:[%s4 + $0x12c] sm:$0xf]
      %v1392 = vld [vmem:[%s4 + $0x130] sm:$0xf]
      %v1393 = vld [vmem:[%s4 + $0x134] sm:$0xf]
      %v1394 = vld [vmem:[%s4 + $0x138] sm:$0xf]
      %v1395 = vld [vmem:[%s4 + $0x13c] sm:$0xf]
      %v1396 = vld [vmem:[%s4 + $0x140] sm:$0xf]
      %v1397 = vld [vmem:[%s4 + $0x144] sm:$0xf]
      %v1398 = vld [vmem:[%s4 + $0x148] sm:$0xf]
      %v1399 = vld [vmem:[%s4 + $0x14c] sm:$0xf]
      %v1400 = vld [vmem:[%s4 + $0x150] sm:$0xf]
      %v1401 = vld [vmem:[%s4 + $0x154] sm:$0xf]
      %v1402 = vld [vmem:[%s4 + $0x158] sm:$0xf]
      %v1403 = vld [vmem:[%s4 + $0x15c] sm:$0xf]
      %v1404 = vld [vmem:[%s4 + $0x160] sm:$0xf]
      %v1405 = vld [vmem:[%s4 + $0x164] sm:$0xf]
      %v1406 = vld [vmem:[%s4 + $0x168] sm:$0xf]
      %v1407 = vld [vmem:[%s4 + $0x16c] sm:$0xf]
      %v1408 = vld [vmem:[%s4 + $0x170] sm:$0xf]
      %v1409 = vld [vmem:[%s4 + $0x174] sm:$0xf]
      %v1410 = vld [vmem:[%s4 + $0x178] sm:$0xf]
      %v1411 = vld [vmem:[%s4 + $0x17c] sm:$0xf]
      %v1412 = vld [vmem:[%s4 + $0x180] sm:$0xf]
      %v1413 = vld [vmem:[%s4 + $0x184] sm:$0xf]
      %v1414 = vld [vmem:[%s4 + $0x188] sm:$0xf]
      %v1415 = vld [vmem:[%s4 + $0x18c] sm:$0xf]
      %v1416 = vld [vmem:[%s4 + $0x190] sm:$0xf]
      %v1417 = vld [vmem:[%s4 + $0x194] sm:$0xf]
      %v1418 = vld [vmem:[%s4 + $0x198] sm:$0xf]
      %v1419 = vld [vmem:[%s4 + $0x19c] sm:$0xf]
      %v1420 = vld [vmem:[%s4 + $0x1a0] sm:$0xf]
      %v1421 = vld [vmem:[%s4 + $0x1a4] sm:$0xf]
      %v1422 = vld [vmem:[%s4 + $0x1a8] sm:$0xf]
      %v1423 = vld [vmem:[%s4 + $0x1ac] sm:$0xf]
      %v1424 = vld [vmem:[%s4 + $0x1b0] sm:$0xf]
      %v1425 = vld [vmem:[%s4 + $0x1b4] sm:$0xf]
      %v1426 = vld [vmem:[%s4 + $0x1b8] sm:$0xf]
      %v1427 = vld [vmem:[%s4 + $0x1bc] sm:$0xf]
      %v1428 = vld [vmem:[%s4 + $0x1c0] sm:$0xf]
      %v1429 = vld [vmem:[%s4 + $0x1c4] sm:$0xf]
      %v1430 = vld [vmem:[%s4 + $0x1c8] sm:$0xf]
      %v1431 = vld [vmem:[%s4 + $0x1cc] sm:$0xf]
      %v1432 = vld [vmem:[%s4 + $0x1d0] sm:$0xf]
      %v1433 = vld [vmem:[%s4 + $0x1d4] sm:$0xf]
      %v1434 = vld [vmem:[%s4 + $0x1d8] sm:$0xf]
      %v1435 = vld [vmem:[%s4 + $0x1dc] sm:$0xf]
      %v1436 = vld [vmem:[%s4 + $0x1e0] sm:$0xf]
      %v1437 = vld [vmem:[%s4 + $0x1e4] sm:$0xf]
      %v1438 = vld [vmem:[%s4 + $0x1e8] sm:$0xf]
      %v1439 = vld [vmem:[%s4 + $0x1ec] sm:$0xf]
      %v1440 = vld [vmem:[%s4 + $0x1f0] sm:$0xf]
      %v1441 = vld [vmem:[%s4 + $0x1f4] sm:$0xf]
      %v1442 = vld [vmem:[%s4 + $0x1f8] sm:$0xf]
      %v1443 = vld [vmem:[%s4 + $0x1fc] sm:$0xf]
      %v1444 = vld [vmem:[%s4 + $0x200] sm:$0xf]
      %v1445 = vld [vmem:[%s4 + $0x204] sm:$0xf]
      %v1446 = vld [vmem:[%s4 + $0x208] sm:$0xf]
      %v1447 = vld [vmem:[%s4 + $0x20c] sm:$0xf]
      %v1448 = vld [vmem:[%s4 + $0x210] sm:$0xf]
      %v1449 = vld [vmem:[%s4 + $0x214] sm:$0xf]
      %v1450 = vld [vmem:[%s4 + $0x218] sm:$0xf]
      %v1451 = vld [vmem:[%s4 + $0x21c] sm:$0xf]
      %v1452 = vld [vmem:[%s4 + $0x220] sm:$0xf]
      %v1453 = vld [vmem:[%s4 + $0x224] sm:$0xf]
      %v1454 = vld [vmem:[%s4 + $0x228] sm:$0xf]
      %v1455 = vld [vmem:[%s4 + $0x22c] sm:$0xf]
      %v1456 = vld [vmem:[%s4 + $0x230] sm:$0xf]
      %v1457 = vld [vmem:[%s4 + $0x234] sm:$0xf]
      %v1458 = vld [vmem:[%s4 + $0x238] sm:$0xf]
      %v1459 = vld [vmem:[%s4 + $0x23c] sm:$0xf]
      %v1461 = vshrl.u32 %v1296, 16
      %v1463 = vshll.u32 %v1296, 16
      %v1465 = vrot.slane %v1463, 1
      %v1466 = vor.u32 %v1461, %v1465
      %v1468 = vshll.u32 %v1306, 16
      %v1470 = vrot.slane %v1468, 1
      %v1471 = vsel %vm490, %v1466, %v1470
      %v1473 = vshrl.u32 %v1297, 16
      %v1475 = vshll.u32 %v1297, 16
      %v1477 = vrot.slane %v1475, 1
      %v1478 = vor.u32 %v1473, %v1477
      %v1480 = vshll.u32 %v1307, 16
      %v1482 = vrot.slane %v1480, 1
      %v1483 = vsel %vm490, %v1478, %v1482
      %v1485 = vshrl.u32 %v1298, 16
      %v1487 = vshll.u32 %v1298, 16
      %v1489 = vrot.slane %v1487, 1
      %v1490 = vor.u32 %v1485, %v1489
      %v1492 = vshll.u32 %v1308, 16
      %v1494 = vrot.slane %v1492, 1
      %v1495 = vsel %vm490, %v1490, %v1494
      %v1497 = vshrl.u32 %v1299, 16
      %v1499 = vshll.u32 %v1299, 16
      %v1501 = vrot.slane %v1499, 1
      %v1502 = vor.u32 %v1497, %v1501
      %v1504 = vshll.u32 %v1309, 16
      %v1506 = vrot.slane %v1504, 1
      %v1507 = vsel %vm490, %v1502, %v1506
      %v1509 = vshrl.u32 %v1300, 16
      %v1511 = vshll.u32 %v1300, 16
      %v1513 = vrot.slane %v1511, 1
      %v1514 = vor.u32 %v1509, %v1513
      %v1516 = vshll.u32 %v1310, 16
      %v1518 = vrot.slane %v1516, 1
      %v1519 = vsel %vm490, %v1514, %v1518
      %v1521 = vshrl.u32 %v1301, 16
      %v1523 = vshll.u32 %v1301, 16
      %v1525 = vrot.slane %v1523, 1
      %v1526 = vor.u32 %v1521, %v1525
      %v1528 = vshll.u32 %v1311, 16
      %v1530 = vrot.slane %v1528, 1
      %v1531 = vsel %vm490, %v1526, %v1530
      %v1533 = vshrl.u32 %v1302, 16
      %v1535 = vshll.u32 %v1302, 16
      %v1537 = vrot.slane %v1535, 1
      %v1538 = vor.u32 %v1533, %v1537
      %v1540 = vshll.u32 %v1312, 16
      %v1542 = vrot.slane %v1540, 1
      %v1543 = vsel %vm490, %v1538, %v1542
      %v1545 = vshrl.u32 %v1303, 16
      %v1547 = vshll.u32 %v1303, 16
      %v1549 = vrot.slane %v1547, 1
      %v1550 = vor.u32 %v1545, %v1549
      %v1552 = vshll.u32 %v1313, 16
      %v1554 = vrot.slane %v1552, 1
      %v1555 = vsel %vm490, %v1550, %v1554
      %v1580 = vrot.slane %v1296, 1
      %v1581 = vrot.slane %v1306, 1
      %v1582 = vsel %vm631, %v1580, %v1581
      %v1583 = vrot.slane %v1297, 1
      %v1584 = vrot.slane %v1307, 1
      %v1585 = vsel %vm631, %v1583, %v1584
      %v1586 = vrot.slane %v1298, 1
      %v1587 = vrot.slane %v1308, 1
      %v1588 = vsel %vm631, %v1586, %v1587
      %v1589 = vrot.slane %v1299, 1
      %v1590 = vrot.slane %v1309, 1
      %v1591 = vsel %vm631, %v1589, %v1590
      %v1592 = vrot.slane %v1300, 1
      %v1593 = vrot.slane %v1310, 1
      %v1594 = vsel %vm631, %v1592, %v1593
      %v1595 = vrot.slane %v1301, 1
      %v1596 = vrot.slane %v1311, 1
      %v1597 = vsel %vm631, %v1595, %v1596
      %v1598 = vrot.slane %v1302, 1
      %v1599 = vrot.slane %v1312, 1
      %v1600 = vsel %vm631, %v1598, %v1599
      %v1601 = vrot.slane %v1303, 1
      %v1602 = vrot.slane %v1313, 1
      %v1603 = vsel %vm631, %v1601, %v1602
      %v1613 = vshrl.u32 %v1304, 16
      %v1615 = vshll.u32 %v1304, 16
      %v1617 = vrot.slane %v1615, 1
      %v1618 = vor.u32 %v1613, %v1617
      %v1620 = vshll.u32 %v1314, 16
      %v1622 = vrot.slane %v1620, 1
      %v1623 = vsel %vm490, %v1618, %v1622
      %v1627 = vrot.slane %v1304, 1
      %v1628 = vrot.slane %v1314, 1
      %v1629 = vsel %vm631, %v1627, %v1628
      %v1679 = vunpack.c.l.b16 %v1364
      %v1680 = vunpack.c.l.b16 %v1365
      %v1681 = vunpack.c.l.b16 %v1366
      %v1682 = vunpack.c.l.b16 %v1367
      %v1683 = vunpack.c.l.b16 %v1368
      %v1684 = vunpack.c.l.b16 %v1369
      %v1685 = vunpack.c.l.b16 %v1370
      %v1686 = vunpack.c.l.b16 %v1371
      %v1687 = vunpack.c.l.b16 %v1372
      %v1688 = vunpack.c.l.b16 %v1373
      %v1689 = vunpack.c.l.b16 %v1374
      %v1690 = vunpack.c.l.b16 %v1375
      %v1691 = vunpack.c.l.b16 %v1376
      %v1692 = vunpack.c.l.b16 %v1377
      %v1693 = vunpack.c.l.b16 %v1378
      %v1694 = vunpack.c.l.b16 %v1379
      %v1695 = vunpack.c.l.b16 %v1380
      %v1696 = vunpack.c.l.b16 %v1381
      %v1697 = vunpack.c.l.b16 %v1382
      %v1698 = vunpack.c.l.b16 %v1383
      %v1699 = vunpack.c.l.b16 %v1384
      %v1700 = vunpack.c.l.b16 %v1385
      %v1701 = vunpack.c.l.b16 %v1386
      %v1702 = vunpack.c.l.b16 %v1387
      %v1703 = vunpack.c.l.b16 %v1388
      %v1704 = vunpack.c.l.b16 %v1389
      %v1705 = vunpack.c.l.b16 %v1390
      %v1706 = vunpack.c.l.b16 %v1391
      %v1707 = vunpack.c.l.b16 %v1392
      %v1708 = vunpack.c.l.b16 %v1393
      %v1709 = vunpack.c.l.b16 %v1394
      %v1710 = vunpack.c.l.b16 %v1395
      %v1711 = vunpack.c.l.b16 %v1396
      %v1712 = vunpack.c.l.b16 %v1397
      %v1713 = vunpack.c.l.b16 %v1398
      %v1714 = vunpack.c.l.b16 %v1399
      %v1715 = vunpack.c.l.b16 %v1400
      %v1716 = vunpack.c.l.b16 %v1401
      %v1717 = vunpack.c.l.b16 %v1402
      %v1718 = vunpack.c.l.b16 %v1403
      %v1719 = vunpack.c.l.b16 %v1404
      %v1720 = vunpack.c.l.b16 %v1405
      %v1721 = vunpack.c.l.b16 %v1406
      %v1722 = vunpack.c.l.b16 %v1407
      %v1723 = vunpack.c.l.b16 %v1408
      %v1724 = vunpack.c.l.b16 %v1409
      %v1725 = vunpack.c.l.b16 %v1410
      %v1726 = vunpack.c.l.b16 %v1411
      %v1727 = vpack.c.b16 %v1680, %v1679
      %v1728 = vpack.c.b16 %v1682, %v1681
      %v1729 = vpack.c.b16 %v1684, %v1683
      %v1730 = vpack.c.b16 %v1686, %v1685
      %v1731 = vpack.c.b16 %v1688, %v1687
      %v1732 = vpack.c.b16 %v1690, %v1689
      %v1733 = vpack.c.b16 %v1692, %v1691
      %v1734 = vpack.c.b16 %v1694, %v1693
      %v1735 = vpack.c.b16 %v1696, %v1695
      %v1736 = vpack.c.b16 %v1698, %v1697
      %v1737 = vpack.c.b16 %v1700, %v1699
      %v1738 = vpack.c.b16 %v1702, %v1701
      %v1739 = vpack.c.b16 %v1704, %v1703
      %v1740 = vpack.c.b16 %v1706, %v1705
      %v1741 = vpack.c.b16 %v1708, %v1707
      %v1742 = vpack.c.b16 %v1710, %v1709
      %v1743 = vpack.c.b16 %v1712, %v1711
      %v1744 = vpack.c.b16 %v1714, %v1713
      %v1745 = vpack.c.b16 %v1716, %v1715
      %v1746 = vpack.c.b16 %v1718, %v1717
      %v1747 = vpack.c.b16 %v1720, %v1719
      %v1748 = vpack.c.b16 %v1722, %v1721
      %v1749 = vpack.c.b16 %v1724, %v1723
      %v1750 = vpack.c.b16 %v1726, %v1725
      %1775 = vmatpush.bf16.msra.mxu0 %v1734
      %1776 = vmatpush.bf16.msra.mxu0 %v1733
      %1777 = vmatpush.bf16.msra.mxu0 %v1732
      %1778 = vmatpush.bf16.msra.mxu0 %v1731
      %1779 = vmatpush.bf16.msra.mxu0 %v1730
      %1780 = vmatpush.bf16.msra.mxu0 %v1729
      %1781 = vmatpush.bf16.msra.mxu0 %v1728
      %1782 = vmatpush.bf16.msra.mxu0 %v1727
      %1783 = vmatmul.bf16.gmra.mxu0 %v1297
      %v1784 = vpop.f32.mrf.mxu0
      %v1785 = vadd.f32 0.0, %v1784
      %v1786 = vpop.f32.mrf.mxu0
      %v1787 = vadd.f32 0.0, %v1786
      %1788 = vmatmul.bf16.gmra.mxu0 %v1298
      %v1789 = vpop.f32.mrf.mxu0
      %v1790 = vadd.f32 0.0, %v1789
      %v1791 = vpop.f32.mrf.mxu0
      %v1792 = vadd.f32 0.0, %v1791
      %1793 = vmatmul.bf16.gmra.mxu0 %v1299
      %v1794 = vpop.f32.mrf.mxu0
      %v1795 = vadd.f32 0.0, %v1794
      %v1796 = vpop.f32.mrf.mxu0
      %v1797 = vadd.f32 0.0, %v1796
      %1798 = vmatmul.bf16.gmra.mxu0 %v1300
      %v1799 = vpop.f32.mrf.mxu0
      %v1800 = vadd.f32 0.0, %v1799
      %v1801 = vpop.f32.mrf.mxu0
      %v1802 = vadd.f32 0.0, %v1801
      %1803 = vmatmul.bf16.gmra.mxu0 %v1301
      %v1804 = vpop.f32.mrf.mxu0
      %v1805 = vadd.f32 0.0, %v1804
      %v1806 = vpop.f32.mrf.mxu0
      %v1807 = vadd.f32 0.0, %v1806
      %1808 = vmatmul.bf16.gmra.mxu0 %v1302
      %v1809 = vpop.f32.mrf.mxu0
      %v1810 = vadd.f32 0.0, %v1809
      %v1811 = vpop.f32.mrf.mxu0
      %v1812 = vadd.f32 0.0, %v1811
      %1813 = vmatmul.bf16.gmra.mxu0 %v1303
      %v1814 = vpop.f32.mrf.mxu0
      %v1815 = vadd.f32 0.0, %v1814
      %v1816 = vpop.f32.mrf.mxu0
      %v1817 = vadd.f32 0.0, %v1816
      %1818 = vmatmul.bf16.gmra.mxu0 %v1304
      %v1819 = vpop.f32.mrf.mxu0
      %v1820 = vadd.f32 0.0, %v1819
      %v1821 = vpop.f32.mrf.mxu0
      %v1822 = vadd.f32 0.0, %v1821
      %1823 = vdwg.mxu0
      %1824 = vmatpush.bf16.msra.mxu0 %v1742
      %1825 = vmatpush.bf16.msra.mxu0 %v1741
      %1826 = vmatpush.bf16.msra.mxu0 %v1740
      %1827 = vmatpush.bf16.msra.mxu0 %v1739
      %1828 = vmatpush.bf16.msra.mxu0 %v1738
      %1829 = vmatpush.bf16.msra.mxu0 %v1737
      %1830 = vmatpush.bf16.msra.mxu0 %v1736
      %1831 = vmatpush.bf16.msra.mxu0 %v1735
      %1832 = vmatmul.bf16.gmra.mxu0 %v1483
      %v1833 = vpop.f32.mrf.mxu0
      %v1834 = vadd.f32 %v1785, %v1833
      %v1835 = vpop.f32.mrf.mxu0
      %v1836 = vadd.f32 %v1787, %v1835
      %1837 = vmatmul.bf16.gmra.mxu0 %v1495
      %v1838 = vpop.f32.mrf.mxu0
      %v1839 = vadd.f32 %v1790, %v1838
      %v1840 = vpop.f32.mrf.mxu0
      %v1841 = vadd.f32 %v1792, %v1840
      %1842 = vmatmul.bf16.gmra.mxu0 %v1507
      %v1843 = vpop.f32.mrf.mxu0
      %v1844 = vadd.f32 %v1795, %v1843
      %v1845 = vpop.f32.mrf.mxu0
      %v1846 = vadd.f32 %v1797, %v1845
      %1847 = vmatmul.bf16.gmra.mxu0 %v1519
      %v1848 = vpop.f32.mrf.mxu0
      %v1849 = vadd.f32 %v1800, %v1848
      %v1850 = vpop.f32.mrf.mxu0
      %v1851 = vadd.f32 %v1802, %v1850
      %1852 = vmatmul.bf16.gmra.mxu0 %v1531
      %v1853 = vpop.f32.mrf.mxu0
      %v1854 = vadd.f32 %v1805, %v1853
      %v1855 = vpop.f32.mrf.mxu0
      %v1856 = vadd.f32 %v1807, %v1855
      %1857 = vmatmul.bf16.gmra.mxu0 %v1543
      %v1858 = vpop.f32.mrf.mxu0
      %v1859 = vadd.f32 %v1810, %v1858
      %v1860 = vpop.f32.mrf.mxu0
      %v1861 = vadd.f32 %v1812, %v1860
      %1862 = vmatmul.bf16.gmra.mxu0 %v1555
      %v1863 = vpop.f32.mrf.mxu0
      %v1864 = vadd.f32 %v1815, %v1863
      %v1865 = vpop.f32.mrf.mxu0
      %v1866 = vadd.f32 %v1817, %v1865
      %1867 = vmatmul.bf16.gmra.mxu0 %v1623
      %v1868 = vpop.f32.mrf.mxu0
      %v1869 = vadd.f32 %v1820, %v1868
      %v1870 = vpop.f32.mrf.mxu0
      %v1871 = vadd.f32 %v1822, %v1870
      %1872 = vdwg.mxu0
      %1873 = vmatpush.bf16.msra.mxu0 %v1750
      %1874 = vmatpush.bf16.msra.mxu0 %v1749
      %1875 = vmatpush.bf16.msra.mxu0 %v1748
      %1876 = vmatpush.bf16.msra.mxu0 %v1747
      %1877 = vmatpush.bf16.msra.mxu0 %v1746
      %1878 = vmatpush.bf16.msra.mxu0 %v1745
      %1879 = vmatpush.bf16.msra.mxu0 %v1744
      %1880 = vmatpush.bf16.msra.mxu0 %v1743
      %1881 = vmatmul.bf16.gmra.mxu0 %v1585
      %v1882 = vpop.f32.mrf.mxu0
      %v1883 = vadd.f32 %v1834, %v1882
      %v1884 = vpop.f32.mrf.mxu0
      %v1885 = vadd.f32 %v1836, %v1884
      %1886 = vmatmul.bf16.gmra.mxu0 %v1588
      %v1887 = vpop.f32.mrf.mxu0
      %v1888 = vadd.f32 %v1839, %v1887
      %v1889 = vpop.f32.mrf.mxu0
      %v1890 = vadd.f32 %v1841, %v1889
      %1891 = vmatmul.bf16.gmra.mxu0 %v1591
      %v1892 = vpop.f32.mrf.mxu0
      %v1893 = vadd.f32 %v1844, %v1892
      %v1894 = vpop.f32.mrf.mxu0
      %v1895 = vadd.f32 %v1846, %v1894
      %1896 = vmatmul.bf16.gmra.mxu0 %v1594
      %v1897 = vpop.f32.mrf.mxu0
      %v1898 = vadd.f32 %v1849, %v1897
      %v1899 = vpop.f32.mrf.mxu0
      %v1900 = vadd.f32 %v1851, %v1899
      %1901 = vmatmul.bf16.gmra.mxu0 %v1597
      %v1902 = vpop.f32.mrf.mxu0
      %v1903 = vadd.f32 %v1854, %v1902
      %v1904 = vpop.f32.mrf.mxu0
      %v1905 = vadd.f32 %v1856, %v1904
      %1906 = vmatmul.bf16.gmra.mxu0 %v1600
      %v1907 = vpop.f32.mrf.mxu0
      %v1908 = vadd.f32 %v1859, %v1907
      %v1909 = vpop.f32.mrf.mxu0
      %v1910 = vadd.f32 %v1861, %v1909
      %1911 = vmatmul.bf16.gmra.mxu0 %v1603
      %v1912 = vpop.f32.mrf.mxu0
      %v1913 = vadd.f32 %v1864, %v1912
      %v1914 = vpop.f32.mrf.mxu0
      %v1915 = vadd.f32 %v1866, %v1914
      %1916 = vmatmul.bf16.gmra.mxu0 %v1629
      %v1917 = vpop.f32.mrf.mxu0
      %v1918 = vadd.f32 %v1869, %v1917
      %v1919 = vpop.f32.mrf.mxu0
      %v1920 = vadd.f32 %v1871, %v1919
      %1921 = vdwg.mxu0
      %v1970 = vunpack.c.l.b16 %v1316
      %v1971 = vunpack.c.l.b16 %v1317
      %v1972 = vunpack.c.l.b16 %v1318
      %v1973 = vunpack.c.l.b16 %v1319
      %v1974 = vunpack.c.l.b16 %v1320
      %v1975 = vunpack.c.l.b16 %v1321
      %v1976 = vunpack.c.l.b16 %v1322
      %v1977 = vunpack.c.l.b16 %v1323
      %v1978 = vunpack.c.l.b16 %v1324
      %v1979 = vunpack.c.l.b16 %v1325
      %v1980 = vunpack.c.l.b16 %v1326
      %v1981 = vunpack.c.l.b16 %v1327
      %v1982 = vunpack.c.l.b16 %v1328
      %v1983 = vunpack.c.l.b16 %v1329
      %v1984 = vunpack.c.l.b16 %v1330
      %v1985 = vunpack.c.l.b16 %v1331
      %v1986 = vunpack.c.l.b16 %v1332
      %v1987 = vunpack.c.l.b16 %v1333
      %v1988 = vunpack.c.l.b16 %v1334
      %v1989 = vunpack.c.l.b16 %v1335
      %v1990 = vunpack.c.l.b16 %v1336
      %v1991 = vunpack.c.l.b16 %v1337
      %v1992 = vunpack.c.l.b16 %v1338
      %v1993 = vunpack.c.l.b16 %v1339
      %v1994 = vunpack.c.l.b16 %v1340
      %v1995 = vunpack.c.l.b16 %v1341
      %v1996 = vunpack.c.l.b16 %v1342
      %v1997 = vunpack.c.l.b16 %v1343
      %v1998 = vunpack.c.l.b16 %v1344
      %v1999 = vunpack.c.l.b16 %v1345
      %v2000 = vunpack.c.l.b16 %v1346
      %v2001 = vunpack.c.l.b16 %v1347
      %v2002 = vunpack.c.l.b16 %v1348
      %v2003 = vunpack.c.l.b16 %v1349
      %v2004 = vunpack.c.l.b16 %v1350
      %v2005 = vunpack.c.l.b16 %v1351
      %v2006 = vunpack.c.l.b16 %v1352
      %v2007 = vunpack.c.l.b16 %v1353
      %v2008 = vunpack.c.l.b16 %v1354
      %v2009 = vunpack.c.l.b16 %v1355
      %v2010 = vunpack.c.l.b16 %v1356
      %v2011 = vunpack.c.l.b16 %v1357
      %v2012 = vunpack.c.l.b16 %v1358
      %v2013 = vunpack.c.l.b16 %v1359
      %v2014 = vunpack.c.l.b16 %v1360
      %v2015 = vunpack.c.l.b16 %v1361
      %v2016 = vunpack.c.l.b16 %v1362
      %v2017 = vunpack.c.l.b16 %v1363
      %v2018 = vpack.c.b16 %v1971, %v1970
      %v2019 = vpack.c.b16 %v1973, %v1972
      %v2020 = vpack.c.b16 %v1975, %v1974
      %v2021 = vpack.c.b16 %v1977, %v1976
      %v2022 = vpack.c.b16 %v1979, %v1978
      %v2023 = vpack.c.b16 %v1981, %v1980
      %v2024 = vpack.c.b16 %v1983, %v1982
      %v2025 = vpack.c.b16 %v1985, %v1984
      %v2026 = vpack.c.b16 %v1987, %v1986
      %v2027 = vpack.c.b16 %v1989, %v1988
      %v2028 = vpack.c.b16 %v1991, %v1990
      %v2029 = vpack.c.b16 %v1993, %v1992
      %v2030 = vpack.c.b16 %v1995, %v1994
      %v2031 = vpack.c.b16 %v1997, %v1996
      %v2032 = vpack.c.b16 %v1999, %v1998
      %v2033 = vpack.c.b16 %v2001, %v2000
      %v2034 = vpack.c.b16 %v2003, %v2002
      %v2035 = vpack.c.b16 %v2005, %v2004
      %v2036 = vpack.c.b16 %v2007, %v2006
      %v2037 = vpack.c.b16 %v2009, %v2008
      %v2038 = vpack.c.b16 %v2011, %v2010
      %v2039 = vpack.c.b16 %v2013, %v2012
      %v2040 = vpack.c.b16 %v2015, %v2014
      %v2041 = vpack.c.b16 %v2017, %v2016
      %2066 = vmatpush.bf16.msra.mxu0 %v2025
      %2067 = vmatpush.bf16.msra.mxu0 %v2024
      %2068 = vmatpush.bf16.msra.mxu0 %v2023
      %2069 = vmatpush.bf16.msra.mxu0 %v2022
      %2070 = vmatpush.bf16.msra.mxu0 %v2021
      %2071 = vmatpush.bf16.msra.mxu0 %v2020
      %2072 = vmatpush.bf16.msra.mxu0 %v2019
      %2073 = vmatpush.bf16.msra.mxu0 %v2018
      %2074 = vmatmul.bf16.gmra.mxu0 %v1296
      %v2075 = vpop.f32.mrf.mxu0
      %v2076 = vadd.f32 %v1883, %v2075
      %v2077 = vpop.f32.mrf.mxu0
      %v2078 = vadd.f32 %v1885, %v2077
      %2079 = vmatmul.bf16.gmra.mxu0 %v1297
      %v2080 = vpop.f32.mrf.mxu0
      %v2081 = vadd.f32 %v1888, %v2080
      %v2082 = vpop.f32.mrf.mxu0
      %v2083 = vadd.f32 %v1890, %v2082
      %2084 = vmatmul.bf16.gmra.mxu0 %v1298
      %v2085 = vpop.f32.mrf.mxu0
      %v2086 = vadd.f32 %v1893, %v2085
      %v2087 = vpop.f32.mrf.mxu0
      %v2088 = vadd.f32 %v1895, %v2087
      %2089 = vmatmul.bf16.gmra.mxu0 %v1299
      %v2090 = vpop.f32.mrf.mxu0
      %v2091 = vadd.f32 %v1898, %v2090
      %v2092 = vpop.f32.mrf.mxu0
      %v2093 = vadd.f32 %v1900, %v2092
      %2094 = vmatmul.bf16.gmra.mxu0 %v1300
      %v2095 = vpop.f32.mrf.mxu0
      %v2096 = vadd.f32 %v1903, %v2095
      %v2097 = vpop.f32.mrf.mxu0
      %v2098 = vadd.f32 %v1905, %v2097
      %2099 = vmatmul.bf16.gmra.mxu0 %v1301
      %v2100 = vpop.f32.mrf.mxu0
      %v2101 = vadd.f32 %v1908, %v2100
      %v2102 = vpop.f32.mrf.mxu0
      %v2103 = vadd.f32 %v1910, %v2102
      %2104 = vmatmul.bf16.gmra.mxu0 %v1302
      %v2105 = vpop.f32.mrf.mxu0
      %v2106 = vadd.f32 %v1913, %v2105
      %v2107 = vpop.f32.mrf.mxu0
      %v2108 = vadd.f32 %v1915, %v2107
      %2109 = vmatmul.bf16.gmra.mxu0 %v1303
      %v2110 = vpop.f32.mrf.mxu0
      %v2111 = vadd.f32 %v1918, %v2110
      %v2112 = vpop.f32.mrf.mxu0
      %v2113 = vadd.f32 %v1920, %v2112
      %2114 = vdwg.mxu0
      %2115 = vmatpush.bf16.msra.mxu0 %v2033
      %2116 = vmatpush.bf16.msra.mxu0 %v2032
      %2117 = vmatpush.bf16.msra.mxu0 %v2031
      %2118 = vmatpush.bf16.msra.mxu0 %v2030
      %2119 = vmatpush.bf16.msra.mxu0 %v2029
      %2120 = vmatpush.bf16.msra.mxu0 %v2028
      %2121 = vmatpush.bf16.msra.mxu0 %v2027
      %2122 = vmatpush.bf16.msra.mxu0 %v2026
      %2123 = vmatmul.bf16.gmra.mxu0 %v1471
      %v2124 = vpop.f32.mrf.mxu0
      %v2125 = vadd.f32 %v2076, %v2124
      %v2126 = vpop.f32.mrf.mxu0
      %v2127 = vadd.f32 %v2078, %v2126
      %2128 = vmatmul.bf16.gmra.mxu0 %v1483
      %v2129 = vpop.f32.mrf.mxu0
      %v2130 = vadd.f32 %v2081, %v2129
      %v2131 = vpop.f32.mrf.mxu0
      %v2132 = vadd.f32 %v2083, %v2131
      %2133 = vmatmul.bf16.gmra.mxu0 %v1495
      %v2134 = vpop.f32.mrf.mxu0
      %v2135 = vadd.f32 %v2086, %v2134
      %v2136 = vpop.f32.mrf.mxu0
      %v2137 = vadd.f32 %v2088, %v2136
      %2138 = vmatmul.bf16.gmra.mxu0 %v1507
      %v2139 = vpop.f32.mrf.mxu0
      %v2140 = vadd.f32 %v2091, %v2139
      %v2141 = vpop.f32.mrf.mxu0
      %v2142 = vadd.f32 %v2093, %v2141
      %2143 = vmatmul.bf16.gmra.mxu0 %v1519
      %v2144 = vpop.f32.mrf.mxu0
      %v2145 = vadd.f32 %v2096, %v2144
      %v2146 = vpop.f32.mrf.mxu0
      %v2147 = vadd.f32 %v2098, %v2146
      %2148 = vmatmul.bf16.gmra.mxu0 %v1531
      %v2149 = vpop.f32.mrf.mxu0
      %v2150 = vadd.f32 %v2101, %v2149
      %v2151 = vpop.f32.mrf.mxu0
      %v2152 = vadd.f32 %v2103, %v2151
      %2153 = vmatmul.bf16.gmra.mxu0 %v1543
      %v2154 = vpop.f32.mrf.mxu0
      %v2155 = vadd.f32 %v2106, %v2154
      %v2156 = vpop.f32.mrf.mxu0
      %v2157 = vadd.f32 %v2108, %v2156
      %2158 = vmatmul.bf16.gmra.mxu0 %v1555
      %v2159 = vpop.f32.mrf.mxu0
      %v2160 = vadd.f32 %v2111, %v2159
      %v2161 = vpop.f32.mrf.mxu0
      %v2162 = vadd.f32 %v2113, %v2161
      %2163 = vdwg.mxu0
      %2164 = vmatpush.bf16.msra.mxu0 %v2041
      %2165 = vmatpush.bf16.msra.mxu0 %v2040
      %2166 = vmatpush.bf16.msra.mxu0 %v2039
      %2167 = vmatpush.bf16.msra.mxu0 %v2038
      %2168 = vmatpush.bf16.msra.mxu0 %v2037
      %2169 = vmatpush.bf16.msra.mxu0 %v2036
      %2170 = vmatpush.bf16.msra.mxu0 %v2035
      %2171 = vmatpush.bf16.msra.mxu0 %v2034
      %2172 = vmatmul.bf16.gmra.mxu0 %v1582
      %v2173 = vpop.f32.mrf.mxu0
      %v2174 = vadd.f32 %v2125, %v2173
      %v2175 = vpop.f32.mrf.mxu0
      %v2176 = vadd.f32 %v2127, %v2175
      %2177 = vmatmul.bf16.gmra.mxu0 %v1585
      %v2178 = vpop.f32.mrf.mxu0
      %v2179 = vadd.f32 %v2130, %v2178
      %v2180 = vpop.f32.mrf.mxu0
      %v2181 = vadd.f32 %v2132, %v2180
      %2182 = vmatmul.bf16.gmra.mxu0 %v1588
      %v2183 = vpop.f32.mrf.mxu0
      %v2184 = vadd.f32 %v2135, %v2183
      %v2185 = vpop.f32.mrf.mxu0
      %v2186 = vadd.f32 %v2137, %v2185
      %2187 = vmatmul.bf16.gmra.mxu0 %v1591
      %v2188 = vpop.f32.mrf.mxu0
      %v2189 = vadd.f32 %v2140, %v2188
      %v2190 = vpop.f32.mrf.mxu0
      %v2191 = vadd.f32 %v2142, %v2190
      %2192 = vmatmul.bf16.gmra.mxu0 %v1594
      %v2193 = vpop.f32.mrf.mxu0
      %v2194 = vadd.f32 %v2145, %v2193
      %v2195 = vpop.f32.mrf.mxu0
      %v2196 = vadd.f32 %v2147, %v2195
      %2197 = vmatmul.bf16.gmra.mxu0 %v1597
      %v2198 = vpop.f32.mrf.mxu0
      %v2199 = vadd.f32 %v2150, %v2198
      %v2200 = vpop.f32.mrf.mxu0
      %v2201 = vadd.f32 %v2152, %v2200
      %2202 = vmatmul.bf16.gmra.mxu0 %v1600
      %v2203 = vpop.f32.mrf.mxu0
      %v2204 = vadd.f32 %v2155, %v2203
      %v2205 = vpop.f32.mrf.mxu0
      %v2206 = vadd.f32 %v2157, %v2205
      %2207 = vmatmul.bf16.gmra.mxu0 %v1603
      %v2208 = vpop.f32.mrf.mxu0
      %v2209 = vadd.f32 %v2160, %v2208
      %v2210 = vpop.f32.mrf.mxu0
      %v2211 = vadd.f32 %v2162, %v2210
      %2212 = vdwg.mxu0
      %v2214 = vshrl.u32 %v1305, 16
      %v2216 = vshll.u32 %v1305, 16
      %v2218 = vrot.slane %v2216, 1
      %v2219 = vor.u32 %v2214, %v2218
      %v2221 = vshll.u32 %v1315, 16
      %v2223 = vrot.slane %v2221, 1
      %v2224 = vsel %vm490, %v2219, %v2223
      %v2228 = vrot.slane %v1305, 1
      %v2229 = vrot.slane %v1315, 1
      %v2230 = vsel %vm631, %v2228, %v2229
      %v2280 = vunpack.c.l.b16 %v1412
      %v2281 = vunpack.c.l.b16 %v1413
      %v2282 = vunpack.c.l.b16 %v1414
      %v2283 = vunpack.c.l.b16 %v1415
      %v2284 = vunpack.c.l.b16 %v1416
      %v2285 = vunpack.c.l.b16 %v1417
      %v2286 = vunpack.c.l.b16 %v1418
      %v2287 = vunpack.c.l.b16 %v1419
      %v2288 = vunpack.c.l.b16 %v1420
      %v2289 = vunpack.c.l.b16 %v1421
      %v2290 = vunpack.c.l.b16 %v1422
      %v2291 = vunpack.c.l.b16 %v1423
      %v2292 = vunpack.c.l.b16 %v1424
      %v2293 = vunpack.c.l.b16 %v1425
      %v2294 = vunpack.c.l.b16 %v1426
      %v2295 = vunpack.c.l.b16 %v1427
      %v2296 = vunpack.c.l.b16 %v1428
      %v2297 = vunpack.c.l.b16 %v1429
      %v2298 = vunpack.c.l.b16 %v1430
      %v2299 = vunpack.c.l.b16 %v1431
      %v2300 = vunpack.c.l.b16 %v1432
      %v2301 = vunpack.c.l.b16 %v1433
      %v2302 = vunpack.c.l.b16 %v1434
      %v2303 = vunpack.c.l.b16 %v1435
      %v2304 = vunpack.c.l.b16 %v1436
      %v2305 = vunpack.c.l.b16 %v1437
      %v2306 = vunpack.c.l.b16 %v1438
      %v2307 = vunpack.c.l.b16 %v1439
      %v2308 = vunpack.c.l.b16 %v1440
      %v2309 = vunpack.c.l.b16 %v1441
      %v2310 = vunpack.c.l.b16 %v1442
      %v2311 = vunpack.c.l.b16 %v1443
      %v2312 = vunpack.c.l.b16 %v1444
      %v2313 = vunpack.c.l.b16 %v1445
      %v2314 = vunpack.c.l.b16 %v1446
      %v2315 = vunpack.c.l.b16 %v1447
      %v2316 = vunpack.c.l.b16 %v1448
      %v2317 = vunpack.c.l.b16 %v1449
      %v2318 = vunpack.c.l.b16 %v1450
      %v2319 = vunpack.c.l.b16 %v1451
      %v2320 = vunpack.c.l.b16 %v1452
      %v2321 = vunpack.c.l.b16 %v1453
      %v2322 = vunpack.c.l.b16 %v1454
      %v2323 = vunpack.c.l.b16 %v1455
      %v2324 = vunpack.c.l.b16 %v1456
      %v2325 = vunpack.c.l.b16 %v1457
      %v2326 = vunpack.c.l.b16 %v1458
      %v2327 = vunpack.c.l.b16 %v1459
      %v2328 = vpack.c.b16 %v2281, %v2280
      %v2329 = vpack.c.b16 %v2283, %v2282
      %v2330 = vpack.c.b16 %v2285, %v2284
      %v2331 = vpack.c.b16 %v2287, %v2286
      %v2332 = vpack.c.b16 %v2289, %v2288
      %v2333 = vpack.c.b16 %v2291, %v2290
      %v2334 = vpack.c.b16 %v2293, %v2292
      %v2335 = vpack.c.b16 %v2295, %v2294
      %v2336 = vpack.c.b16 %v2297, %v2296
      %v2337 = vpack.c.b16 %v2299, %v2298
      %v2338 = vpack.c.b16 %v2301, %v2300
      %v2339 = vpack.c.b16 %v2303, %v2302
      %v2340 = vpack.c.b16 %v2305, %v2304
      %v2341 = vpack.c.b16 %v2307, %v2306
      %v2342 = vpack.c.b16 %v2309, %v2308
      %v2343 = vpack.c.b16 %v2311, %v2310
      %v2344 = vpack.c.b16 %v2313, %v2312
      %v2345 = vpack.c.b16 %v2315, %v2314
      %v2346 = vpack.c.b16 %v2317, %v2316
      %v2347 = vpack.c.b16 %v2319, %v2318
      %v2348 = vpack.c.b16 %v2321, %v2320
      %v2349 = vpack.c.b16 %v2323, %v2322
      %v2350 = vpack.c.b16 %v2325, %v2324
      %v2351 = vpack.c.b16 %v2327, %v2326
      %2376 = vmatpush.bf16.msra.mxu0 %v2335
      %2377 = vmatpush.bf16.msra.mxu0 %v2334
      %2378 = vmatpush.bf16.msra.mxu0 %v2333
      %2379 = vmatpush.bf16.msra.mxu0 %v2332
      %2380 = vmatpush.bf16.msra.mxu0 %v2331
      %2381 = vmatpush.bf16.msra.mxu0 %v2330
      %2382 = vmatpush.bf16.msra.mxu0 %v2329
      %2383 = vmatpush.bf16.msra.mxu0 %v2328
      %2384 = vmatmul.bf16.gmra.mxu0 %v1298
      %v2385 = vpop.f32.mrf.mxu0
      %v2386 = vadd.f32 0.0, %v2385
      %v2387 = vpop.f32.mrf.mxu0
      %v2388 = vadd.f32 0.0, %v2387
      %2389 = vmatmul.bf16.gmra.mxu0 %v1299
      %v2390 = vpop.f32.mrf.mxu0
      %v2391 = vadd.f32 0.0, %v2390
      %v2392 = vpop.f32.mrf.mxu0
      %v2393 = vadd.f32 0.0, %v2392
      %2394 = vmatmul.bf16.gmra.mxu0 %v1300
      %v2395 = vpop.f32.mrf.mxu0
      %v2396 = vadd.f32 0.0, %v2395
      %v2397 = vpop.f32.mrf.mxu0
      %v2398 = vadd.f32 0.0, %v2397
      %2399 = vmatmul.bf16.gmra.mxu0 %v1301
      %v2400 = vpop.f32.mrf.mxu0
      %v2401 = vadd.f32 0.0, %v2400
      %v2402 = vpop.f32.mrf.mxu0
      %v2403 = vadd.f32 0.0, %v2402
      %2404 = vmatmul.bf16.gmra.mxu0 %v1302
      %v2405 = vpop.f32.mrf.mxu0
      %v2406 = vadd.f32 0.0, %v2405
      %v2407 = vpop.f32.mrf.mxu0
      %v2408 = vadd.f32 0.0, %v2407
      %2409 = vmatmul.bf16.gmra.mxu0 %v1303
      %v2410 = vpop.f32.mrf.mxu0
      %v2411 = vadd.f32 0.0, %v2410
      %v2412 = vpop.f32.mrf.mxu0
      %v2413 = vadd.f32 0.0, %v2412
      %2414 = vmatmul.bf16.gmra.mxu0 %v1304
      %v2415 = vpop.f32.mrf.mxu0
      %v2416 = vadd.f32 0.0, %v2415
      %v2417 = vpop.f32.mrf.mxu0
      %v2418 = vadd.f32 0.0, %v2417
      %2419 = vmatmul.bf16.gmra.mxu0 %v1305
      %v2420 = vpop.f32.mrf.mxu0
      %v2421 = vadd.f32 0.0, %v2420
      %v2422 = vpop.f32.mrf.mxu0
      %v2423 = vadd.f32 0.0, %v2422
      %2424 = vdwg.mxu0
      %2425 = vmatpush.bf16.msra.mxu0 %v2343
      %2426 = vmatpush.bf16.msra.mxu0 %v2342
      %2427 = vmatpush.bf16.msra.mxu0 %v2341
      %2428 = vmatpush.bf16.msra.mxu0 %v2340
      %2429 = vmatpush.bf16.msra.mxu0 %v2339
      %2430 = vmatpush.bf16.msra.mxu0 %v2338
      %2431 = vmatpush.bf16.msra.mxu0 %v2337
      %2432 = vmatpush.bf16.msra.mxu0 %v2336
      %2433 = vmatmul.bf16.gmra.mxu0 %v1495
      %v2434 = vpop.f32.mrf.mxu0
      %v2435 = vadd.f32 %v2386, %v2434
      %v2436 = vpop.f32.mrf.mxu0
      %v2437 = vadd.f32 %v2388, %v2436
      %2438 = vmatmul.bf16.gmra.mxu0 %v1507
      %v2439 = vpop.f32.mrf.mxu0
      %v2440 = vadd.f32 %v2391, %v2439
      %v2441 = vpop.f32.mrf.mxu0
      %v2442 = vadd.f32 %v2393, %v2441
      %2443 = vmatmul.bf16.gmra.mxu0 %v1519
      %v2444 = vpop.f32.mrf.mxu0
      %v2445 = vadd.f32 %v2396, %v2444
      %v2446 = vpop.f32.mrf.mxu0
      %v2447 = vadd.f32 %v2398, %v2446
      %2448 = vmatmul.bf16.gmra.mxu0 %v1531
      %v2449 = vpop.f32.mrf.mxu0
      %v2450 = vadd.f32 %v2401, %v2449
      %v2451 = vpop.f32.mrf.mxu0
      %v2452 = vadd.f32 %v2403, %v2451
      %2453 = vmatmul.bf16.gmra.mxu0 %v1543
      %v2454 = vpop.f32.mrf.mxu0
      %v2455 = vadd.f32 %v2406, %v2454
      %v2456 = vpop.f32.mrf.mxu0
      %v2457 = vadd.f32 %v2408, %v2456
      %2458 = vmatmul.bf16.gmra.mxu0 %v1555
      %v2459 = vpop.f32.mrf.mxu0
      %v2460 = vadd.f32 %v2411, %v2459
      %v2461 = vpop.f32.mrf.mxu0
      %v2462 = vadd.f32 %v2413, %v2461
      %2463 = vmatmul.bf16.gmra.mxu0 %v1623
      %v2464 = vpop.f32.mrf.mxu0
      %v2465 = vadd.f32 %v2416, %v2464
      %v2466 = vpop.f32.mrf.mxu0
      %v2467 = vadd.f32 %v2418, %v2466
      %2468 = vmatmul.bf16.gmra.mxu0 %v2224
      %v2469 = vpop.f32.mrf.mxu0
      %v2470 = vadd.f32 %v2421, %v2469
      %v2471 = vpop.f32.mrf.mxu0
      %v2472 = vadd.f32 %v2423, %v2471
      %2473 = vdwg.mxu0
      %2474 = vmatpush.bf16.msra.mxu0 %v2351
      %2475 = vmatpush.bf16.msra.mxu0 %v2350
      %2476 = vmatpush.bf16.msra.mxu0 %v2349
      %2477 = vmatpush.bf16.msra.mxu0 %v2348
      %2478 = vmatpush.bf16.msra.mxu0 %v2347
      %2479 = vmatpush.bf16.msra.mxu0 %v2346
      %2480 = vmatpush.bf16.msra.mxu0 %v2345
      %2481 = vmatpush.bf16.msra.mxu0 %v2344
      %2482 = vmatmul.bf16.gmra.mxu0 %v1588
      %v2483 = vpop.f32.mrf.mxu0
      %v2484 = vadd.f32 %v2435, %v2483
      %v2485 = vpop.f32.mrf.mxu0
      %v2486 = vadd.f32 %v2437, %v2485
      %2487 = vmatmul.bf16.gmra.mxu0 %v1591
      %v2488 = vpop.f32.mrf.mxu0
      %v2489 = vadd.f32 %v2440, %v2488
      %v2490 = vpop.f32.mrf.mxu0
      %v2491 = vadd.f32 %v2442, %v2490
      %2492 = vmatmul.bf16.gmra.mxu0 %v1594
      %v2493 = vpop.f32.mrf.mxu0
      %v2494 = vadd.f32 %v2445, %v2493
      %v2495 = vpop.f32.mrf.mxu0
      %v2496 = vadd.f32 %v2447, %v2495
      %2497 = vmatmul.bf16.gmra.mxu0 %v1597
      %v2498 = vpop.f32.mrf.mxu0
      %v2499 = vadd.f32 %v2450, %v2498
      %v2500 = vpop.f32.mrf.mxu0
      %v2501 = vadd.f32 %v2452, %v2500
      %2502 = vmatmul.bf16.gmra.mxu0 %v1600
      %v2503 = vpop.f32.mrf.mxu0
      %v2504 = vadd.f32 %v2455, %v2503
      %v2505 = vpop.f32.mrf.mxu0
      %v2506 = vadd.f32 %v2457, %v2505
      %2507 = vmatmul.bf16.gmra.mxu0 %v1603
      %v2508 = vpop.f32.mrf.mxu0
      %v2509 = vadd.f32 %v2460, %v2508
      %v2510 = vpop.f32.mrf.mxu0
      %v2511 = vadd.f32 %v2462, %v2510
      %2512 = vmatmul.bf16.gmra.mxu0 %v1629
      %v2513 = vpop.f32.mrf.mxu0
      %v2514 = vadd.f32 %v2465, %v2513
      %v2515 = vpop.f32.mrf.mxu0
      %v2516 = vadd.f32 %v2467, %v2515
      %2517 = vmatmul.bf16.gmra.mxu0 %v2230
      %v2518 = vpop.f32.mrf.mxu0
      %v2519 = vadd.f32 %v2470, %v2518
      %v2520 = vpop.f32.mrf.mxu0
      %v2521 = vadd.f32 %v2472, %v2520
      %2522 = vdwg.mxu0
      %v2523 = vadd.f32 %v2174, %v2484
      %v2524 = vadd.f32 %v2176, %v2486
      %v2525 = vadd.f32 %v2179, %v2489
      %v2526 = vadd.f32 %v2181, %v2491
      %v2527 = vadd.f32 %v2184, %v2494
      %v2528 = vadd.f32 %v2186, %v2496
      %v2529 = vadd.f32 %v2189, %v2499
      %v2530 = vadd.f32 %v2191, %v2501
      %v2531 = vadd.f32 %v2194, %v2504
      %v2532 = vadd.f32 %v2196, %v2506
      %v2533 = vadd.f32 %v2199, %v2509
      %v2534 = vadd.f32 %v2201, %v2511
      %v2535 = vadd.f32 %v2204, %v2514
      %v2536 = vadd.f32 %v2206, %v2516
      %v2537 = vadd.f32 %v2209, %v2519
      %v2538 = vadd.f32 %v2211, %v2521
      %v2539 = vld [vmem:[%s5] sm:$0x1]
      %v2541 = vperm.slane %v2539, 0
      %v2543 = vmul.f32 %v2523, %v2541
      %v2544 = vmul.f32 %v2524, %v2541
      %v2545 = vmul.f32 %v2525, %v2541
      %v2546 = vmul.f32 %v2526, %v2541
      %v2547 = vmul.f32 %v2527, %v2541
      %v2548 = vmul.f32 %v2528, %v2541
      %v2549 = vmul.f32 %v2529, %v2541
      %v2550 = vmul.f32 %v2530, %v2541
      %v2551 = vmul.f32 %v2531, %v2541
      %v2552 = vmul.f32 %v2532, %v2541
      %v2553 = vmul.f32 %v2533, %v2541
      %v2554 = vmul.f32 %v2534, %v2541
      %v2555 = vmul.f32 %v2535, %v2541
      %v2556 = vmul.f32 %v2536, %v2541
      %v2557 = vmul.f32 %v2537, %v2541
      %v2558 = vmul.f32 %v2538, %v2541
      %v2559 = vld [vmem:[%s6] sm:$0x1]
      %v2561 = vperm.slane %v2559, 0
      %v2563 = vadd.f32 %v2543, %v2561
      %v2564 = vadd.f32 %v2544, %v2561
      %v2565 = vadd.f32 %v2545, %v2561
      %v2566 = vadd.f32 %v2546, %v2561
      %v2567 = vadd.f32 %v2547, %v2561
      %v2568 = vadd.f32 %v2548, %v2561
      %v2569 = vadd.f32 %v2549, %v2561
      %v2570 = vadd.f32 %v2550, %v2561
      %v2571 = vadd.f32 %v2551, %v2561
      %v2572 = vadd.f32 %v2552, %v2561
      %v2573 = vadd.f32 %v2553, %v2561
      %v2574 = vadd.f32 %v2554, %v2561
      %v2575 = vadd.f32 %v2555, %v2561
      %v2576 = vadd.f32 %v2556, %v2561
      %v2577 = vadd.f32 %v2557, %v2561
      %v2578 = vadd.f32 %v2558, %v2561
      %v2579 = vmax.f32 %v2563, 0.0
      %v2580 = vmax.f32 %v2564, 0.0
      %v2581 = vmax.f32 %v2565, 0.0
      %v2582 = vmax.f32 %v2566, 0.0
      %v2583 = vmax.f32 %v2567, 0.0
      %v2584 = vmax.f32 %v2568, 0.0
      %v2585 = vmax.f32 %v2569, 0.0
      %v2586 = vmax.f32 %v2570, 0.0
      %v2587 = vmax.f32 %v2571, 0.0
      %v2588 = vmax.f32 %v2572, 0.0
      %v2589 = vmax.f32 %v2573, 0.0
      %v2590 = vmax.f32 %v2574, 0.0
      %v2591 = vmax.f32 %v2575, 0.0
      %v2592 = vmax.f32 %v2576, 0.0
      %v2593 = vmax.f32 %v2577, 0.0
      %v2594 = vmax.f32 %v2578, 0.0
      %v2611 = vrot.slane %v2579, 2
      %v2612 = vrot.slane %v2579, 4
      %v2613 = vrot.slane %v2579, 6
      %v2614 = vrot.slane %v2580, 2
      %v2615 = vrot.slane %v2580, 4
      %v2616 = vrot.slane %v2580, 6
      %v2617 = vrot.slane %v2581, 2
      %v2618 = vrot.slane %v2581, 4
      %v2619 = vrot.slane %v2581, 6
      %v2620 = vrot.slane %v2582, 2
      %v2621 = vrot.slane %v2582, 4
      %v2622 = vrot.slane %v2582, 6
      %v2623 = vrot.slane %v2583, 2
      %v2624 = vrot.slane %v2583, 4
      %v2625 = vrot.slane %v2583, 6
      %v2626 = vrot.slane %v2584, 2
      %v2627 = vrot.slane %v2584, 4
      %v2628 = vrot.slane %v2584, 6
      %v2629 = vrot.slane %v2585, 2
      %v2630 = vrot.slane %v2585, 4
      %v2631 = vrot.slane %v2585, 6
      %v2632 = vrot.slane %v2586, 2
      %v2633 = vrot.slane %v2586, 4
      %v2634 = vrot.slane %v2586, 6
      %v2635 = vrot.slane %v2587, 2
      %v2636 = vrot.slane %v2587, 4
      %v2637 = vrot.slane %v2587, 6
      %v2638 = vrot.slane %v2588, 2
      %v2639 = vrot.slane %v2588, 4
      %v2640 = vrot.slane %v2588, 6
      %v2641 = vrot.slane %v2589, 2
      %v2642 = vrot.slane %v2589, 4
      %v2643 = vrot.slane %v2589, 6
      %v2644 = vrot.slane %v2590, 2
      %v2645 = vrot.slane %v2590, 4
      %v2646 = vrot.slane %v2590, 6
      %v2647 = vrot.slane %v2591, 2
      %v2648 = vrot.slane %v2591, 4
      %v2649 = vrot.slane %v2591, 6
      %v2650 = vrot.slane %v2592, 2
      %v2651 = vrot.slane %v2592, 4
      %v2652 = vrot.slane %v2592, 6
      %v2653 = vrot.slane %v2593, 2
      %v2654 = vrot.slane %v2593, 4
      %v2655 = vrot.slane %v2593, 6
      %v2656 = vrot.slane %v2594, 2
      %v2657 = vrot.slane %v2594, 4
      %v2658 = vrot.slane %v2594, 6
      %s2707 = smul.u32 %s25, 8
      %v2708 = vlaneseq
      %v2709 = vshrl.u32 %v2708, 7
      %v2710 = vstv %s2707
      %v2711 = vadd.s32 %v2710, 2
      %v2712 = vadd.s32 %v2710, 4
      %v2713 = vadd.s32 %v2710, 6
      %v2714 = vmul.u32 %v2710, 16
      %v2715 = vmul.u32 %v2711, 16
      %v2716 = vmul.u32 %v2712, 16
      %v2717 = vmul.u32 %v2713, 16
      %v2718 = vmul.u32 %v2709, 2
      %v2719 = vadd.s32 %v2714, %v2718
      %v2720 = vadd.s32 %v2715, %v2718
      %v2721 = vadd.s32 %v2716, %v2718
      %v2722 = vadd.s32 %v2717, %v2718
      %v2723 = vrot.slane %v2579, 7
      %v2724 = vrot.slane %v2611, 7
      %v2725 = vrot.slane %v2612, 7
      %v2726 = vrot.slane %v2613, 7
      %v2727 = vrot.slane %v2580, 7
      %v2728 = vrot.slane %v2614, 7
      %v2729 = vrot.slane %v2615, 7
      %v2730 = vrot.slane %v2616, 7
      %v2731 = vrot.slane %v2583, 7
      %v2732 = vrot.slane %v2623, 7
      %v2733 = vrot.slane %v2624, 7
      %v2734 = vrot.slane %v2625, 7
      %v2735 = vrot.slane %v2584, 7
      %v2736 = vrot.slane %v2626, 7
      %v2737 = vrot.slane %v2627, 7
      %v2738 = vrot.slane %v2628, 7
      %v2739 = vrot.slane %v2587, 7
      %v2740 = vrot.slane %v2635, 7
      %v2741 = vrot.slane %v2636, 7
      %v2742 = vrot.slane %v2637, 7
      %v2743 = vrot.slane %v2588, 7
      %v2744 = vrot.slane %v2638, 7
      %v2745 = vrot.slane %v2639, 7
      %v2746 = vrot.slane %v2640, 7
      %v2747 = vrot.slane %v2591, 7
      %v2748 = vrot.slane %v2647, 7
      %v2749 = vrot.slane %v2648, 7
      %v2750 = vrot.slane %v2649, 7
      %v2751 = vrot.slane %v2592, 7
      %v2752 = vrot.slane %v2650, 7
      %v2753 = vrot.slane %v2651, 7
      %v2754 = vrot.slane %v2652, 7
      %vm2787 = vcmp.gt.f32.partialorder %v2579, %v2723
      %vm2788 = vcmp.gt.f32.partialorder %v2611, %v2724
      %vm2789 = vcmp.gt.f32.partialorder %v2612, %v2725
      %vm2790 = vcmp.gt.f32.partialorder %v2613, %v2726
      %vm2791 = vcmp.gt.f32.partialorder %v2580, %v2727
      %vm2792 = vcmp.gt.f32.partialorder %v2614, %v2728
      %vm2793 = vcmp.gt.f32.partialorder %v2615, %v2729
      %vm2794 = vcmp.gt.f32.partialorder %v2616, %v2730
      %vm2795 = vcmp.gt.f32.partialorder %v2583, %v2731
      %vm2796 = vcmp.gt.f32.partialorder %v2623, %v2732
      %vm2797 = vcmp.gt.f32.partialorder %v2624, %v2733
      %vm2798 = vcmp.gt.f32.partialorder %v2625, %v2734
      %vm2799 = vcmp.gt.f32.partialorder %v2584, %v2735
      %vm2800 = vcmp.gt.f32.partialorder %v2626, %v2736
      %vm2801 = vcmp.gt.f32.partialorder %v2627, %v2737
      %vm2802 = vcmp.gt.f32.partialorder %v2628, %v2738
      %vm2803 = vcmp.gt.f32.partialorder %v2587, %v2739
      %vm2804 = vcmp.gt.f32.partialorder %v2635, %v2740
      %vm2805 = vcmp.gt.f32.partialorder %v2636, %v2741
      %vm2806 = vcmp.gt.f32.partialorder %v2637, %v2742
      %vm2807 = vcmp.gt.f32.partialorder %v2588, %v2743
      %vm2808 = vcmp.gt.f32.partialorder %v2638, %v2744
      %vm2809 = vcmp.gt.f32.partialorder %v2639, %v2745
      %vm2810 = vcmp.gt.f32.partialorder %v2640, %v2746
      %vm2811 = vcmp.gt.f32.partialorder %v2591, %v2747
      %vm2812 = vcmp.gt.f32.partialorder %v2647, %v2748
      %vm2813 = vcmp.gt.f32.partialorder %v2648, %v2749
      %vm2814 = vcmp.gt.f32.partialorder %v2649, %v2750
      %vm2815 = vcmp.gt.f32.partialorder %v2592, %v2751
      %vm2816 = vcmp.gt.f32.partialorder %v2650, %v2752
      %vm2817 = vcmp.gt.f32.partialorder %v2651, %v2753
      %vm2818 = vcmp.gt.f32.partialorder %v2652, %v2754
      %v2819 = vsel %vm2787, %v2579, %v2723
      %v2820 = vsel %vm2788, %v2611, %v2724
      %v2821 = vsel %vm2789, %v2612, %v2725
      %v2822 = vsel %vm2790, %v2613, %v2726
      %v2823 = vsel %vm2791, %v2580, %v2727
      %v2824 = vsel %vm2792, %v2614, %v2728
      %v2825 = vsel %vm2793, %v2615, %v2729
      %v2826 = vsel %vm2794, %v2616, %v2730
      %v2827 = vsel %vm2795, %v2583, %v2731
      %v2828 = vsel %vm2796, %v2623, %v2732
      %v2829 = vsel %vm2797, %v2624, %v2733
      %v2830 = vsel %vm2798, %v2625, %v2734
      %v2831 = vsel %vm2799, %v2584, %v2735
      %v2832 = vsel %vm2800, %v2626, %v2736
      %v2833 = vsel %vm2801, %v2627, %v2737
      %v2834 = vsel %vm2802, %v2628, %v2738
      %v2835 = vsel %vm2803, %v2587, %v2739
      %v2836 = vsel %vm2804, %v2635, %v2740
      %v2837 = vsel %vm2805, %v2636, %v2741
      %v2838 = vsel %vm2806, %v2637, %v2742
      %v2839 = vsel %vm2807, %v2588, %v2743
      %v2840 = vsel %vm2808, %v2638, %v2744
      %v2841 = vsel %vm2809, %v2639, %v2745
      %v2842 = vsel %vm2810, %v2640, %v2746
      %v2843 = vsel %vm2811, %v2591, %v2747
      %v2844 = vsel %vm2812, %v2647, %v2748
      %v2845 = vsel %vm2813, %v2648, %v2749
      %v2846 = vsel %vm2814, %v2649, %v2750
      %v2847 = vsel %vm2815, %v2592, %v2751
      %v2848 = vsel %vm2816, %v2650, %v2752
      %v2849 = vsel %vm2817, %v2651, %v2753
      %v2850 = vsel %vm2818, %v2652, %v2754
      %v2851 = vadd.s32 %v2719, 1
      %v2852 = vadd.s32 %v2720, 1
      %v2853 = vadd.s32 %v2721, 1
      %v2854 = vadd.s32 %v2722, 1
      %v2856 = vunpack.c.l.s4 269488144
      %v2857 = vunpack.c.0.s8 %v2856
      %v2858 = vperm.slane %v2851, %v2857
      %v2860 = vunpack.c.l.s4 842150450
      %v2861 = vunpack.c.0.s8 %v2860
      %v2862 = vperm.slane %v2851, %v2861
      %v2864 = vunpack.c.l.s4 1414812756
      %v2865 = vunpack.c.0.s8 %v2864
      %v2866 = vperm.slane %v2851, %v2865
      %v2868 = vunpack.c.l.s4 1987475062
      %v2869 = vunpack.c.0.s8 %v2868
      %v2870 = vperm.slane %v2851, %v2869
      %v2872 = vunpack.c.l.s4 269488144
      %v2873 = vunpack.c.0.s8 %v2872
      %v2874 = vperm.slane %v2852, %v2873
      %v2876 = vunpack.c.l.s4 842150450
      %v2877 = vunpack.c.0.s8 %v2876
      %v2878 = vperm.slane %v2852, %v2877
      %v2880 = vunpack.c.l.s4 1414812756
      %v2881 = vunpack.c.0.s8 %v2880
      %v2882 = vperm.slane %v2852, %v2881
      %v2884 = vunpack.c.l.s4 1987475062
      %v2885 = vunpack.c.0.s8 %v2884
      %v2886 = vperm.slane %v2852, %v2885
      %v2888 = vunpack.c.l.s4 269488144
      %v2889 = vunpack.c.0.s8 %v2888
      %v2890 = vperm.slane %v2853, %v2889
      %v2892 = vunpack.c.l.s4 842150450
      %v2893 = vunpack.c.0.s8 %v2892
      %v2894 = vperm.slane %v2853, %v2893
      %v2896 = vunpack.c.l.s4 1414812756
      %v2897 = vunpack.c.0.s8 %v2896
      %v2898 = vperm.slane %v2853, %v2897
      %v2900 = vunpack.c.l.s4 1987475062
      %v2901 = vunpack.c.0.s8 %v2900
      %v2902 = vperm.slane %v2853, %v2901
      %v2904 = vunpack.c.l.s4 269488144
      %v2905 = vunpack.c.0.s8 %v2904
      %v2906 = vperm.slane %v2854, %v2905
      %v2908 = vunpack.c.l.s4 842150450
      %v2909 = vunpack.c.0.s8 %v2908
      %v2910 = vperm.slane %v2854, %v2909
      %v2912 = vunpack.c.l.s4 1414812756
      %v2913 = vunpack.c.0.s8 %v2912
      %v2914 = vperm.slane %v2854, %v2913
      %v2916 = vunpack.c.l.s4 1987475062
      %v2917 = vunpack.c.0.s8 %v2916
      %v2918 = vperm.slane %v2854, %v2917
      %v2919 = vrot.slane %v2858, 7
      %v2920 = vrot.slane %v2862, 7
      %v2921 = vrot.slane %v2866, 7
      %v2922 = vrot.slane %v2870, 7
      %v2923 = vrot.slane %v2874, 7
      %v2924 = vrot.slane %v2878, 7
      %v2925 = vrot.slane %v2882, 7
      %v2926 = vrot.slane %v2886, 7
      %v2927 = vrot.slane %v2890, 7
      %v2928 = vrot.slane %v2894, 7
      %v2929 = vrot.slane %v2898, 7
      %v2930 = vrot.slane %v2902, 7
      %v2931 = vrot.slane %v2906, 7
      %v2932 = vrot.slane %v2910, 7
      %v2933 = vrot.slane %v2914, 7
      %v2934 = vrot.slane %v2918, 7
      %v2936 = vunpack.c.l.s4 269488144
      %v2937 = vunpack.c.0.s8 %v2936
      %v2938 = vperm.slane %v2719, %v2937
      %v2940 = vunpack.c.l.s4 842150450
      %v2941 = vunpack.c.0.s8 %v2940
      %v2942 = vperm.slane %v2719, %v2941
      %v2944 = vunpack.c.l.s4 1414812756
      %v2945 = vunpack.c.0.s8 %v2944
      %v2946 = vperm.slane %v2719, %v2945
      %v2948 = vunpack.c.l.s4 1987475062
      %v2949 = vunpack.c.0.s8 %v2948
      %v2950 = vperm.slane %v2719, %v2949
      %v2952 = vunpack.c.l.s4 269488144
      %v2953 = vunpack.c.0.s8 %v2952
      %v2954 = vperm.slane %v2720, %v2953
      %v2956 = vunpack.c.l.s4 842150450
      %v2957 = vunpack.c.0.s8 %v2956
      %v2958 = vperm.slane %v2720, %v2957
      %v2960 = vunpack.c.l.s4 1414812756
      %v2961 = vunpack.c.0.s8 %v2960
      %v2962 = vperm.slane %v2720, %v2961
      %v2964 = vunpack.c.l.s4 1987475062
      %v2965 = vunpack.c.0.s8 %v2964
      %v2966 = vperm.slane %v2720, %v2965
      %v2968 = vunpack.c.l.s4 269488144
      %v2969 = vunpack.c.0.s8 %v2968
      %v2970 = vperm.slane %v2721, %v2969
      %v2972 = vunpack.c.l.s4 842150450
      %v2973 = vunpack.c.0.s8 %v2972
      %v2974 = vperm.slane %v2721, %v2973
      %v2976 = vunpack.c.l.s4 1414812756
      %v2977 = vunpack.c.0.s8 %v2976
      %v2978 = vperm.slane %v2721, %v2977
      %v2980 = vunpack.c.l.s4 1987475062
      %v2981 = vunpack.c.0.s8 %v2980
      %v2982 = vperm.slane %v2721, %v2981
      %v2984 = vunpack.c.l.s4 269488144
      %v2985 = vunpack.c.0.s8 %v2984
      %v2986 = vperm.slane %v2722, %v2985
      %v2988 = vunpack.c.l.s4 842150450
      %v2989 = vunpack.c.0.s8 %v2988
      %v2990 = vperm.slane %v2722, %v2989
      %v2992 = vunpack.c.l.s4 1414812756
      %v2993 = vunpack.c.0.s8 %v2992
      %v2994 = vperm.slane %v2722, %v2993
      %v2996 = vunpack.c.l.s4 1987475062
      %v2997 = vunpack.c.0.s8 %v2996
      %v2998 = vperm.slane %v2722, %v2997
      %v2999 = vrot.slane %v2938, 7
      %v3000 = vrot.slane %v2942, 7
      %v3001 = vrot.slane %v2946, 7
      %v3002 = vrot.slane %v2950, 7
      %v3003 = vrot.slane %v2954, 7
      %v3004 = vrot.slane %v2958, 7
      %v3005 = vrot.slane %v2962, 7
      %v3006 = vrot.slane %v2966, 7
      %v3007 = vrot.slane %v2970, 7
      %v3008 = vrot.slane %v2974, 7
      %v3009 = vrot.slane %v2978, 7
      %v3010 = vrot.slane %v2982, 7
      %v3011 = vrot.slane %v2986, 7
      %v3012 = vrot.slane %v2990, 7
      %v3013 = vrot.slane %v2994, 7
      %v3014 = vrot.slane %v2998, 7
      %v3015 = vsel %vm2787, %v2919, %v2999
      %v3016 = vsel %vm2788, %v2858, %v2938
      %v3017 = vsel %vm2789, %v2920, %v3000
      %v3018 = vsel %vm2790, %v2862, %v2942
      %v3019 = vsel %vm2791, %v2921, %v3001
      %v3020 = vsel %vm2792, %v2866, %v2946
      %v3021 = vsel %vm2793, %v2922, %v3002
      %v3022 = vsel %vm2794, %v2870, %v2950
      %v3023 = vsel %vm2795, %v2923, %v3003
      %v3024 = vsel %vm2796, %v2874, %v2954
      %v3025 = vsel %vm2797, %v2924, %v3004
      %v3026 = vsel %vm2798, %v2878, %v2958
      %v3027 = vsel %vm2799, %v2925, %v3005
      %v3028 = vsel %vm2800, %v2882, %v2962
      %v3029 = vsel %vm2801, %v2926, %v3006
      %v3030 = vsel %vm2802, %v2886, %v2966
      %v3031 = vsel %vm2803, %v2927, %v3007
      %v3032 = vsel %vm2804, %v2890, %v2970
      %v3033 = vsel %vm2805, %v2928, %v3008
      %v3034 = vsel %vm2806, %v2894, %v2974
      %v3035 = vsel %vm2807, %v2929, %v3009
      %v3036 = vsel %vm2808, %v2898, %v2978
      %v3037 = vsel %vm2809, %v2930, %v3010
      %v3038 = vsel %vm2810, %v2902, %v2982
      %v3039 = vsel %vm2811, %v2931, %v3011
      %v3040 = vsel %vm2812, %v2906, %v2986
      %v3041 = vsel %vm2813, %v2932, %v3012
      %v3042 = vsel %vm2814, %v2910, %v2990
      %v3043 = vsel %vm2815, %v2933, %v3013
      %v3044 = vsel %vm2816, %v2914, %v2994
      %v3045 = vsel %vm2817, %v2934, %v3014
      %v3046 = vsel %vm2818, %v2918, %v2998
      %v3079 = vrot.slane %v2819, 7
      %v3080 = vrot.slane %v3079, 2
      %v3081 = vrot.slane %v2820, 7
      %v3082 = vrot.slane %v3081, 2
      %v3083 = vrot.slane %v2821, 7
      %v3084 = vrot.slane %v3083, 2
      %v3085 = vrot.slane %v2822, 7
      %v3086 = vrot.slane %v3085, 2
      %v3087 = vrot.slane %v2823, 7
      %v3088 = vrot.slane %v3087, 2
      %v3089 = vrot.slane %v2824, 7
      %v3090 = vrot.slane %v3089, 2
      %v3091 = vrot.slane %v2825, 7
      %v3092 = vrot.slane %v3091, 2
      %v3093 = vrot.slane %v2826, 7
      %v3094 = vrot.slane %v3093, 2
      %v3095 = vrot.slane %v2827, 7
      %v3096 = vrot.slane %v3095, 2
      %v3097 = vrot.slane %v2828, 7
      %v3098 = vrot.slane %v3097, 2
      %v3099 = vrot.slane %v2829, 7
      %v3100 = vrot.slane %v3099, 2
      %v3101 = vrot.slane %v2830, 7
      %v3102 = vrot.slane %v3101, 2
      %v3103 = vrot.slane %v2831, 7
      %v3104 = vrot.slane %v3103, 2
      %v3105 = vrot.slane %v2832, 7
      %v3106 = vrot.slane %v3105, 2
      %v3107 = vrot.slane %v2833, 7
      %v3108 = vrot.slane %v3107, 2
      %v3109 = vrot.slane %v2834, 7
      %v3110 = vrot.slane %v3109, 2
      %v3111 = vrot.slane %v2835, 7
      %v3112 = vrot.slane %v3111, 2
      %v3113 = vrot.slane %v2836, 7
      %v3114 = vrot.slane %v3113, 2
      %v3115 = vrot.slane %v2837, 7
      %v3116 = vrot.slane %v3115, 2
      %v3117 = vrot.slane %v2838, 7
      %v3118 = vrot.slane %v3117, 2
      %v3119 = vrot.slane %v2839, 7
      %v3120 = vrot.slane %v3119, 2
      %v3121 = vrot.slane %v2840, 7
      %v3122 = vrot.slane %v3121, 2
      %v3123 = vrot.slane %v2841, 7
      %v3124 = vrot.slane %v3123, 2
      %v3125 = vrot.slane %v2842, 7
      %v3126 = vrot.slane %v3125, 2
      %v3127 = vrot.slane %v2843, 7
      %v3128 = vrot.slane %v3127, 2
      %v3129 = vrot.slane %v2844, 7
      %v3130 = vrot.slane %v3129, 2
      %v3131 = vrot.slane %v2845, 7
      %v3132 = vrot.slane %v3131, 2
      %v3133 = vrot.slane %v2846, 7
      %v3134 = vrot.slane %v3133, 2
      %v3135 = vrot.slane %v2847, 7
      %v3136 = vrot.slane %v3135, 2
      %v3137 = vrot.slane %v2848, 7
      %v3138 = vrot.slane %v3137, 2
      %v3139 = vrot.slane %v2849, 7
      %v3140 = vrot.slane %v3139, 2
      %v3141 = vrot.slane %v2850, 7
      %v3142 = vrot.slane %v3141, 2
      %vm3175 = vcmp.gt.f32.partialorder %v2581, %v3080
      %vm3176 = vcmp.gt.f32.partialorder %v2617, %v3082
      %vm3177 = vcmp.gt.f32.partialorder %v2618, %v3084
      %vm3178 = vcmp.gt.f32.partialorder %v2619, %v3086
      %vm3179 = vcmp.gt.f32.partialorder %v2582, %v3088
      %vm3180 = vcmp.gt.f32.partialorder %v2620, %v3090
      %vm3181 = vcmp.gt.f32.partialorder %v2621, %v3092
      %vm3182 = vcmp.gt.f32.partialorder %v2622, %v3094
      %vm3183 = vcmp.gt.f32.partialorder %v2585, %v3096
      %vm3184 = vcmp.gt.f32.partialorder %v2629, %v3098
      %vm3185 = vcmp.gt.f32.partialorder %v2630, %v3100
      %vm3186 = vcmp.gt.f32.partialorder %v2631, %v3102
      %vm3187 = vcmp.gt.f32.partialorder %v2586, %v3104
      %vm3188 = vcmp.gt.f32.partialorder %v2632, %v3106
      %vm3189 = vcmp.gt.f32.partialorder %v2633, %v3108
      %vm3190 = vcmp.gt.f32.partialorder %v2634, %v3110
      %vm3191 = vcmp.gt.f32.partialorder %v2589, %v3112
      %vm3192 = vcmp.gt.f32.partialorder %v2641, %v3114
      %vm3193 = vcmp.gt.f32.partialorder %v2642, %v3116
      %vm3194 = vcmp.gt.f32.partialorder %v2643, %v3118
      %vm3195 = vcmp.gt.f32.partialorder %v2590, %v3120
      %vm3196 = vcmp.gt.f32.partialorder %v2644, %v3122
      %vm3197 = vcmp.gt.f32.partialorder %v2645, %v3124
      %vm3198 = vcmp.gt.f32.partialorder %v2646, %v3126
      %vm3199 = vcmp.gt.f32.partialorder %v2593, %v3128
      %vm3200 = vcmp.gt.f32.partialorder %v2653, %v3130
      %vm3201 = vcmp.gt.f32.partialorder %v2654, %v3132
      %vm3202 = vcmp.gt.f32.partialorder %v2655, %v3134
      %vm3203 = vcmp.gt.f32.partialorder %v2594, %v3136
      %vm3204 = vcmp.gt.f32.partialorder %v2656, %v3138
      %vm3205 = vcmp.gt.f32.partialorder %v2657, %v3140
      %vm3206 = vcmp.gt.f32.partialorder %v2658, %v3142
      %v3207 = vsel %vm3175, %v2581, %v3080
      %v3208 = vsel %vm3176, %v2617, %v3082
      %v3209 = vsel %vm3177, %v2618, %v3084
      %v3210 = vsel %vm3178, %v2619, %v3086
      %v3211 = vsel %vm3179, %v2582, %v3088
      %v3212 = vsel %vm3180, %v2620, %v3090
      %v3213 = vsel %vm3181, %v2621, %v3092
      %v3214 = vsel %vm3182, %v2622, %v3094
      %v3215 = vsel %vm3183, %v2585, %v3096
      %v3216 = vsel %vm3184, %v2629, %v3098
      %v3217 = vsel %vm3185, %v2630, %v3100
      %v3218 = vsel %vm3186, %v2631, %v3102
      %v3219 = vsel %vm3187, %v2586, %v3104
      %v3220 = vsel %vm3188, %v2632, %v3106
      %v3221 = vsel %vm3189, %v2633, %v3108
      %v3222 = vsel %vm3190, %v2634, %v3110
      %v3223 = vsel %vm3191, %v2589, %v3112
      %v3224 = vsel %vm3192, %v2641, %v3114
      %v3225 = vsel %vm3193, %v2642, %v3116
      %v3226 = vsel %vm3194, %v2643, %v3118
      %v3227 = vsel %vm3195, %v2590, %v3120
      %v3228 = vsel %vm3196, %v2644, %v3122
      %v3229 = vsel %vm3197, %v2645, %v3124
      %v3230 = vsel %vm3198, %v2646, %v3126
      %v3231 = vsel %vm3199, %v2593, %v3128
      %v3232 = vsel %vm3200, %v2653, %v3130
      %v3233 = vsel %vm3201, %v2654, %v3132
      %v3234 = vsel %vm3202, %v2655, %v3134
      %v3235 = vsel %vm3203, %v2594, %v3136
      %v3236 = vsel %vm3204, %v2656, %v3138
      %v3237 = vsel %vm3205, %v2657, %v3140
      %v3238 = vsel %vm3206, %v2658, %v3142
      %v3239 = vadd.s32 %v2719, 16
      %v3240 = vadd.s32 %v2720, 16
      %v3241 = vadd.s32 %v2721, 16
      %v3242 = vadd.s32 %v2722, 16
      %v3244 = vunpack.c.l.s4 269488144
      %v3245 = vunpack.c.0.s8 %v3244
      %v3246 = vperm.slane %v3239, %v3245
      %v3248 = vunpack.c.l.s4 842150450
      %v3249 = vunpack.c.0.s8 %v3248
      %v3250 = vperm.slane %v3239, %v3249
      %v3252 = vunpack.c.l.s4 1414812756
      %v3253 = vunpack.c.0.s8 %v3252
      %v3254 = vperm.slane %v3239, %v3253
      %v3256 = vunpack.c.l.s4 1987475062
      %v3257 = vunpack.c.0.s8 %v3256
      %v3258 = vperm.slane %v3239, %v3257
      %v3260 = vunpack.c.l.s4 269488144
      %v3261 = vunpack.c.0.s8 %v3260
      %v3262 = vperm.slane %v3240, %v3261
      %v3264 = vunpack.c.l.s4 842150450
      %v3265 = vunpack.c.0.s8 %v3264
      %v3266 = vperm.slane %v3240, %v3265
      %v3268 = vunpack.c.l.s4 1414812756
      %v3269 = vunpack.c.0.s8 %v3268
      %v3270 = vperm.slane %v3240, %v3269
      %v3272 = vunpack.c.l.s4 1987475062
      %v3273 = vunpack.c.0.s8 %v3272
      %v3274 = vperm.slane %v3240, %v3273
      %v3276 = vunpack.c.l.s4 269488144
      %v3277 = vunpack.c.0.s8 %v3276
      %v3278 = vperm.slane %v3241, %v3277
      %v3280 = vunpack.c.l.s4 842150450
      %v3281 = vunpack.c.0.s8 %v3280
      %v3282 = vperm.slane %v3241, %v3281
      %v3284 = vunpack.c.l.s4 1414812756
      %v3285 = vunpack.c.0.s8 %v3284
      %v3286 = vperm.slane %v3241, %v3285
      %v3288 = vunpack.c.l.s4 1987475062
      %v3289 = vunpack.c.0.s8 %v3288
      %v3290 = vperm.slane %v3241, %v3289
      %v3292 = vunpack.c.l.s4 269488144
      %v3293 = vunpack.c.0.s8 %v3292
      %v3294 = vperm.slane %v3242, %v3293
      %v3296 = vunpack.c.l.s4 842150450
      %v3297 = vunpack.c.0.s8 %v3296
      %v3298 = vperm.slane %v3242, %v3297
      %v3300 = vunpack.c.l.s4 1414812756
      %v3301 = vunpack.c.0.s8 %v3300
      %v3302 = vperm.slane %v3242, %v3301
      %v3304 = vunpack.c.l.s4 1987475062
      %v3305 = vunpack.c.0.s8 %v3304
      %v3306 = vperm.slane %v3242, %v3305
      %v3307 = vrot.slane %v3246, 1
      %v3308 = vrot.slane %v3250, 1
      %v3309 = vrot.slane %v3254, 1
      %v3310 = vrot.slane %v3258, 1
      %v3311 = vrot.slane %v3262, 1
      %v3312 = vrot.slane %v3266, 1
      %v3313 = vrot.slane %v3270, 1
      %v3314 = vrot.slane %v3274, 1
      %v3315 = vrot.slane %v3278, 1
      %v3316 = vrot.slane %v3282, 1
      %v3317 = vrot.slane %v3286, 1
      %v3318 = vrot.slane %v3290, 1
      %v3319 = vrot.slane %v3294, 1
      %v3320 = vrot.slane %v3298, 1
      %v3321 = vrot.slane %v3302, 1
      %v3322 = vrot.slane %v3306, 1
      %v3323 = vrot.slane %v3015, 7
      %v3324 = vrot.slane %v3323, 2
      %v3325 = vrot.slane %v3016, 7
      %v3326 = vrot.slane %v3325, 2
      %v3327 = vrot.slane %v3017, 7
      %v3328 = vrot.slane %v3327, 2
      %v3329 = vrot.slane %v3018, 7
      %v3330 = vrot.slane %v3329, 2
      %v3331 = vrot.slane %v3019, 7
      %v3332 = vrot.slane %v3331, 2
      %v3333 = vrot.slane %v3020, 7
      %v3334 = vrot.slane %v3333, 2
      %v3335 = vrot.slane %v3021, 7
      %v3336 = vrot.slane %v3335, 2
      %v3337 = vrot.slane %v3022, 7
      %v3338 = vrot.slane %v3337, 2
      %v3339 = vrot.slane %v3023, 7
      %v3340 = vrot.slane %v3339, 2
      %v3341 = vrot.slane %v3024, 7
      %v3342 = vrot.slane %v3341, 2
      %v3343 = vrot.slane %v3025, 7
      %v3344 = vrot.slane %v3343, 2
      %v3345 = vrot.slane %v3026, 7
      %v3346 = vrot.slane %v3345, 2
      %v3347 = vrot.slane %v3027, 7
      %v3348 = vrot.slane %v3347, 2
      %v3349 = vrot.slane %v3028, 7
      %v3350 = vrot.slane %v3349, 2
      %v3351 = vrot.slane %v3029, 7
      %v3352 = vrot.slane %v3351, 2
      %v3353 = vrot.slane %v3030, 7
      %v3354 = vrot.slane %v3353, 2
      %v3355 = vrot.slane %v3031, 7
      %v3356 = vrot.slane %v3355, 2
      %v3357 = vrot.slane %v3032, 7
      %v3358 = vrot.slane %v3357, 2
      %v3359 = vrot.slane %v3033, 7
      %v3360 = vrot.slane %v3359, 2
      %v3361 = vrot.slane %v3034, 7
      %v3362 = vrot.slane %v3361, 2
      %v3363 = vrot.slane %v3035, 7
      %v3364 = vrot.slane %v3363, 2
      %v3365 = vrot.slane %v3036, 7
      %v3366 = vrot.slane %v3365, 2
      %v3367 = vrot.slane %v3037, 7
      %v3368 = vrot.slane %v3367, 2
      %v3369 = vrot.slane %v3038, 7
      %v3370 = vrot.slane %v3369, 2
      %v3371 = vrot.slane %v3039, 7
      %v3372 = vrot.slane %v3371, 2
      %v3373 = vrot.slane %v3040, 7
      %v3374 = vrot.slane %v3373, 2
      %v3375 = vrot.slane %v3041, 7
      %v3376 = vrot.slane %v3375, 2
      %v3377 = vrot.slane %v3042, 7
      %v3378 = vrot.slane %v3377, 2
      %v3379 = vrot.slane %v3043, 7
      %v3380 = vrot.slane %v3379, 2
      %v3381 = vrot.slane %v3044, 7
      %v3382 = vrot.slane %v3381, 2
      %v3383 = vrot.slane %v3045, 7
      %v3384 = vrot.slane %v3383, 2
      %v3385 = vrot.slane %v3046, 7
      %v3386 = vrot.slane %v3385, 2
      %v3387 = vsel %vm3175, %v3246, %v3324
      %v3388 = vsel %vm3176, %v3307, %v3326
      %v3389 = vsel %vm3177, %v3250, %v3328
      %v3390 = vsel %vm3178, %v3308, %v3330
      %v3391 = vsel %vm3179, %v3254, %v3332
      %v3392 = vsel %vm3180, %v3309, %v3334
      %v3393 = vsel %vm3181, %v3258, %v3336
      %v3394 = vsel %vm3182, %v3310, %v3338
      %v3395 = vsel %vm3183, %v3262, %v3340
      %v3396 = vsel %vm3184, %v3311, %v3342
      %v3397 = vsel %vm3185, %v3266, %v3344
      %v3398 = vsel %vm3186, %v3312, %v3346
      %v3399 = vsel %vm3187, %v3270, %v3348
      %v3400 = vsel %vm3188, %v3313, %v3350
      %v3401 = vsel %vm3189, %v3274, %v3352
      %v3402 = vsel %vm3190, %v3314, %v3354
      %v3403 = vsel %vm3191, %v3278, %v3356
      %v3404 = vsel %vm3192, %v3315, %v3358
      %v3405 = vsel %vm3193, %v3282, %v3360
      %v3406 = vsel %vm3194, %v3316, %v3362
      %v3407 = vsel %vm3195, %v3286, %v3364
      %v3408 = vsel %vm3196, %v3317, %v3366
      %v3409 = vsel %vm3197, %v3290, %v3368
      %v3410 = vsel %vm3198, %v3318, %v3370
      %v3411 = vsel %vm3199, %v3294, %v3372
      %v3412 = vsel %vm3200, %v3319, %v3374
      %v3413 = vsel %vm3201, %v3298, %v3376
      %v3414 = vsel %vm3202, %v3320, %v3378
      %v3415 = vsel %vm3203, %v3302, %v3380
      %v3416 = vsel %vm3204, %v3321, %v3382
      %v3417 = vsel %vm3205, %v3306, %v3384
      %v3418 = vsel %vm3206, %v3322, %v3386
      %v3451 = vrot.slane %v3207, 7
      %v3452 = vrot.slane %v3208, 7
      %v3453 = vrot.slane %v3209, 7
      %v3454 = vrot.slane %v3210, 7
      %v3455 = vrot.slane %v3211, 7
      %v3456 = vrot.slane %v3212, 7
      %v3457 = vrot.slane %v3213, 7
      %v3458 = vrot.slane %v3214, 7
      %v3459 = vrot.slane %v3215, 7
      %v3460 = vrot.slane %v3216, 7
      %v3461 = vrot.slane %v3217, 7
      %v3462 = vrot.slane %v3218, 7
      %v3463 = vrot.slane %v3219, 7
      %v3464 = vrot.slane %v3220, 7
      %v3465 = vrot.slane %v3221, 7
      %v3466 = vrot.slane %v3222, 7
      %v3467 = vrot.slane %v3223, 7
      %v3468 = vrot.slane %v3224, 7
      %v3469 = vrot.slane %v3225, 7
      %v3470 = vrot.slane %v3226, 7
      %v3471 = vrot.slane %v3227, 7
      %v3472 = vrot.slane %v3228, 7
      %v3473 = vrot.slane %v3229, 7
      %v3474 = vrot.slane %v3230, 7
      %v3475 = vrot.slane %v3231, 7
      %v3476 = vrot.slane %v3232, 7
      %v3477 = vrot.slane %v3233, 7
      %v3478 = vrot.slane %v3234, 7
      %v3479 = vrot.slane %v3235, 7
      %v3480 = vrot.slane %v3236, 7
      %v3481 = vrot.slane %v3237, 7
      %v3482 = vrot.slane %v3238, 7
      %vm3515 = vcmp.gt.f32.partialorder %v2581, %v3451
      %vm3516 = vcmp.gt.f32.partialorder %v2617, %v3452
      %vm3517 = vcmp.gt.f32.partialorder %v2618, %v3453
      %vm3518 = vcmp.gt.f32.partialorder %v2619, %v3454
      %vm3519 = vcmp.gt.f32.partialorder %v2582, %v3455
      %vm3520 = vcmp.gt.f32.partialorder %v2620, %v3456
      %vm3521 = vcmp.gt.f32.partialorder %v2621, %v3457
      %vm3522 = vcmp.gt.f32.partialorder %v2622, %v3458
      %vm3523 = vcmp.gt.f32.partialorder %v2585, %v3459
      %vm3524 = vcmp.gt.f32.partialorder %v2629, %v3460
      %vm3525 = vcmp.gt.f32.partialorder %v2630, %v3461
      %vm3526 = vcmp.gt.f32.partialorder %v2631, %v3462
      %vm3527 = vcmp.gt.f32.partialorder %v2586, %v3463
      %vm3528 = vcmp.gt.f32.partialorder %v2632, %v3464
      %vm3529 = vcmp.gt.f32.partialorder %v2633, %v3465
      %vm3530 = vcmp.gt.f32.partialorder %v2634, %v3466
      %vm3531 = vcmp.gt.f32.partialorder %v2589, %v3467
      %vm3532 = vcmp.gt.f32.partialorder %v2641, %v3468
      %vm3533 = vcmp.gt.f32.partialorder %v2642, %v3469
      %vm3534 = vcmp.gt.f32.partialorder %v2643, %v3470
      %vm3535 = vcmp.gt.f32.partialorder %v2590, %v3471
      %vm3536 = vcmp.gt.f32.partialorder %v2644, %v3472
      %vm3537 = vcmp.gt.f32.partialorder %v2645, %v3473
      %vm3538 = vcmp.gt.f32.partialorder %v2646, %v3474
      %vm3539 = vcmp.gt.f32.partialorder %v2593, %v3475
      %vm3540 = vcmp.gt.f32.partialorder %v2653, %v3476
      %vm3541 = vcmp.gt.f32.partialorder %v2654, %v3477
      %vm3542 = vcmp.gt.f32.partialorder %v2655, %v3478
      %vm3543 = vcmp.gt.f32.partialorder %v2594, %v3479
      %vm3544 = vcmp.gt.f32.partialorder %v2656, %v3480
      %vm3545 = vcmp.gt.f32.partialorder %v2657, %v3481
      %vm3546 = vcmp.gt.f32.partialorder %v2658, %v3482
      %v3547 = vsel %vm3515, %v2581, %v3451
      %v3548 = vsel %vm3516, %v2617, %v3452
      %v3549 = vsel %vm3517, %v2618, %v3453
      %v3550 = vsel %vm3518, %v2619, %v3454
      %v3551 = vsel %vm3519, %v2582, %v3455
      %v3552 = vsel %vm3520, %v2620, %v3456
      %v3553 = vsel %vm3521, %v2621, %v3457
      %v3554 = vsel %vm3522, %v2622, %v3458
      %v3555 = vsel %vm3523, %v2585, %v3459
      %v3556 = vsel %vm3524, %v2629, %v3460
      %v3557 = vsel %vm3525, %v2630, %v3461
      %v3558 = vsel %vm3526, %v2631, %v3462
      %v3559 = vsel %vm3527, %v2586, %v3463
      %v3560 = vsel %vm3528, %v2632, %v3464
      %v3561 = vsel %vm3529, %v2633, %v3465
      %v3562 = vsel %vm3530, %v2634, %v3466
      %v3563 = vsel %vm3531, %v2589, %v3467
      %v3564 = vsel %vm3532, %v2641, %v3468
      %v3565 = vsel %vm3533, %v2642, %v3469
      %v3566 = vsel %vm3534, %v2643, %v3470
      %v3567 = vsel %vm3535, %v2590, %v3471
      %v3568 = vsel %vm3536, %v2644, %v3472
      %v3569 = vsel %vm3537, %v2645, %v3473
      %v3570 = vsel %vm3538, %v2646, %v3474
      %v3571 = vsel %vm3539, %v2593, %v3475
      %v3572 = vsel %vm3540, %v2653, %v3476
      %v3573 = vsel %vm3541, %v2654, %v3477
      %v3574 = vsel %vm3542, %v2655, %v3478
      %v3575 = vsel %vm3543, %v2594, %v3479
      %v3576 = vsel %vm3544, %v2656, %v3480
      %v3577 = vsel %vm3545, %v2657, %v3481
      %v3578 = vsel %vm3546, %v2658, %v3482
      %v3579 = vadd.s32 %v2719, 17
      %v3580 = vadd.s32 %v2720, 17
      %v3581 = vadd.s32 %v2721, 17
      %v3582 = vadd.s32 %v2722, 17
      %v3584 = vunpack.c.l.s4 269488144
      %v3585 = vunpack.c.0.s8 %v3584
      %v3586 = vperm.slane %v3579, %v3585
      %v3588 = vunpack.c.l.s4 842150450
      %v3589 = vunpack.c.0.s8 %v3588
      %v3590 = vperm.slane %v3579, %v3589
      %v3592 = vunpack.c.l.s4 1414812756
      %v3593 = vunpack.c.0.s8 %v3592
      %v3594 = vperm.slane %v3579, %v3593
      %v3596 = vunpack.c.l.s4 1987475062
      %v3597 = vunpack.c.0.s8 %v3596
      %v3598 = vperm.slane %v3579, %v3597
      %v3600 = vunpack.c.l.s4 269488144
      %v3601 = vunpack.c.0.s8 %v3600
      %v3602 = vperm.slane %v3580, %v3601
      %v3604 = vunpack.c.l.s4 842150450
      %v3605 = vunpack.c.0.s8 %v3604
      %v3606 = vperm.slane %v3580, %v3605
      %v3608 = vunpack.c.l.s4 1414812756
      %v3609 = vunpack.c.0.s8 %v3608
      %v3610 = vperm.slane %v3580, %v3609
      %v3612 = vunpack.c.l.s4 1987475062
      %v3613 = vunpack.c.0.s8 %v3612
      %v3614 = vperm.slane %v3580, %v3613
      %v3616 = vunpack.c.l.s4 269488144
      %v3617 = vunpack.c.0.s8 %v3616
      %v3618 = vperm.slane %v3581, %v3617
      %v3620 = vunpack.c.l.s4 842150450
      %v3621 = vunpack.c.0.s8 %v3620
      %v3622 = vperm.slane %v3581, %v3621
      %v3624 = vunpack.c.l.s4 1414812756
      %v3625 = vunpack.c.0.s8 %v3624
      %v3626 = vperm.slane %v3581, %v3625
      %v3628 = vunpack.c.l.s4 1987475062
      %v3629 = vunpack.c.0.s8 %v3628
      %v3630 = vperm.slane %v3581, %v3629
      %v3632 = vunpack.c.l.s4 269488144
      %v3633 = vunpack.c.0.s8 %v3632
      %v3634 = vperm.slane %v3582, %v3633
      %v3636 = vunpack.c.l.s4 842150450
      %v3637 = vunpack.c.0.s8 %v3636
      %v3638 = vperm.slane %v3582, %v3637
      %v3640 = vunpack.c.l.s4 1414812756
      %v3641 = vunpack.c.0.s8 %v3640
      %v3642 = vperm.slane %v3582, %v3641
      %v3644 = vunpack.c.l.s4 1987475062
      %v3645 = vunpack.c.0.s8 %v3644
      %v3646 = vperm.slane %v3582, %v3645
      %v3647 = vrot.slane %v3586, 7
      %v3648 = vrot.slane %v3590, 7
      %v3649 = vrot.slane %v3594, 7
      %v3650 = vrot.slane %v3598, 7
      %v3651 = vrot.slane %v3602, 7
      %v3652 = vrot.slane %v3606, 7
      %v3653 = vrot.slane %v3610, 7
      %v3654 = vrot.slane %v3614, 7
      %v3655 = vrot.slane %v3618, 7
      %v3656 = vrot.slane %v3622, 7
      %v3657 = vrot.slane %v3626, 7
      %v3658 = vrot.slane %v3630, 7
      %v3659 = vrot.slane %v3634, 7
      %v3660 = vrot.slane %v3638, 7
      %v3661 = vrot.slane %v3642, 7
      %v3662 = vrot.slane %v3646, 7
      %v3663 = vrot.slane %v3387, 7
      %v3664 = vrot.slane %v3388, 7
      %v3665 = vrot.slane %v3389, 7
      %v3666 = vrot.slane %v3390, 7
      %v3667 = vrot.slane %v3391, 7
      %v3668 = vrot.slane %v3392, 7
      %v3669 = vrot.slane %v3393, 7
      %v3670 = vrot.slane %v3394, 7
      %v3671 = vrot.slane %v3395, 7
      %v3672 = vrot.slane %v3396, 7
      %v3673 = vrot.slane %v3397, 7
      %v3674 = vrot.slane %v3398, 7
      %v3675 = vrot.slane %v3399, 7
      %v3676 = vrot.slane %v3400, 7
      %v3677 = vrot.slane %v3401, 7
      %v3678 = vrot.slane %v3402, 7
      %v3679 = vrot.slane %v3403, 7
      %v3680 = vrot.slane %v3404, 7
      %v3681 = vrot.slane %v3405, 7
      %v3682 = vrot.slane %v3406, 7
      %v3683 = vrot.slane %v3407, 7
      %v3684 = vrot.slane %v3408, 7
      %v3685 = vrot.slane %v3409, 7
      %v3686 = vrot.slane %v3410, 7
      %v3687 = vrot.slane %v3411, 7
      %v3688 = vrot.slane %v3412, 7
      %v3689 = vrot.slane %v3413, 7
      %v3690 = vrot.slane %v3414, 7
      %v3691 = vrot.slane %v3415, 7
      %v3692 = vrot.slane %v3416, 7
      %v3693 = vrot.slane %v3417, 7
      %v3694 = vrot.slane %v3418, 7
      %v3695 = vsel %vm3515, %v3647, %v3663
      %v3696 = vsel %vm3516, %v3586, %v3664
      %v3697 = vsel %vm3517, %v3648, %v3665
      %v3698 = vsel %vm3518, %v3590, %v3666
      %v3699 = vsel %vm3519, %v3649, %v3667
      %v3700 = vsel %vm3520, %v3594, %v3668
      %v3701 = vsel %vm3521, %v3650, %v3669
      %v3702 = vsel %vm3522, %v3598, %v3670
      %v3703 = vsel %vm3523, %v3651, %v3671
      %v3704 = vsel %vm3524, %v3602, %v3672
      %v3705 = vsel %vm3525, %v3652, %v3673
      %v3706 = vsel %vm3526, %v3606, %v3674
      %v3707 = vsel %vm3527, %v3653, %v3675
      %v3708 = vsel %vm3528, %v3610, %v3676
      %v3709 = vsel %vm3529, %v3654, %v3677
      %v3710 = vsel %vm3530, %v3614, %v3678
      %v3711 = vsel %vm3531, %v3655, %v3679
      %v3712 = vsel %vm3532, %v3618, %v3680
      %v3713 = vsel %vm3533, %v3656, %v3681
      %v3714 = vsel %vm3534, %v3622, %v3682
      %v3715 = vsel %vm3535, %v3657, %v3683
      %v3716 = vsel %vm3536, %v3626, %v3684
      %v3717 = vsel %vm3537, %v3658, %v3685
      %v3718 = vsel %vm3538, %v3630, %v3686
      %v3719 = vsel %vm3539, %v3659, %v3687
      %v3720 = vsel %vm3540, %v3634, %v3688
      %v3721 = vsel %vm3541, %v3660, %v3689
      %v3722 = vsel %vm3542, %v3638, %v3690
      %v3723 = vsel %vm3543, %v3661, %v3691
      %v3724 = vsel %vm3544, %v3642, %v3692
      %v3725 = vsel %vm3545, %v3662, %v3693
      %v3726 = vsel %vm3546, %v3646, %v3694
      %v3759 = vperm.slane %v3547, 1
      %v3760 = vperm.slane %v3548, 1
      %v3761 = vperm.slane %v3549, 1
      %v3762 = vperm.slane %v3550, 1
      %v3763 = vperm.slane %v3551, 1
      %v3764 = vperm.slane %v3552, 1
      %v3765 = vperm.slane %v3553, 1
      %v3766 = vperm.slane %v3554, 1
      %v3767 = vperm.slane %v3555, 1
      %v3768 = vperm.slane %v3556, 1
      %v3769 = vperm.slane %v3557, 1
      %v3770 = vperm.slane %v3558, 1
      %v3771 = vperm.slane %v3559, 1
      %v3772 = vperm.slane %v3560, 1
      %v3773 = vperm.slane %v3561, 1
      %v3774 = vperm.slane %v3562, 1
      %v3775 = vperm.slane %v3563, 1
      %v3776 = vperm.slane %v3564, 1
      %v3777 = vperm.slane %v3565, 1
      %v3778 = vperm.slane %v3566, 1
      %v3779 = vperm.slane %v3567, 1
      %v3780 = vperm.slane %v3568, 1
      %v3781 = vperm.slane %v3569, 1
      %v3782 = vperm.slane %v3570, 1
      %v3783 = vperm.slane %v3571, 1
      %v3784 = vperm.slane %v3572, 1
      %v3785 = vperm.slane %v3573, 1
      %v3786 = vperm.slane %v3574, 1
      %v3787 = vperm.slane %v3575, 1
      %v3788 = vperm.slane %v3576, 1
      %v3789 = vperm.slane %v3577, 1
      %v3790 = vperm.slane %v3578, 1
      %vm3791 = vcmask 1042434
      %v3792 = vsel %vm3791, %v3760, %v3759
      %vm3793 = vcmask 1043459
      %v3794 = vsel %vm3793, %v3761, %v3792
      %vm3795 = vcmask 1044484
      %v3796 = vsel %vm3795, %v3762, %v3794
      %vm3797 = vcmask 1045509
      %v3798 = vsel %vm3797, %v3763, %v3796
      %vm3799 = vcmask 1046534
      %v3800 = vsel %vm3799, %v3764, %v3798
      %vm3801 = vcmask 1047559
      %v3802 = vsel %vm3801, %v3765, %v3800
      %v3803 = vsel %vm3791, %v3768, %v3767
      %v3804 = vsel %vm3793, %v3769, %v3803
      %v3805 = vsel %vm3795, %v3770, %v3804
      %v3806 = vsel %vm3797, %v3771, %v3805
      %v3807 = vsel %vm3799, %v3772, %v3806
      %v3808 = vsel %vm3801, %v3773, %v3807
      %v3809 = vsel %vm3791, %v3776, %v3775
      %v3810 = vsel %vm3793, %v3777, %v3809
      %v3811 = vsel %vm3795, %v3778, %v3810
      %v3812 = vsel %vm3797, %v3779, %v3811
      %v3813 = vsel %vm3799, %v3780, %v3812
      %v3814 = vsel %vm3801, %v3781, %v3813
      %v3815 = vsel %vm3791, %v3784, %v3783
      %v3816 = vsel %vm3793, %v3785, %v3815
      %v3817 = vsel %vm3795, %v3786, %v3816
      %v3818 = vsel %vm3797, %v3787, %v3817
      %v3819 = vsel %vm3799, %v3788, %v3818
      %v3820 = vsel %vm3801, %v3789, %v3819
      %vm3829 = vcmask 64513
      %3830 = vst.msk [vmem:[%s355 - $0x1] sm:$0xfe] %vm3829, %v3802
      %vm3831 = vcmask 57344
      %3832 = vst.msk [vmem:[%s355 + $0x7] sm:$0x1] %vm3831, %v3766
      %3833 = vst.msk [vmem:[%s355 + $0x7] sm:$0xfe] %vm3829, %v3808
      %3834 = vst.msk [vmem:[%s355 + $0xf] sm:$0x1] %vm3831, %v3774
      %3835 = vst.msk [vmem:[%s355 + $0xf] sm:$0xfe] %vm3829, %v3814
      %3836 = vst.msk [vmem:[%s355 + $0x17] sm:$0x1] %vm3831, %v3782
      %3837 = vst.msk [vmem:[%s355 + $0x17] sm:$0xfe] %vm3829, %v3820
      %3838 = vst.msk [vmem:[%s355 + $0x1f] sm:$0x1] %vm3831, %v3790
      %v3839 = vperm.slane %v3695, 1
      %v3840 = vperm.slane %v3696, 1
      %v3841 = vperm.slane %v3697, 1
      %v3842 = vperm.slane %v3698, 1
      %v3843 = vperm.slane %v3699, 1
      %v3844 = vperm.slane %v3700, 1
      %v3845 = vperm.slane %v3701, 1
      %v3846 = vperm.slane %v3702, 1
      %v3847 = vperm.slane %v3703, 1
      %v3848 = vperm.slane %v3704, 1
      %v3849 = vperm.slane %v3705, 1
      %v3850 = vperm.slane %v3706, 1
      %v3851 = vperm.slane %v3707, 1
      %v3852 = vperm.slane %v3708, 1
      %v3853 = vperm.slane %v3709, 1
      %v3854 = vperm.slane %v3710, 1
      %v3855 = vperm.slane %v3711, 1
      %v3856 = vperm.slane %v3712, 1
      %v3857 = vperm.slane %v3713, 1
      %v3858 = vperm.slane %v3714, 1
      %v3859 = vperm.slane %v3715, 1
      %v3860 = vperm.slane %v3716, 1
      %v3861 = vperm.slane %v3717, 1
      %v3862 = vperm.slane %v3718, 1
      %v3863 = vperm.slane %v3719, 1
      %v3864 = vperm.slane %v3720, 1
      %v3865 = vperm.slane %v3721, 1
      %v3866 = vperm.slane %v3722, 1
      %v3867 = vperm.slane %v3723, 1
      %v3868 = vperm.slane %v3724, 1
      %v3869 = vperm.slane %v3725, 1
      %v3870 = vperm.slane %v3726, 1
      %v3871 = vsel %vm3791, %v3840, %v3839
      %v3872 = vsel %vm3793, %v3841, %v3871
      %v3873 = vsel %vm3795, %v3842, %v3872
      %v3874 = vsel %vm3797, %v3843, %v3873
      %v3875 = vsel %vm3799, %v3844, %v3874
      %v3876 = vsel %vm3801, %v3845, %v3875
      %v3877 = vsel %vm3791, %v3848, %v3847
      %v3878 = vsel %vm3793, %v3849, %v3877
      %v3879 = vsel %vm3795, %v3850, %v3878
      %v3880 = vsel %vm3797, %v3851, %v3879
      %v3881 = vsel %vm3799, %v3852, %v3880
      %v3882 = vsel %vm3801, %v3853, %v3881
      %v3883 = vsel %vm3791, %v3856, %v3855
      %v3884 = vsel %vm3793, %v3857, %v3883
      %v3885 = vsel %vm3795, %v3858, %v3884
      %v3886 = vsel %vm3797, %v3859, %v3885
      %v3887 = vsel %vm3799, %v3860, %v3886
      %v3888 = vsel %vm3801, %v3861, %v3887
      %v3889 = vsel %vm3791, %v3864, %v3863
      %v3890 = vsel %vm3793, %v3865, %v3889
      %v3891 = vsel %vm3795, %v3866, %v3890
      %v3892 = vsel %vm3797, %v3867, %v3891
      %v3893 = vsel %vm3799, %v3868, %v3892
      %v3894 = vsel %vm3801, %v3869, %v3893
      %3895 = vst.msk [vmem:[%s365 - $0x1] sm:$0xfe] %vm3829, %v3876
      %3896 = vst.msk [vmem:[%s365 + $0x7] sm:$0x1] %vm3831, %v3846
      %3897 = vst.msk [vmem:[%s365 + $0x7] sm:$0xfe] %vm3829, %v3882
      %3898 = vst.msk [vmem:[%s365 + $0xf] sm:$0x1] %vm3831, %v3854
      %3899 = vst.msk [vmem:[%s365 + $0xf] sm:$0xfe] %vm3829, %v3888
      %3900 = vst.msk [vmem:[%s365 + $0x17] sm:$0x1] %vm3831, %v3862
      %3901 = vst.msk [vmem:[%s365 + $0x17] sm:$0xfe] %vm3829, %v3894
      %3902 = vst.msk [vmem:[%s365 + $0x1f] sm:$0x1] %vm3831, %v3870
      %s3903 = smul.u32 4, %s25
      %p3904 = scmp.lt.s32.totalorder %s24, 1
      %s3905 = scalar_select %p3904, %s24, 1
      %p3906 = scmp.lt.s32.totalorder %s3903, 7
      %s3907 = scalar_select %p3906, %s3903, 7
      %s3908 = smul.addr %s3905, 8
      %s3909 = sadd.s32 %s3907, %s3908
      %s3910 = smul.addr %s3909, 8
      %s3911 = scalar_lea.vmem %s7, %s3910
      %s3912 = smul.u32 4, %s25
      %p3913 = scmp.lt.s32.totalorder %s24, 1
      %s3914 = scalar_select %p3913, %s24, 1
      %p3915 = scmp.lt.s32.totalorder %s3912, 7
      %s3916 = scalar_select %p3915, %s3912, 7
      %s3917 = smul.addr %s3914, 8
      %s3918 = sadd.s32 %s3916, %s3917
      %s3919 = smul.addr %s3918, 8
      %s3920 = scalar_lea.vmem %s8, %s3919
      // Predicated region
      $region49: #{segnet_down2.1} parent=47 // pred_check
        %p3921 = pneg %p206
      $region50: #{segnet_down2.1} parent=47 // pred_check_branch
        %3923 = sbr.rel (%p3921) target = $region52
      $region51: #{segnet_down2.1} parent=47 // pred_region
        %s3924 = smul.u32 4, %s25
      $region52: #{segnet_down2.1} parent=47 // pred_fallthru
        _
      // Predicated region
      $region53: #{segnet_down2.1} parent=47 // pred_check
        %p3925 = pneg %p234
      $region54: #{segnet_down2.1} parent=47 // pred_check_branch
        %3927 = sbr.rel (%p3925) target = $region56
      $region55: #{segnet_down2.1} parent=47 // pred_region
        %s3928 = smul.u32 4, %s25
      $region56: #{segnet_down2.1} parent=47 // pred_fallthru
        _
    $region48: #{segnet_down2.1} parent=5 // pred_fallthru
      _
    %p3929 = scmp.le.s32.totalorder 2, %s15
    // Predicated region
    $region57: #{segnet_down2.1} parent=5 // pred_check
      %p3930 = pneg %p3929
    $region58: #{segnet_down2.1} parent=5 // pred_check_branch
      %3932 = sbr.rel (%p3930) target = $region60
    $region59: #{segnet_down2.1} parent=5 // pred_region
      %s3933 = ssub.s32 %s15, 2
      // Predicated region
      $region61: #{segnet_down2.1} parent=59 // pred_check
        %p3934 = pneg %p212
      $region62: #{segnet_down2.1} parent=59 // pred_check_branch
        %3936 = sbr.rel (%p3934) target = $region64
      $region63: #{segnet_down2.1} parent=59 // pred_region
        %s3937 = smul.u32 4, %s27
        %p3938 = scmp.lt.s32.totalorder %s26, 1
        %s3939 = scalar_select %p3938, %s26, 1
        %p3940 = scmp.lt.s32.totalorder %s3937, 7
        %s3941 = scalar_select %p3940, %s3937, 7
        %s3942 = smul.addr %s3939, 8
        %s3943 = sadd.s32 %s3941, %s3942
        %s3944 = smul.addr %s3943, 8
        %s3945 = scalar_lea.vmem %s7, %s3944
      $region64: #{segnet_down2.1} parent=59 // pred_fallthru
        _
      // Predicated region
      $region65: #{segnet_down2.1} parent=59 // pred_check
        %p3946 = pneg %p240
      $region66: #{segnet_down2.1} parent=59 // pred_check_branch
        %3948 = sbr.rel (%p3946) target = $region68
      $region67: #{segnet_down2.1} parent=59 // pred_region
        %s3949 = smul.u32 4, %s27
        %p3950 = scmp.lt.s32.totalorder %s26, 1
        %s3951 = scalar_select %p3950, %s26, 1
        %p3952 = scmp.lt.s32.totalorder %s3949, 7
        %s3953 = scalar_select %p3952, %s3949, 7
        %s3954 = smul.addr %s3951, 8
        %s3955 = sadd.s32 %s3953, %s3954
        %s3956 = smul.addr %s3955, 8
        %s3957 = scalar_lea.vmem %s8, %s3956
      $region68: #{segnet_down2.1} parent=59 // pred_fallthru
        _
    $region60: #{segnet_down2.1} parent=5 // pred_fallthru
      _
  $region6: #{segnet_down2.1} parent=0 // loop_footer
    %s19 = sadd.s32 1, %s15
  $region7: #{segnet_down2.1} parent=0 // loop_footer_branch
    %14 = sbr.rel target = $region3
  $region8: #{segnet_down2.1} parent=0 // loop_exit
    _

</llo_original>
